<compile_context>
chip_gen: v6e
topology: v6e:2x2x1
jax: 0.10.0
libtpu: 0.0.40
codegen_flags: <defaults>
</compile_context>

<pallas_src>
import functools

import jax
import jax.numpy as jnp
from jax import lax
from jax.experimental import pallas as pl
from jax.experimental.pallas import tpu as pltpu


# Small synthetic ViT-backbone config (lane-dense dims, multiples of 128).
CFG = dict(
    B=2, C=4, H=16, W=16, patch=8,      # -> 2x2 = 4 patches, 5 real tokens
    D=256, depth=2, heads=2, mlp=512,   # head_dim = 128
)
CPAD = 128   # padded lane width for class-logit outputs


def _round_up(x, m):
    return ((x + m - 1) // m) * m


def _layernorm(x, g, b, eps=1e-6):
    mean = jnp.mean(x, axis=-1, keepdims=True)
    var = jnp.mean(jnp.square(x - mean), axis=-1, keepdims=True)
    return (x - mean) * lax.rsqrt(var + eps) * g + b


# ----------------------------------------------------------------------------
# The fused DERNet forward kernel.
#   grid = (num_backbones NB, depth)  -- both axes sequential ("arbitrary")
#   scratch: tok_sc [B*Npad, D] f32   token activations, carried across layers
# ----------------------------------------------------------------------------
def _dernet_kernel(
        patches_ref, patch_w_ref, base_ref,
        ln1_g_ref, ln1_b_ref, qkv_w_ref, qkv_b_ref, proj_w_ref, proj_b_ref,
        ln2_g_ref, ln2_b_ref, fc1_w_ref, fc1_b_ref, fc2_w_ref, fc2_b_ref,
        norm_g_ref, norm_b_ref, fc_w_ref, fc_b_ref, aux_w_ref, aux_b_ref,
        feat_ref, logits_ref, aux_ref,
        tok_sc,
        *, B, Npad, N_real, D, heads, depth, NB):
    nb = pl.program_id(0)
    layer = pl.program_id(1)
    hd = D // heads
    M = B * Npad
    f32, bf16 = jnp.float32, jnp.bfloat16

    # ---- layer 0: patch-embed + cls + pos (one matmul, one full-tile store) -
    @pl.when(layer == 0)
    def _():
        emb = jnp.dot(patches_ref[...].astype(bf16), patch_w_ref[...],
                      preferred_element_type=f32)                   # [M, D]
        # base rows (precomputed): [cls+pos0 ; pos1..NP + patch_b ; 0-pad]
        tok = emb.reshape(B, Npad, D) + base_ref[...][None, :, :]
        tok_sc[...] = tok.reshape(M, D)

    # ---- one pre-norm transformer block (runs at every grid step) ----------
    x = tok_sc[...]                                                  # [M, D]

    # attention branch (LN fused; QKV bf16 in registers; batched over B)
    xn = _layernorm(x, ln1_g_ref[...], ln1_b_ref[...])
    qkv = (jnp.dot(xn.astype(bf16), qkv_w_ref[...],
                   preferred_element_type=f32) + qkv_b_ref[...]).astype(bf16)

    # additive key mask for the padded token rows (pad keys never attended to)
    kmask = lax.broadcasted_iota(jnp.int32, (1, 1, Npad), 2) >= N_real
    neg = jnp.where(kmask, jnp.float32(-1e9), jnp.float32(0.0))     # [1,1,Npad]

    attn_heads = []
    for h in range(heads):     # static, tiny; each iteration is batched over B
        qh = qkv[:, h * hd:(h + 1) * hd].reshape(B, Npad, hd)
        kh = qkv[:, D + h * hd:D + (h + 1) * hd].reshape(B, Npad, hd)
        vh = qkv[:, 2 * D + h * hd:2 * D + (h + 1) * hd].reshape(B, Npad, hd)
        # 1/sqrt(hd) already folded into the Q weights/bias at stacking time.
        s = jnp.einsum('bqd,bkd->bqk', qh, kh,
                       preferred_element_type=f32) + neg            # [B,Np,Np]
        s = s - jnp.max(s, axis=-1, keepdims=True)
        p = jnp.exp(s)
        p = p * pl.reciprocal(jnp.sum(p, axis=-1, keepdims=True), approx=True)
        oh = jnp.einsum('bqk,bkd->bqd', p.astype(bf16), vh,
                        preferred_element_type=f32)                 # [B,Np,hd]
        attn_heads.append(oh.astype(bf16).reshape(M, hd))
    attn = jnp.concatenate(attn_heads, axis=-1)                     # [M, D] bf16

    attn = jnp.dot(attn, proj_w_ref[...],
                   preferred_element_type=f32) + proj_b_ref[...]
    x = x + attn

    # MLP branch (LN fused, GELU epilogue fused)
    xn = _layernorm(x, ln2_g_ref[...], ln2_b_ref[...])
    h1 = jnp.dot(xn.astype(bf16), fc1_w_ref[...],
                 preferred_element_type=f32) + fc1_b_ref[...]
    # TODO(synk): timm ViT uses exact erf-GELU; tanh approximation kept for
    # robust Mosaic lowering (EUP path, f32 elementwise).
    h1 = jax.nn.gelu(h1, approximate=True)
    h2 = jnp.dot(h1.astype(bf16), fc2_w_ref[...],
                 preferred_element_type=f32) + fc2_b_ref[...]
    x = x + h2
    tok_sc[...] = x

    # ---- per-backbone feature: final norm of the cls token -----------------
    @pl.when(layer == depth - 1)
    def _():
        cls_tok = tok_sc[...].reshape(B, Npad, D)[:, 0, :]          # [B, D]
        f_nb = _layernorm(cls_tok, norm_g_ref[...], norm_b_ref[...])
        # features output block is VMEM-resident across the whole grid
        # (constant index_map); write this backbone's lane slice (static).
        for i in range(NB):
            @pl.when(nb == i)
            def _write(i=i):
                feat_ref[:, i * D:(i + 1) * D] = f_nb

    # ---- DERNet heads on the concatenated features (very last grid step) ---
    @pl.when((nb == NB - 1) & (layer == depth - 1))
    def _():
        f = feat_ref[...]                                           # [B, NB*D]
        logits_ref[...] = (jnp.dot(f.astype(bf16), fc_w_ref[...],
                                   preferred_element_type=f32)
                           + fc_b_ref[...])
        f_last = f[:, (NB - 1) * D:]                                # [B, D]
        aux_ref[...] = (jnp.dot(f_last.astype(bf16), aux_w_ref[...],
                                preferred_element_type=f32)
                        + aux_b_ref[...])


def _fused_forward(patches_pad, sp, fc_w_p, fc_b_p, aux_w_p, aux_b_p,
                   cfg, Npad, N_real, NB):
    """patches_pad: [B*Npad, P2C_PAD]; sp: stacked backbone params."""
    D, depth, heads, mlp = cfg["D"], cfg["depth"], cfg["heads"], cfg["mlp"]
    B = cfg["B"]
    P2C_PAD = patches_pad.shape[-1]
    CP = fc_w_p.shape[-1]

    kernel = functools.partial(_dernet_kernel, B=B, Npad=Npad, N_real=N_real,
                               D=D, heads=heads, depth=depth, NB=NB)

    def per_bb(shape):        # per-backbone, layer-constant weights
        return pl.BlockSpec((None,) + shape,
                            lambda nb, l, _s=shape: (nb,) + (0,) * len(_s))

    def per_layer(shape):     # per-backbone, per-layer weights (streamed)
        return pl.BlockSpec((None, None) + shape,
                            lambda nb, l, _s=shape: (nb, l) + (0,) * len(_s))

    def const(shape):         # grid-invariant arrays (fetched once)
        return pl.BlockSpec(shape, lambda nb, l, _s=shape: (0,) * len(_s))

    in_specs = [
        const((B * Npad, P2C_PAD)),             # patches (row/lane padded)
        per_bb((P2C_PAD, D)),                   # patch_w (lane padded, bf16)
        per_bb((Npad, D)),                      # base (cls+pos+bias slab)
        per_layer((1, D)), per_layer((1, D)),   # ln1_g, ln1_b
        per_layer((D, 3 * D)),                  # qkv_w (Q pre-scaled, bf16)
        per_layer((1, 3 * D)),                  # qkv_b (Q pre-scaled)
        per_layer((D, D)),                      # proj_w
        per_layer((1, D)),                      # proj_b
        per_layer((1, D)), per_layer((1, D)),   # ln2_g, ln2_b
        per_layer((D, mlp)),                    # fc1_w
        per_layer((1, mlp)),                    # fc1_b
        per_layer((mlp, D)),                    # fc2_w
        per_layer((1, D)),                      # fc2_b
        per_bb((1, D)), per_bb((1, D)),         # norm_g, norm_b
        const((NB * D, CP)),                    # fc_w   (flat, padded lanes)
        const((1, CP)),                         # fc_b
        const((D, CP)),                         # aux_w  (padded lanes)
        const((1, CP)),                         # aux_b
    ]
    out_specs = [
        pl.BlockSpec((B, NB * D), lambda nb, l: (0, 0)),    # features
        pl.BlockSpec((B, CP), lambda nb, l: (0, 0)),        # logits (padded)
        pl.BlockSpec((B, CP), lambda nb, l: (0, 0)),        # aux logits (padded)
    ]
    out_shape = (
        jax.ShapeDtypeStruct((B, NB * D), jnp.float32),
        jax.ShapeDtypeStruct((B, CP), jnp.float32),
        jax.ShapeDtypeStruct((B, CP), jnp.float32),
    )
    return pl.pallas_call(
        kernel,
        out_shape=out_shape,
        grid=(NB, depth),
        in_specs=in_specs,
        out_specs=out_specs,
        scratch_shapes=[
            pltpu.VMEM((B * Npad, D), jnp.float32),   # resident token slab
        ],
        compiler_params=pltpu.CompilerParams(
            dimension_semantics=("arbitrary", "arbitrary")),
    )(
        patches_pad,
        sp["patch_w"], sp["base"],
        sp["ln1_g"], sp["ln1_b"], sp["qkv_w"], sp["qkv_b"],
        sp["proj_w"], sp["proj_b"], sp["ln2_g"], sp["ln2_b"],
        sp["fc1_w"], sp["fc1_b"], sp["fc2_w"], sp["fc2_b"],
        sp["norm_g"], sp["norm_b"],
        fc_w_p, fc_b_p, aux_w_p, aux_b_p,
    )


# ----------------------------------------------------------------------------
# Synthetic ViT backbone parameters (stand-in for timm pretrained ViT-B/16).
# ----------------------------------------------------------------------------
def init_vit_backbone(key, cfg):
    C, p, D = cfg["C"], cfg["patch"], cfg["D"]
    depth, mlp = cfg["depth"], cfg["mlp"]
    NP = (cfg["H"] // p) * (cfg["W"] // p)
    N = NP + 1
    P2C = C * p * p
    ks = jax.random.split(key, 8)

    def nrm(k, shape):
        return 0.02 * jax.random.normal(k, shape, jnp.float32)

    return dict(
        patch_w=nrm(ks[0], (P2C, D)),
        patch_b=jnp.zeros((1, D), jnp.float32),
        cls_token=nrm(ks[1], (1, D)),
        pos_embed=nrm(ks[2], (N, D)),
        ln1_g=jnp.ones((depth, 1, D), jnp.float32),
        ln1_b=jnp.zeros((depth, 1, D), jnp.float32),
        qkv_w=nrm(ks[3], (depth, D, 3 * D)),
        qkv_b=jnp.zeros((depth, 1, 3 * D), jnp.float32),
        proj_w=nrm(ks[4], (depth, D, D)),
        proj_b=jnp.zeros((depth, 1, D), jnp.float32),
        ln2_g=jnp.ones((depth, 1, D), jnp.float32),
        ln2_b=jnp.zeros((depth, 1, D), jnp.float32),
        fc1_w=nrm(ks[5], (depth, D, mlp)),
        fc1_b=jnp.zeros((depth, 1, mlp), jnp.float32),
        fc2_w=nrm(ks[6], (depth, mlp, D)),
        fc2_b=jnp.zeros((depth, 1, D), jnp.float32),
        norm_g=jnp.ones((1, D), jnp.float32),
        norm_b=jnp.zeros((1, D), jnp.float32),
    )


# ----------------------------------------------------------------------------
# DERNet (JAX/Pallas re-implementation of utils.inc_net.DERNet forward).
# ----------------------------------------------------------------------------
class DERNet:
    def __init__(self, args, pretrained=False, key=None, cfg=None):
        self.args = args
        self.backbone_type = args["backbone_type"]
        self.pretrained = pretrained
        self.model_type = "cnn" if "resnet" in args["backbone_type"] else "vit"
        assert self.model_type == "vit", "only ViT backbones implemented"
        self.cfg = cfg or CFG
        p = self.cfg["patch"]
        self.n_patches = (self.cfg["H"] // p) * (self.cfg["W"] // p)
        self.n_real = self.n_patches + 1
        self.n_pad = _round_up(self.n_real, 8)     # sublane-aligned token count
        self.backbones = []
        self.out_dim = None
        self.fc = None
        self.aux_fc = None
        self.task_sizes = []
        self._key = key if key is not None else jax.random.PRNGKey(0)
        self._stacked = None

    @property
    def feature_dim(self):
        if self.out_dim is None:
            return 0
        return self.out_dim * len(self.backbones)

    # --- backbone / head management (mirrors update_fc / generate_fc) -------
    def _get_backbone(self):
        # TODO(synk): timm pretrained ViT-B/16 weights are unavailable
        # in-script; a small randomly-initialised ViT of the same structure
        # stands in for it.
        self._key, k = jax.random.split(self._key)
        return init_vit_backbone(k, self.cfg)

    def _generate_fc(self, in_dim, out_dim):
        self._key, k = jax.random.split(self._key)
        return dict(
            w=0.02 * jax.random.normal(k, (in_dim, out_dim), jnp.float32),
            b=jnp.zeros((out_dim,), jnp.float32))

    def update_fc(self, nb_classes):
        if len(self.backbones) == 0:
            self.backbones.append(self._get_backbone())
        else:
            # new backbone starts from the previous one (load_state_dict)
            self.backbones.append(dict(self.backbones[-1]))
        if self.out_dim is None:
            self.out_dim = self.cfg["D"]
        fc = self._generate_fc(self.feature_dim, nb_classes)
        if self.fc is not None:
            old_in, old_out = self.fc["w"].shape
            fc["w"] = fc["w"].at[:old_in, :old_out].set(self.fc["w"])
            fc["b"] = fc["b"].at[:old_out].set(self.fc["b"])
        self.fc = fc
        new_task_size = nb_classes - sum(self.task_sizes)
        self.task_sizes.append(new_task_size)
        self.aux_fc = self._generate_fc(self.out_dim, new_task_size + 1)
        self._stacked = None   # invalidate stacked-parameter cache

    def _stacked_params(self):
        if self._stacked is not None:
            return self._stacked
        cfg = self.cfg
        D, heads, p = cfg["D"], cfg["heads"], cfg["patch"]
        NP, Npad = self.n_patches, self.n_pad
        P2C = cfg["C"] * p * p
        P2C_PAD = _round_up(P2C, 128)
        hd = D // heads
        scale = 1.0 / (hd ** 0.5)
        bf16 = jnp.bfloat16

        def stack(name):
            return jnp.stack([bb[name] for bb in self.backbones], axis=0)

        # fold the 1/sqrt(head_dim) attention scale into the Q columns
        qkv_w = stack("qkv_w").at[..., :D].multiply(scale)
        qkv_b = stack("qkv_b").at[..., :D].multiply(scale)

        # lane-pad patch projection to a 128-multiple input width
        patch_w = stack("patch_w")                       # [NB, P2C, D]
        NB = patch_w.shape[0]
        patch_w_pad = jnp.zeros((NB, P2C_PAD, D), jnp.float32)
        patch_w_pad = patch_w_pad.at[:, :P2C, :].set(patch_w)

        # per-backbone "base" token slab: row0 = cls + pos0,
        # rows 1..NP = pos + patch bias, pad rows = 0
        cls_token = stack("cls_token")                   # [NB, 1, D]
        pos = stack("pos_embed")                         # [NB, N_real, D]
        patch_b = stack("patch_b")                       # [NB, 1, D]
        base = jnp.zeros((NB, Npad, D), jnp.float32)
        base = base.at[:, 0:1, :].set(cls_token + pos[:, 0:1, :])
        base = base.at[:, 1:1 + NP, :].set(pos[:, 1:1 + NP, :] + patch_b)

        self._stacked = dict(
            patch_w=patch_w_pad.astype(bf16),
            base=base,
            ln1_g=stack("ln1_g"), ln1_b=stack("ln1_b"),
            qkv_w=qkv_w.astype(bf16), qkv_b=qkv_b,
            proj_w=stack("proj_w").astype(bf16), proj_b=stack("proj_b"),
            ln2_g=stack("ln2_g"), ln2_b=stack("ln2_b"),
            fc1_w=stack("fc1_w").astype(bf16), fc1_b=stack("fc1_b"),
            fc2_w=stack("fc2_w").astype(bf16), fc2_b=stack("fc2_b"),
            norm_g=stack("norm_g"), norm_b=stack("norm_b"),
        )
        return self._stacked

    # --- forward -------------------------------------------------------------
    def extract_vector(self, x):
        return self.forward(x)["features"]

    def forward(self, x):
        assert self.fc is not None and len(self.backbones) > 0
        cfg = self.cfg
        B, C, H, W = x.shape
        p = cfg["patch"]
        nH, nW = H // p, W // p
        NP = nH * nW
        P2C = C * p * p
        P2C_PAD = _round_up(P2C, 128)
        D = self.out_dim
        NB = len(self.backbones)
        Npad, N_real = self.n_pad, self.n_real

        # im2col patch extraction + sublane/lane padding (layout plumbing in JAX)
        patches = x.reshape(B, C, nH, p, nW, p).transpose(0, 2, 4, 1, 3, 5)
        patches = patches.reshape(B, NP, P2C).astype(jnp.float32)
        patches_pad = jnp.zeros((B, Npad, P2C_PAD), jnp.float32)
        patches_pad = patches_pad.at[:, 1:1 + NP, :P2C].set(patches)
        patches_pad = patches_pad.reshape(B * Npad, P2C_PAD)

        nb_classes = self.fc["w"].shape[1]
        aux_classes = self.aux_fc["w"].shape[1]
        assert nb_classes <= CPAD and aux_classes <= CPAD

        # pad head weights to a 128-lane output width (zeros -> exact logits)
        fc_w_p = jnp.zeros((NB * D, CPAD), jnp.bfloat16)
        fc_w_p = fc_w_p.at[:, :nb_classes].set(self.fc["w"].astype(jnp.bfloat16))
        fc_b_p = jnp.zeros((1, CPAD), jnp.float32).at[0, :nb_classes].set(
            self.fc["b"])
        aux_w_p = jnp.zeros((D, CPAD), jnp.bfloat16).at[:, :aux_classes].set(
            self.aux_fc["w"].astype(jnp.bfloat16))
        aux_b_p = jnp.zeros((1, CPAD), jnp.float32).at[0, :aux_classes].set(
            self.aux_fc["b"])

        features, logits_p, aux_p = _fused_forward(
            patches_pad, self._stacked_params(), fc_w_p, fc_b_p, aux_w_p,
            aux_b_p, cfg, Npad, N_real, NB)
        return {
            "logits": logits_p[:, :nb_classes],
            "aux_logits": aux_p[:, :aux_classes],
            "features": features,
        }

    __call__ = forward


# ----------------------------------------------------------------------------
if __name__ == "__main__":
    args = {"backbone_type": "pretrained_vit_b16_224", "model_name": "der"}
    key = jax.random.PRNGKey(0)
    kx, knet = jax.random.split(key)

    net = DERNet(args, pretrained=False, key=knet, cfg=CFG)
    net.update_fc(5)    # task 0: 5 classes  -> 1 backbone
    net.update_fc(10)   # task 1: +5 classes -> 2 backbones (DER expansion)

    x = jax.random.normal(
        kx, (CFG["B"], CFG["C"], CFG["H"], CFG["W"]), jnp.float32)  # NCHW

    out = net(x)
    jax.tree_util.tree_map(lambda a: a.block_until_ready(), out)

    NB, D = len(net.backbones), CFG["D"]
    assert out["logits"].shape == (CFG["B"], 10)
    assert out["aux_logits"].shape == (CFG["B"], 6)
    assert out["features"].shape == (CFG["B"], NB * D)
    for v in out.values():
        assert bool(jnp.all(jnp.isfinite(v)))
    print("KERNEL_OK")
</pallas_src>

<mosaic_0001>
module attributes {stable_mosaic.version = 11 : i64} {
  func.func @_dernet_kernel(%arg0: i32, %arg1: i32, %arg2: memref<16x256xf32, #tpu.memory_space<vmem>>, %arg3: memref<1x256x256xbf16, #tpu.memory_space<vmem>>, %arg4: memref<1x8x256xf32, #tpu.memory_space<vmem>>, %arg5: memref<1x1x1x256xf32, #tpu.memory_space<vmem>>, %arg6: memref<1x1x1x256xf32, #tpu.memory_space<vmem>>, %arg7: memref<1x1x256x768xbf16, #tpu.memory_space<vmem>>, %arg8: memref<1x1x1x768xf32, #tpu.memory_space<vmem>>, %arg9: memref<1x1x256x256xbf16, #tpu.memory_space<vmem>>, %arg10: memref<1x1x1x256xf32, #tpu.memory_space<vmem>>, %arg11: memref<1x1x1x256xf32, #tpu.memory_space<vmem>>, %arg12: memref<1x1x1x256xf32, #tpu.memory_space<vmem>>, %arg13: memref<1x1x256x512xbf16, #tpu.memory_space<vmem>>, %arg14: memref<1x1x1x512xf32, #tpu.memory_space<vmem>>, %arg15: memref<1x1x512x256xbf16, #tpu.memory_space<vmem>>, %arg16: memref<1x1x1x256xf32, #tpu.memory_space<vmem>>, %arg17: memref<1x1x256xf32, #tpu.memory_space<vmem>>, %arg18: memref<1x1x256xf32, #tpu.memory_space<vmem>>, %arg19: memref<512x128xbf16, #tpu.memory_space<vmem>>, %arg20: memref<1x128xf32, #tpu.memory_space<vmem>>, %arg21: memref<256x128xbf16, #tpu.memory_space<vmem>>, %arg22: memref<1x128xf32, #tpu.memory_space<vmem>>, %arg23: memref<2x512xf32, #tpu.memory_space<vmem>>, %arg24: memref<2x128xf32, #tpu.memory_space<vmem>>, %arg25: memref<2x128xf32, #tpu.memory_space<vmem>>, %arg26: memref<16x256xf32, #tpu.memory_space<vmem>>) attributes {dimension_semantics = [#tpu.dimension_semantics<arbitrary>, #tpu.dimension_semantics<arbitrary>], iteration_bounds = array<i64: 2, 2>, scalar_prefetch = 0 : i64, scratch_operands = 1 : i64, tpu.core_type = #tpu.core_type<tc>, window_params = [{pipeline_mode = #tpu.pipeline_mode<synchronous>, transform_indices = @transform_0, window_bounds = array<i64: 16, 256>}, {transform_indices = @transform_1, window_bounds = array<i64: 1, 256, 256>}, {transform_indices = @transform_2, window_bounds = array<i64: 1, 8, 256>}, {transform_indices = @transform_3, window_bounds = array<i64: 1, 1, 1, 256>}, {transform_indices = @transform_4, window_bounds = array<i64: 1, 1, 1, 256>}, {transform_indices = @transform_5, window_bounds = array<i64: 1, 1, 256, 768>}, {transform_indices = @transform_6, window_bounds = array<i64: 1, 1, 1, 768>}, {transform_indices = @transform_7, window_bounds = array<i64: 1, 1, 256, 256>}, {transform_indices = @transform_8, window_bounds = array<i64: 1, 1, 1, 256>}, {transform_indices = @transform_9, window_bounds = array<i64: 1, 1, 1, 256>}, {transform_indices = @transform_10, window_bounds = array<i64: 1, 1, 1, 256>}, {transform_indices = @transform_11, window_bounds = array<i64: 1, 1, 256, 512>}, {transform_indices = @transform_12, window_bounds = array<i64: 1, 1, 1, 512>}, {transform_indices = @transform_13, window_bounds = array<i64: 1, 1, 512, 256>}, {transform_indices = @transform_14, window_bounds = array<i64: 1, 1, 1, 256>}, {transform_indices = @transform_15, window_bounds = array<i64: 1, 1, 256>}, {transform_indices = @transform_16, window_bounds = array<i64: 1, 1, 256>}, {pipeline_mode = #tpu.pipeline_mode<synchronous>, transform_indices = @transform_17, window_bounds = array<i64: 512, 128>}, {pipeline_mode = #tpu.pipeline_mode<synchronous>, transform_indices = @transform_18, window_bounds = array<i64: 1, 128>}, {pipeline_mode = #tpu.pipeline_mode<synchronous>, transform_indices = @transform_19, window_bounds = array<i64: 256, 128>}, {pipeline_mode = #tpu.pipeline_mode<synchronous>, transform_indices = @transform_20, window_bounds = array<i64: 1, 128>}, {pipeline_mode = #tpu.pipeline_mode<synchronous>, transform_indices = @transform_21, window_bounds = array<i64: 2, 512>}, {pipeline_mode = #tpu.pipeline_mode<synchronous>, transform_indices = @transform_22, window_bounds = array<i64: 2, 128>}, {pipeline_mode = #tpu.pipeline_mode<synchronous>, transform_indices = @transform_23, window_bounds = array<i64: 2, 128>}]} {
    %c0_i32 = arith.constant 0 : i32
    %0 = arith.cmpi eq, %arg1, %c0_i32 : i32
    %1 = arith.extui %0 : i1 to i32
    %c0_i32_0 = arith.constant 0 : i32
    %2 = arith.cmpi ne, %1, %c0_i32_0 : i32
    scf.if %2 {
      %c0_83 = arith.constant 0 : index
      %c0_84 = arith.constant 0 : index
      %165 = vector.load %arg2[%c0_83, %c0_84] : memref<16x256xf32, #tpu.memory_space<vmem>>, vector<16x256xf32>
      %166 = arith.truncf %165 : vector<16x256xf32> to vector<16x256xbf16>
      %c0_85 = arith.constant 0 : index
      %c0_86 = arith.constant 0 : index
      %c0_87 = arith.constant 0 : index
      %167 = vector.load %arg3[%c0_85, %c0_86, %c0_87] : memref<1x256x256xbf16, #tpu.memory_space<vmem>>, vector<1x256x256xbf16>
      %168 = vector.shape_cast %167 : vector<1x256x256xbf16> to vector<256x256xbf16>
      %cst_88 = arith.constant dense<0.000000e+00> : vector<16x256xf32>
      %169 = tpu.matmul %166, %168, %cst_88 {dimension_numbers = #tpu.dot_dimension_numbers<[1], [0], [0], [1], [0, 0, 1, 1], [], []>} : vector<16x256xbf16>, vector<256x256xbf16>, vector<16x256xf32> -> vector<16x256xf32>
      %170 = vector.shape_cast %169 : vector<16x256xf32> to vector<2x8x256xf32>
      %c0_89 = arith.constant 0 : index
      %c0_90 = arith.constant 0 : index
      %c0_91 = arith.constant 0 : index
      %171 = vector.load %arg4[%c0_89, %c0_90, %c0_91] : memref<1x8x256xf32, #tpu.memory_space<vmem>>, vector<1x8x256xf32>
      %172 = vector.shape_cast %171 : vector<1x8x256xf32> to vector<8x256xf32>
      %173 = vector.shape_cast %172 : vector<8x256xf32> to vector<1x8x256xf32>
      %174 = vector.broadcast %173 : vector<1x8x256xf32> to vector<2x8x256xf32>
      %175 = arith.addf %170, %174 : vector<2x8x256xf32>
      %176 = vector.shape_cast %175 : vector<2x8x256xf32> to vector<16x256xf32>
      %c0_92 = arith.constant 0 : index
      %c0_93 = arith.constant 0 : index
      %177 = vector.load %arg26[%c0_92, %c0_93] : memref<16x256xf32, #tpu.memory_space<vmem>>, vector<16x256xf32>
      tpu.vector_store %arg26[%c0_92, %c0_93], %176 {strides = array<i32>} : memref<16x256xf32, #tpu.memory_space<vmem>>, vector<16x256xf32>,
    } else {
    }
    %c0 = arith.constant 0 : index
    %c0_1 = arith.constant 0 : index
    %3 = vector.load %arg26[%c0, %c0_1] : memref<16x256xf32, #tpu.memory_space<vmem>>, vector<16x256xf32>
    %c0_2 = arith.constant 0 : index
    %c0_3 = arith.constant 0 : index
    %c0_4 = arith.constant 0 : index
    %c0_5 = arith.constant 0 : index
    %4 = vector.load %arg5[%c0_2, %c0_3, %c0_4, %c0_5] : memref<1x1x1x256xf32, #tpu.memory_space<vmem>>, vector<1x1x1x256xf32>
    %5 = vector.shape_cast %4 : vector<1x1x1x256xf32> to vector<1x256xf32>
    %c0_6 = arith.constant 0 : index
    %c0_7 = arith.constant 0 : index
    %c0_8 = arith.constant 0 : index
    %c0_9 = arith.constant 0 : index
    %6 = vector.load %arg6[%c0_6, %c0_7, %c0_8, %c0_9] : memref<1x1x1x256xf32, #tpu.memory_space<vmem>>, vector<1x1x1x256xf32>
    %7 = vector.shape_cast %6 : vector<1x1x1x256xf32> to vector<1x256xf32>
    %cst = arith.constant dense<0.000000e+00> : vector<16xf32>
    %8 = vector.multi_reduction <add>, %3, %cst [1] : vector<16x256xf32> to vector<16xf32>
    %9 = vector.shape_cast %8 : vector<16xf32> to vector<16x1xf32>
    %cst_10 = arith.constant 2.560000e+02 : f32
    %10 = vector.broadcast %cst_10 : f32 to vector<16x1xf32>
    %11 = arith.divf %9, %10 : vector<16x1xf32>
    %12 = vector.broadcast %11 : vector<16x1xf32> to vector<16x256xf32>
    %13 = arith.subf %3, %12 : vector<16x256xf32>
    %14 = arith.mulf %13, %13 : vector<16x256xf32>
    %cst_11 = arith.constant dense<0.000000e+00> : vector<16xf32>
    %15 = vector.multi_reduction <add>, %14, %cst_11 [1] : vector<16x256xf32> to vector<16xf32>
    %16 = vector.shape_cast %15 : vector<16xf32> to vector<16x1xf32>
    %cst_12 = arith.constant 2.560000e+02 : f32
    %17 = vector.broadcast %cst_12 : f32 to vector<16x1xf32>
    %18 = arith.divf %16, %17 : vector<16x1xf32>
    %19 = vector.broadcast %11 : vector<16x1xf32> to vector<16x256xf32>
    %20 = arith.subf %3, %19 : vector<16x256xf32>
    %cst_13 = arith.constant 9.99999997E-7 : f32
    %21 = vector.broadcast %cst_13 : f32 to vector<16x1xf32>
    %22 = arith.addf %18, %21 : vector<16x1xf32>
    %23 = math.rsqrt %22 : vector<16x1xf32>
    %24 = vector.broadcast %23 : vector<16x1xf32> to vector<16x256xf32>
    %25 = arith.mulf %20, %24 : vector<16x256xf32>
    %26 = vector.broadcast %5 : vector<1x256xf32> to vector<16x256xf32>
    %27 = arith.mulf %25, %26 : vector<16x256xf32>
    %28 = vector.broadcast %7 : vector<1x256xf32> to vector<16x256xf32>
    %29 = arith.addf %27, %28 : vector<16x256xf32>
    %30 = arith.truncf %29 : vector<16x256xf32> to vector<16x256xbf16>
    %c0_14 = arith.constant 0 : index
    %c0_15 = arith.constant 0 : index
    %c0_16 = arith.constant 0 : index
    %c0_17 = arith.constant 0 : index
    %31 = vector.load %arg7[%c0_14, %c0_15, %c0_16, %c0_17] : memref<1x1x256x768xbf16, #tpu.memory_space<vmem>>, vector<1x1x256x768xbf16>
    %32 = vector.shape_cast %31 : vector<1x1x256x768xbf16> to vector<256x768xbf16>
    %cst_18 = arith.constant dense<0.000000e+00> : vector<16x768xf32>
    %33 = tpu.matmul %30, %32, %cst_18 {dimension_numbers = #tpu.dot_dimension_numbers<[1], [0], [0], [1], [0, 0, 1, 1], [], []>} : vector<16x256xbf16>, vector<256x768xbf16>, vector<16x768xf32> -> vector<16x768xf32>
    %c0_19 = arith.constant 0 : index
    %c0_20 = arith.constant 0 : index
    %c0_21 = arith.constant 0 : index
    %c0_22 = arith.constant 0 : index
    %34 = vector.load %arg8[%c0_19, %c0_20, %c0_21, %c0_22] : memref<1x1x1x768xf32, #tpu.memory_space<vmem>>, vector<1x1x1x768xf32>
    %35 = vector.shape_cast %34 : vector<1x1x1x768xf32> to vector<1x768xf32>
    %36 = vector.broadcast %35 : vector<1x768xf32> to vector<16x768xf32>
    %37 = arith.addf %33, %36 : vector<16x768xf32>
    %38 = arith.truncf %37 : vector<16x768xf32> to vector<16x768xbf16>
    %39 = tpu.iota {dimensions = array<i32: 2>} : vector<1x1x8xi32>
    %c5_i32 = arith.constant 5 : i32
    %40 = vector.broadcast %c5_i32 : i32 to vector<1x1x8xi32>
    %41 = arith.cmpi sge, %39, %40 : vector<1x1x8xi32>
    %cst_23 = arith.constant -1.000000e+09 : f32
    %cst_24 = arith.constant 0.000000e+00 : f32
    %42 = vector.broadcast %cst_23 : f32 to vector<1x1x8xf32>
    %43 = vector.broadcast %cst_24 : f32 to vector<1x1x8xf32>
    %44 = arith.select %41, %42, %43 : vector<1x1x8xi1>, vector<1x1x8xf32>
    %45 = vector.extract_strided_slice %38 {offsets = [0, 0], sizes = [16, 128], strides = [1, 1]} : vector<16x768xbf16> to vector<16x128xbf16>
    %46 = vector.shape_cast %45 : vector<16x128xbf16> to vector<2x8x128xbf16>
    %47 = vector.extract_strided_slice %38 {offsets = [0, 256], sizes = [16, 128], strides = [1, 1]} : vector<16x768xbf16> to vector<16x128xbf16>
    %48 = vector.shape_cast %47 : vector<16x128xbf16> to vector<2x8x128xbf16>
    %49 = vector.extract_strided_slice %38 {offsets = [0, 512], sizes = [16, 128], strides = [1, 1]} : vector<16x768xbf16> to vector<16x128xbf16>
    %50 = vector.shape_cast %49 : vector<16x128xbf16> to vector<2x8x128xbf16>
    "tpu.trace_start"() <{level = 10 : i32, message = "bqd,bkd->bqk"}> : () -> ()
    %cst_25 = arith.constant dense<0.000000e+00> : vector<2x8x8xf32>
    %51 = tpu.matmul %46, %48, %cst_25 {dimension_numbers = #tpu.dot_dimension_numbers<[2], [2], [1], [1], [0, 0, 0, 1, 1, 1], [0], [0]>} : vector<2x8x128xbf16>, vector<2x8x128xbf16>, vector<2x8x8xf32> -> vector<2x8x8xf32>
    "tpu.trace_stop"() : () -> ()
    %52 = vector.broadcast %44 : vector<1x1x8xf32> to vector<2x8x8xf32>
    %53 = arith.addf %51, %52 : vector<2x8x8xf32>
    %cst_26 = arith.constant dense<0xFF800000> : vector<2x8xf32>
    %54 = vector.multi_reduction <maximumf>, %53, %cst_26 [2] : vector<2x8x8xf32> to vector<2x8xf32>
    %55 = vector.shape_cast %54 : vector<2x8xf32> to vector<2x8x1xf32>
    %56 = vector.broadcast %55 : vector<2x8x1xf32> to vector<2x8x8xf32>
    %57 = arith.subf %53, %56 : vector<2x8x8xf32>
    %58 = math.exp %57 : vector<2x8x8xf32>
    %cst_27 = arith.constant dense<0.000000e+00> : vector<2x8xf32>
    %59 = vector.multi_reduction <add>, %58, %cst_27 [2] : vector<2x8x8xf32> to vector<2x8xf32>
    %60 = vector.shape_cast %59 : vector<2x8xf32> to vector<2x8x1xf32>
    %61 = tpu.reciprocal %60 {approx = true} : vector<2x8x1xf32> -> vector<2x8x1xf32>
    %62 = vector.broadcast %61 : vector<2x8x1xf32> to vector<2x8x8xf32>
    %63 = arith.mulf %58, %62 : vector<2x8x8xf32>
    %64 = arith.truncf %63 : vector<2x8x8xf32> to vector<2x8x8xbf16>
    "tpu.trace_start"() <{level = 10 : i32, message = "bqk,bkd->bqd"}> : () -> ()
    %cst_28 = arith.constant dense<0.000000e+00> : vector<2x8x128xf32>
    %65 = tpu.matmul %64, %50, %cst_28 {dimension_numbers = #tpu.dot_dimension_numbers<[2], [1], [1], [2], [0, 0, 0, 1, 1, 2], [0], [0]>} : vector<2x8x8xbf16>, vector<2x8x128xbf16>, vector<2x8x128xf32> -> vector<2x8x128xf32>
    "tpu.trace_stop"() : () -> ()
    %66 = arith.truncf %65 : vector<2x8x128xf32> to vector<2x8x128xbf16>
    %67 = vector.shape_cast %66 : vector<2x8x128xbf16> to vector<16x128xbf16>
    %68 = vector.extract_strided_slice %38 {offsets = [0, 128], sizes = [16, 128], strides = [1, 1]} : vector<16x768xbf16> to vector<16x128xbf16>
    %69 = vector.shape_cast %68 : vector<16x128xbf16> to vector<2x8x128xbf16>
    %70 = vector.extract_strided_slice %38 {offsets = [0, 384], sizes = [16, 128], strides = [1, 1]} : vector<16x768xbf16> to vector<16x128xbf16>
    %71 = vector.shape_cast %70 : vector<16x128xbf16> to vector<2x8x128xbf16>
    %72 = vector.extract_strided_slice %38 {offsets = [0, 640], sizes = [16, 128], strides = [1, 1]} : vector<16x768xbf16> to vector<16x128xbf16>
    %73 = vector.shape_cast %72 : vector<16x128xbf16> to vector<2x8x128xbf16>
    "tpu.trace_start"() <{level = 10 : i32, message = "bqd,bkd->bqk"}> : () -> ()
    %cst_29 = arith.constant dense<0.000000e+00> : vector<2x8x8xf32>
    %74 = tpu.matmul %69, %71, %cst_29 {dimension_numbers = #tpu.dot_dimension_numbers<[2], [2], [1], [1], [0, 0, 0, 1, 1, 1], [0], [0]>} : vector<2x8x128xbf16>, vector<2x8x128xbf16>, vector<2x8x8xf32> -> vector<2x8x8xf32>
    "tpu.trace_stop"() : () -> ()
    %75 = vector.broadcast %44 : vector<1x1x8xf32> to vector<2x8x8xf32>
    %76 = arith.addf %74, %75 : vector<2x8x8xf32>
    %cst_30 = arith.constant dense<0xFF800000> : vector<2x8xf32>
    %77 = vector.multi_reduction <maximumf>, %76, %cst_30 [2] : vector<2x8x8xf32> to vector<2x8xf32>
    %78 = vector.shape_cast %77 : vector<2x8xf32> to vector<2x8x1xf32>
    %79 = vector.broadcast %78 : vector<2x8x1xf32> to vector<2x8x8xf32>
    %80 = arith.subf %76, %79 : vector<2x8x8xf32>
    %81 = math.exp %80 : vector<2x8x8xf32>
    %cst_31 = arith.constant dense<0.000000e+00> : vector<2x8xf32>
    %82 = vector.multi_reduction <add>, %81, %cst_31 [2] : vector<2x8x8xf32> to vector<2x8xf32>
    %83 = vector.shape_cast %82 : vector<2x8xf32> to vector<2x8x1xf32>
    %84 = tpu.reciprocal %83 {approx = true} : vector<2x8x1xf32> -> vector<2x8x1xf32>
    %85 = vector.broadcast %84 : vector<2x8x1xf32> to vector<2x8x8xf32>
    %86 = arith.mulf %81, %85 : vector<2x8x8xf32>
    %87 = arith.truncf %86 : vector<2x8x8xf32> to vector<2x8x8xbf16>
    "tpu.trace_start"() <{level = 10 : i32, message = "bqk,bkd->bqd"}> : () -> ()
    %cst_32 = arith.constant dense<0.000000e+00> : vector<2x8x128xf32>
    %88 = tpu.matmul %87, %73, %cst_32 {dimension_numbers = #tpu.dot_dimension_numbers<[2], [1], [1], [2], [0, 0, 0, 1, 1, 2], [0], [0]>} : vector<2x8x8xbf16>, vector<2x8x128xbf16>, vector<2x8x128xf32> -> vector<2x8x128xf32>
    "tpu.trace_stop"() : () -> ()
    %89 = arith.truncf %88 : vector<2x8x128xf32> to vector<2x8x128xbf16>
    %90 = vector.shape_cast %89 : vector<2x8x128xbf16> to vector<16x128xbf16>
    %91 = tpu.concatenate %67, %90 in 1 : vector<16x128xbf16>, vector<16x128xbf16> -> vector<16x256xbf16>
    %c0_33 = arith.constant 0 : index
    %c0_34 = arith.constant 0 : index
    %c0_35 = arith.constant 0 : index
    %c0_36 = arith.constant 0 : index
    %92 = vector.load %arg9[%c0_33, %c0_34, %c0_35, %c0_36] : memref<1x1x256x256xbf16, #tpu.memory_space<vmem>>, vector<1x1x256x256xbf16>
    %93 = vector.shape_cast %92 : vector<1x1x256x256xbf16> to vector<256x256xbf16>
    %cst_37 = arith.constant dense<0.000000e+00> : vector<16x256xf32>
    %94 = tpu.matmul %91, %93, %cst_37 {dimension_numbers = #tpu.dot_dimension_numbers<[1], [0], [0], [1], [0, 0, 1, 1], [], []>} : vector<16x256xbf16>, vector<256x256xbf16>, vector<16x256xf32> -> vector<16x256xf32>
    %c0_38 = arith.constant 0 : index
    %c0_39 = arith.constant 0 : index
    %c0_40 = arith.constant 0 : index
    %c0_41 = arith.constant 0 : index
    %95 = vector.load %arg10[%c0_38, %c0_39, %c0_40, %c0_41] : memref<1x1x1x256xf32, #tpu.memory_space<vmem>>, vector<1x1x1x256xf32>
    %96 = vector.shape_cast %95 : vector<1x1x1x256xf32> to vector<1x256xf32>
    %97 = vector.broadcast %96 : vector<1x256xf32> to vector<16x256xf32>
    %98 = arith.addf %94, %97 : vector<16x256xf32>
    %99 = arith.addf %3, %98 : vector<16x256xf32>
    %c0_42 = arith.constant 0 : index
    %c0_43 = arith.constant 0 : index
    %c0_44 = arith.constant 0 : index
    %c0_45 = arith.constant 0 : index
    %100 = vector.load %arg11[%c0_42, %c0_43, %c0_44, %c0_45] : memref<1x1x1x256xf32, #tpu.memory_space<vmem>>, vector<1x1x1x256xf32>
    %101 = vector.shape_cast %100 : vector<1x1x1x256xf32> to vector<1x256xf32>
    %c0_46 = arith.constant 0 : index
    %c0_47 = arith.constant 0 : index
    %c0_48 = arith.constant 0 : index
    %c0_49 = arith.constant 0 : index
    %102 = vector.load %arg12[%c0_46, %c0_47, %c0_48, %c0_49] : memref<1x1x1x256xf32, #tpu.memory_space<vmem>>, vector<1x1x1x256xf32>
    %103 = vector.shape_cast %102 : vector<1x1x1x256xf32> to vector<1x256xf32>
    %cst_50 = arith.constant dense<0.000000e+00> : vector<16xf32>
    %104 = vector.multi_reduction <add>, %99, %cst_50 [1] : vector<16x256xf32> to vector<16xf32>
    %105 = vector.shape_cast %104 : vector<16xf32> to vector<16x1xf32>
    %cst_51 = arith.constant 2.560000e+02 : f32
    %106 = vector.broadcast %cst_51 : f32 to vector<16x1xf32>
    %107 = arith.divf %105, %106 : vector<16x1xf32>
    %108 = vector.broadcast %107 : vector<16x1xf32> to vector<16x256xf32>
    %109 = arith.subf %99, %108 : vector<16x256xf32>
    %110 = arith.mulf %109, %109 : vector<16x256xf32>
    %cst_52 = arith.constant dense<0.000000e+00> : vector<16xf32>
    %111 = vector.multi_reduction <add>, %110, %cst_52 [1] : vector<16x256xf32> to vector<16xf32>
    %112 = vector.shape_cast %111 : vector<16xf32> to vector<16x1xf32>
    %cst_53 = arith.constant 2.560000e+02 : f32
    %113 = vector.broadcast %cst_53 : f32 to vector<16x1xf32>
    %114 = arith.divf %112, %113 : vector<16x1xf32>
    %115 = vector.broadcast %107 : vector<16x1xf32> to vector<16x256xf32>
    %116 = arith.subf %99, %115 : vector<16x256xf32>
    %cst_54 = arith.constant 9.99999997E-7 : f32
    %117 = vector.broadcast %cst_54 : f32 to vector<16x1xf32>
    %118 = arith.addf %114, %117 : vector<16x1xf32>
    %119 = math.rsqrt %118 : vector<16x1xf32>
    %120 = vector.broadcast %119 : vector<16x1xf32> to vector<16x256xf32>
    %121 = arith.mulf %116, %120 : vector<16x256xf32>
    %122 = vector.broadcast %101 : vector<1x256xf32> to vector<16x256xf32>
    %123 = arith.mulf %121, %122 : vector<16x256xf32>
    %124 = vector.broadcast %103 : vector<1x256xf32> to vector<16x256xf32>
    %125 = arith.addf %123, %124 : vector<16x256xf32>
    %126 = arith.truncf %125 : vector<16x256xf32> to vector<16x256xbf16>
    %c0_55 = arith.constant 0 : index
    %c0_56 = arith.constant 0 : index
    %c0_57 = arith.constant 0 : index
    %c0_58 = arith.constant 0 : index
    %127 = vector.load %arg13[%c0_55, %c0_56, %c0_57, %c0_58] : memref<1x1x256x512xbf16, #tpu.memory_space<vmem>>, vector<1x1x256x512xbf16>
    %128 = vector.shape_cast %127 : vector<1x1x256x512xbf16> to vector<256x512xbf16>
    %cst_59 = arith.constant dense<0.000000e+00> : vector<16x512xf32>
    %129 = tpu.matmul %126, %128, %cst_59 {dimension_numbers = #tpu.dot_dimension_numbers<[1], [0], [0], [1], [0, 0, 1, 1], [], []>} : vector<16x256xbf16>, vector<256x512xbf16>, vector<16x512xf32> -> vector<16x512xf32>
    %c0_60 = arith.constant 0 : index
    %c0_61 = arith.constant 0 : index
    %c0_62 = arith.constant 0 : index
    %c0_63 = arith.constant 0 : index
    %130 = vector.load %arg14[%c0_60, %c0_61, %c0_62, %c0_63] : memref<1x1x1x512xf32, #tpu.memory_space<vmem>>, vector<1x1x1x512xf32>
    %131 = vector.shape_cast %130 : vector<1x1x1x512xf32> to vector<1x512xf32>
    %132 = vector.broadcast %131 : vector<1x512xf32> to vector<16x512xf32>
    %133 = arith.addf %129, %132 : vector<16x512xf32>
    %134 = arith.mulf %133, %133 : vector<16x512xf32>
    %135 = arith.mulf %133, %134 : vector<16x512xf32>
    %cst_64 = arith.constant 4.471500e-02 : f32
    %136 = vector.broadcast %cst_64 : f32 to vector<16x512xf32>
    %137 = arith.mulf %136, %135 : vector<16x512xf32>
    %138 = arith.addf %133, %137 : vector<16x512xf32>
    %cst_65 = arith.constant 0.797884583 : f32
    %139 = vector.broadcast %cst_65 : f32 to vector<16x512xf32>
    %140 = arith.mulf %139, %138 : vector<16x512xf32>
    %141 = math.tanh %140 : vector<16x512xf32>
    %cst_66 = arith.constant 1.000000e+00 : f32
    %142 = vector.broadcast %cst_66 : f32 to vector<16x512xf32>
    %143 = arith.addf %142, %141 : vector<16x512xf32>
    %cst_67 = arith.constant 5.000000e-01 : f32
    %144 = vector.broadcast %cst_67 : f32 to vector<16x512xf32>
    %145 = arith.mulf %144, %143 : vector<16x512xf32>
    %146 = arith.mulf %133, %145 : vector<16x512xf32>
    %147 = arith.truncf %146 : vector<16x512xf32> to vector<16x512xbf16>
    %c0_68 = arith.constant 0 : index
    %c0_69 = arith.constant 0 : index
    %c0_70 = arith.constant 0 : index
    %c0_71 = arith.constant 0 : index
    %148 = vector.load %arg15[%c0_68, %c0_69, %c0_70, %c0_71] : memref<1x1x512x256xbf16, #tpu.memory_space<vmem>>, vector<1x1x512x256xbf16>
    %149 = vector.shape_cast %148 : vector<1x1x512x256xbf16> to vector<512x256xbf16>
    %cst_72 = arith.constant dense<0.000000e+00> : vector<16x256xf32>
    %150 = tpu.matmul %147, %149, %cst_72 {dimension_numbers = #tpu.dot_dimension_numbers<[1], [0], [0], [1], [0, 0, 1, 1], [], []>} : vector<16x512xbf16>, vector<512x256xbf16>, vector<16x256xf32> -> vector<16x256xf32>
    %c0_73 = arith.constant 0 : index
    %c0_74 = arith.constant 0 : index
    %c0_75 = arith.constant 0 : index
    %c0_76 = arith.constant 0 : index
    %151 = vector.load %arg16[%c0_73, %c0_74, %c0_75, %c0_76] : memref<1x1x1x256xf32, #tpu.memory_space<vmem>>, vector<1x1x1x256xf32>
    %152 = vector.shape_cast %151 : vector<1x1x1x256xf32> to vector<1x256xf32>
    %153 = vector.broadcast %152 : vector<1x256xf32> to vector<16x256xf32>
    %154 = arith.addf %150, %153 : vector<16x256xf32>
    %155 = arith.addf %99, %154 : vector<16x256xf32>
    %c0_77 = arith.constant 0 : index
    %c0_78 = arith.constant 0 : index
    %156 = vector.load %arg26[%c0_77, %c0_78] : memref<16x256xf32, #tpu.memory_space<vmem>>, vector<16x256xf32>
    tpu.vector_store %arg26[%c0_77, %c0_78], %155 {strides = array<i32>} : memref<16x256xf32, #tpu.memory_space<vmem>>, vector<16x256xf32>,
    %c1_i32 = arith.constant 1 : i32
    %157 = arith.cmpi eq, %arg1, %c1_i32 : i32
    %158 = arith.extui %157 : i1 to i32
    %c0_i32_79 = arith.constant 0 : i32
    %159 = arith.cmpi ne, %158, %c0_i32_79 : i32
    scf.if %159 {
      %c0_83 = arith.constant 0 : index
      %c0_84 = arith.constant 0 : index
      %165 = vector.load %arg26[%c0_83, %c0_84] : memref<16x256xf32, #tpu.memory_space<vmem>>, vector<16x256xf32>
      %166 = vector.shape_cast %165 : vector<16x256xf32> to vector<2x8x256xf32>
      %167 = vector.extract_strided_slice %166 {offsets = [0, 0, 0], sizes = [2, 1, 256], strides = [1, 1, 1]} : vector<2x8x256xf32> to vector<2x1x256xf32>
      %168 = vector.shape_cast %167 : vector<2x1x256xf32> to vector<2x256xf32>
      %c0_85 = arith.constant 0 : index
      %c0_86 = arith.constant 0 : index
      %c0_87 = arith.constant 0 : index
      %169 = vector.load %arg17[%c0_85, %c0_86, %c0_87] : memref<1x1x256xf32, #tpu.memory_space<vmem>>, vector<1x1x256xf32>
      %170 = vector.shape_cast %169 : vector<1x1x256xf32> to vector<1x256xf32>
      %c0_88 = arith.constant 0 : index
      %c0_89 = arith.constant 0 : index
      %c0_90 = arith.constant 0 : index
      %171 = vector.load %arg18[%c0_88, %c0_89, %c0_90] : memref<1x1x256xf32, #tpu.memory_space<vmem>>, vector<1x1x256xf32>
      %172 = vector.shape_cast %171 : vector<1x1x256xf32> to vector<1x256xf32>
      %cst_91 = arith.constant dense<0.000000e+00> : vector<2xf32>
      %173 = vector.multi_reduction <add>, %168, %cst_91 [1] : vector<2x256xf32> to vector<2xf32>
      %174 = vector.shape_cast %173 : vector<2xf32> to vector<2x1xf32>
      %cst_92 = arith.constant 2.560000e+02 : f32
      %175 = vector.broadcast %cst_92 : f32 to vector<2x1xf32>
      %176 = arith.divf %174, %175 : vector<2x1xf32>
      %177 = vector.broadcast %176 : vector<2x1xf32> to vector<2x256xf32>
      %178 = arith.subf %168, %177 : vector<2x256xf32>
      %179 = arith.mulf %178, %178 : vector<2x256xf32>
      %cst_93 = arith.constant dense<0.000000e+00> : vector<2xf32>
      %180 = vector.multi_reduction <add>, %179, %cst_93 [1] : vector<2x256xf32> to vector<2xf32>
      %181 = vector.shape_cast %180 : vector<2xf32> to vector<2x1xf32>
      %cst_94 = arith.constant 2.560000e+02 : f32
      %182 = vector.broadcast %cst_94 : f32 to vector<2x1xf32>
      %183 = arith.divf %181, %182 : vector<2x1xf32>
      %184 = vector.broadcast %176 : vector<2x1xf32> to vector<2x256xf32>
      %185 = arith.subf %168, %184 : vector<2x256xf32>
      %cst_95 = arith.constant 9.99999997E-7 : f32
      %186 = vector.broadcast %cst_95 : f32 to vector<2x1xf32>
      %187 = arith.addf %183, %186 : vector<2x1xf32>
      %188 = math.rsqrt %187 : vector<2x1xf32>
      %189 = vector.broadcast %188 : vector<2x1xf32> to vector<2x256xf32>
      %190 = arith.mulf %185, %189 : vector<2x256xf32>
      %191 = vector.broadcast %170 : vector<1x256xf32> to vector<2x256xf32>
      %192 = arith.mulf %190, %191 : vector<2x256xf32>
      %193 = vector.broadcast %172 : vector<1x256xf32> to vector<2x256xf32>
      %194 = arith.addf %192, %193 : vector<2x256xf32>
      %c0_i32_96 = arith.constant 0 : i32
      %195 = arith.cmpi eq, %arg0, %c0_i32_96 : i32
      %196 = arith.extui %195 : i1 to i32
      %c0_i32_97 = arith.constant 0 : i32
      %197 = arith.cmpi ne, %196, %c0_i32_97 : i32
      scf.if %197 {
        %c0_100 = arith.constant 0 : index
        %c0_101 = arith.constant 0 : index
        %201 = vector.load %arg23[%c0_100, %c0_101] : memref<2x512xf32, #tpu.memory_space<vmem>>, vector<2x256xf32>
        tpu.vector_store %arg23[%c0_100, %c0_101], %194 {strides = array<i32>} : memref<2x512xf32, #tpu.memory_space<vmem>>, vector<2x256xf32>,
      } else {
      }
      %c1_i32_98 = arith.constant 1 : i32
      %198 = arith.cmpi eq, %arg0, %c1_i32_98 : i32
      %199 = arith.extui %198 : i1 to i32
      %c0_i32_99 = arith.constant 0 : i32
      %200 = arith.cmpi ne, %199, %c0_i32_99 : i32
      scf.if %200 {
        %c0_100 = arith.constant 0 : index
        %c256 = arith.constant 256 : index
        %201 = vector.load %arg23[%c0_100, %c256] : memref<2x512xf32, #tpu.memory_space<vmem>>, vector<2x256xf32>
        tpu.vector_store %arg23[%c0_100, %c256], %194 {strides = array<i32>} : memref<2x512xf32, #tpu.memory_space<vmem>>, vector<2x256xf32>,
      } else {
      }
    } else {
    }
    %c1_i32_80 = arith.constant 1 : i32
    %160 = arith.cmpi eq, %arg0, %c1_i32_80 : i32
    %c1_i32_81 = arith.constant 1 : i32
    %161 = arith.cmpi eq, %arg1, %c1_i32_81 : i32
    %162 = arith.andi %160, %161 : i1
    %163 = arith.extui %162 : i1 to i32
    %c0_i32_82 = arith.constant 0 : i32
    %164 = arith.cmpi ne, %163, %c0_i32_82 : i32
    scf.if %164 {
      %c0_83 = arith.constant 0 : index
      %c0_84 = arith.constant 0 : index
      %165 = vector.load %arg23[%c0_83, %c0_84] : memref<2x512xf32, #tpu.memory_space<vmem>>, vector<2x512xf32>
      %166 = arith.truncf %165 : vector<2x512xf32> to vector<2x512xbf16>
      %c0_85 = arith.constant 0 : index
      %c0_86 = arith.constant 0 : index
      %167 = vector.load %arg19[%c0_85, %c0_86] : memref<512x128xbf16, #tpu.memory_space<vmem>>, vector<512x128xbf16>
      %cst_87 = arith.constant dense<0.000000e+00> : vector<2x128xf32>
      %168 = tpu.matmul %166, %167, %cst_87 {dimension_numbers = #tpu.dot_dimension_numbers<[1], [0], [0], [1], [0, 0, 1, 1], [], []>} : vector<2x512xbf16>, vector<512x128xbf16>, vector<2x128xf32> -> vector<2x128xf32>
      %c0_88 = arith.constant 0 : index
      %c0_89 = arith.constant 0 : index
      %169 = vector.load %arg20[%c0_88, %c0_89] : memref<1x128xf32, #tpu.memory_space<vmem>>, vector<1x128xf32>
      %170 = vector.broadcast %169 : vector<1x128xf32> to vector<2x128xf32>
      %171 = arith.addf %168, %170 : vector<2x128xf32>
      %c0_90 = arith.constant 0 : index
      %c0_91 = arith.constant 0 : index
      %172 = vector.load %arg24[%c0_90, %c0_91] : memref<2x128xf32, #tpu.memory_space<vmem>>, vector<2x128xf32>
      tpu.vector_store %arg24[%c0_90, %c0_91], %171 {strides = array<i32>} : memref<2x128xf32, #tpu.memory_space<vmem>>, vector<2x128xf32>,
      %173 = vector.extract_strided_slice %165 {offsets = [0, 256], sizes = [2, 256], strides = [1, 1]} : vector<2x512xf32> to vector<2x256xf32>
      %174 = arith.truncf %173 : vector<2x256xf32> to vector<2x256xbf16>
      %c0_92 = arith.constant 0 : index
      %c0_93 = arith.constant 0 : index
      %175 = vector.load %arg21[%c0_92, %c0_93] : memref<256x128xbf16, #tpu.memory_space<vmem>>, vector<256x128xbf16>
      %cst_94 = arith.constant dense<0.000000e+00> : vector<2x128xf32>
      %176 = tpu.matmul %174, %175, %cst_94 {dimension_numbers = #tpu.dot_dimension_numbers<[1], [0], [0], [1], [0, 0, 1, 1], [], []>} : vector<2x256xbf16>, vector<256x128xbf16>, vector<2x128xf32> -> vector<2x128xf32>
      %c0_95 = arith.constant 0 : index
      %c0_96 = arith.constant 0 : index
      %177 = vector.load %arg22[%c0_95, %c0_96] : memref<1x128xf32, #tpu.memory_space<vmem>>, vector<1x128xf32>
      %178 = vector.broadcast %177 : vector<1x128xf32> to vector<2x128xf32>
      %179 = arith.addf %176, %178 : vector<2x128xf32>
      %c0_97 = arith.constant 0 : index
      %c0_98 = arith.constant 0 : index
      %180 = vector.load %arg25[%c0_97, %c0_98] : memref<2x128xf32, #tpu.memory_space<vmem>>, vector<2x128xf32>
      tpu.vector_store %arg25[%c0_97, %c0_98], %179 {strides = array<i32>} : memref<2x128xf32, #tpu.memory_space<vmem>>, vector<2x128xf32>,
    } else {
    }
    return
  }
  func.func @transform_0(%arg0: i32, %arg1: i32) -> (i32, i32) {
    %c0_i32 = arith.constant 0 : i32
    %c0_i32_0 = arith.constant 0 : i32
    %c0_i32_1 = arith.constant 0 : i32
    return %c0_i32, %c0_i32_0 : i32, i32
  }
  func.func @transform_1(%arg0: i32, %arg1: i32) -> (i32, i32, i32) {
    %c0_i32 = arith.constant 0 : i32
    %c0_i32_0 = arith.constant 0 : i32
    %c0_i32_1 = arith.constant 0 : i32
    return %arg0, %c0_i32, %c0_i32_0 : i32, i32, i32
  }
  func.func @transform_2(%arg0: i32, %arg1: i32) -> (i32, i32, i32) {
    %c0_i32 = arith.constant 0 : i32
    %c0_i32_0 = arith.constant 0 : i32
    %c0_i32_1 = arith.constant 0 : i32
    return %arg0, %c0_i32, %c0_i32_0 : i32, i32, i32
  }
  func.func @transform_3(%arg0: i32, %arg1: i32) -> (i32, i32, i32, i32) {
    %c0_i32 = arith.constant 0 : i32
    %c0_i32_0 = arith.constant 0 : i32
    %c0_i32_1 = arith.constant 0 : i32
    return %arg0, %arg1, %c0_i32, %c0_i32_0 : i32, i32, i32, i32
  }
  func.func @transform_4(%arg0: i32, %arg1: i32) -> (i32, i32, i32, i32) {
    %c0_i32 = arith.constant 0 : i32
    %c0_i32_0 = arith.constant 0 : i32
    %c0_i32_1 = arith.constant 0 : i32
    return %arg0, %arg1, %c0_i32, %c0_i32_0 : i32, i32, i32, i32
  }
  func.func @transform_5(%arg0: i32, %arg1: i32) -> (i32, i32, i32, i32) {
    %c0_i32 = arith.constant 0 : i32
    %c0_i32_0 = arith.constant 0 : i32
    %c0_i32_1 = arith.constant 0 : i32
    return %arg0, %arg1, %c0_i32, %c0_i32_0 : i32, i32, i32, i32
  }
  func.func @transform_6(%arg0: i32, %arg1: i32) -> (i32, i32, i32, i32) {
    %c0_i32 = arith.constant 0 : i32
    %c0_i32_0 = arith.constant 0 : i32
    %c0_i32_1 = arith.constant 0 : i32
    return %arg0, %arg1, %c0_i32, %c0_i32_0 : i32, i32, i32, i32
  }
  func.func @transform_7(%arg0: i32, %arg1: i32) -> (i32, i32, i32, i32) {
    %c0_i32 = arith.constant 0 : i32
    %c0_i32_0 = arith.constant 0 : i32
    %c0_i32_1 = arith.constant 0 : i32
    return %arg0, %arg1, %c0_i32, %c0_i32_0 : i32, i32, i32, i32
  }
  func.func @transform_8(%arg0: i32, %arg1: i32) -> (i32, i32, i32, i32) {
    %c0_i32 = arith.constant 0 : i32
    %c0_i32_0 = arith.constant 0 : i32
    %c0_i32_1 = arith.constant 0 : i32
    return %arg0, %arg1, %c0_i32, %c0_i32_0 : i32, i32, i32, i32
  }
  func.func @transform_9(%arg0: i32, %arg1: i32) -> (i32, i32, i32, i32) {
    %c0_i32 = arith.constant 0 : i32
    %c0_i32_0 = arith.constant 0 : i32
    %c0_i32_1 = arith.constant 0 : i32
    return %arg0, %arg1, %c0_i32, %c0_i32_0 : i32, i32, i32, i32
  }
  func.func @transform_10(%arg0: i32, %arg1: i32) -> (i32, i32, i32, i32) {
    %c0_i32 = arith.constant 0 : i32
    %c0_i32_0 = arith.constant 0 : i32
    %c0_i32_1 = arith.constant 0 : i32
    return %arg0, %arg1, %c0_i32, %c0_i32_0 : i32, i32, i32, i32
  }
  func.func @transform_11(%arg0: i32, %arg1: i32) -> (i32, i32, i32, i32) {
    %c0_i32 = arith.constant 0 : i32
    %c0_i32_0 = arith.constant 0 : i32
    %c0_i32_1 = arith.constant 0 : i32
    return %arg0, %arg1, %c0_i32, %c0_i32_0 : i32, i32, i32, i32
  }
  func.func @transform_12(%arg0: i32, %arg1: i32) -> (i32, i32, i32, i32) {
    %c0_i32 = arith.constant 0 : i32
    %c0_i32_0 = arith.constant 0 : i32
    %c0_i32_1 = arith.constant 0 : i32
    return %arg0, %arg1, %c0_i32, %c0_i32_0 : i32, i32, i32, i32
  }
  func.func @transform_13(%arg0: i32, %arg1: i32) -> (i32, i32, i32, i32) {
    %c0_i32 = arith.constant 0 : i32
    %c0_i32_0 = arith.constant 0 : i32
    %c0_i32_1 = arith.constant 0 : i32
    return %arg0, %arg1, %c0_i32, %c0_i32_0 : i32, i32, i32, i32
  }
  func.func @transform_14(%arg0: i32, %arg1: i32) -> (i32, i32, i32, i32) {
    %c0_i32 = arith.constant 0 : i32
    %c0_i32_0 = arith.constant 0 : i32
    %c0_i32_1 = arith.constant 0 : i32
    return %arg0, %arg1, %c0_i32, %c0_i32_0 : i32, i32, i32, i32
  }
  func.func @transform_15(%arg0: i32, %arg1: i32) -> (i32, i32, i32) {
    %c0_i32 = arith.constant 0 : i32
    %c0_i32_0 = arith.constant 0 : i32
    %c0_i32_1 = arith.constant 0 : i32
    return %arg0, %c0_i32, %c0_i32_0 : i32, i32, i32
  }
  func.func @transform_16(%arg0: i32, %arg1: i32) -> (i32, i32, i32) {
    %c0_i32 = arith.constant 0 : i32
    %c0_i32_0 = arith.constant 0 : i32
    %c0_i32_1 = arith.constant 0 : i32
    return %arg0, %c0_i32, %c0_i32_0 : i32, i32, i32
  }
  func.func @transform_17(%arg0: i32, %arg1: i32) -> (i32, i32) {
    %c0_i32 = arith.constant 0 : i32
    %c0_i32_0 = arith.constant 0 : i32
    %c0_i32_1 = arith.constant 0 : i32
    return %c0_i32, %c0_i32_0 : i32, i32
  }
  func.func @transform_18(%arg0: i32, %arg1: i32) -> (i32, i32) {
    %c0_i32 = arith.constant 0 : i32
    %c0_i32_0 = arith.constant 0 : i32
    %c0_i32_1 = arith.constant 0 : i32
    return %c0_i32, %c0_i32_0 : i32, i32
  }
  func.func @transform_19(%arg0: i32, %arg1: i32) -> (i32, i32) {
    %c0_i32 = arith.constant 0 : i32
    %c0_i32_0 = arith.constant 0 : i32
    %c0_i32_1 = arith.constant 0 : i32
    return %c0_i32, %c0_i32_0 : i32, i32
  }
  func.func @transform_20(%arg0: i32, %arg1: i32) -> (i32, i32) {
    %c0_i32 = arith.constant 0 : i32
    %c0_i32_0 = arith.constant 0 : i32
    %c0_i32_1 = arith.constant 0 : i32
    return %c0_i32, %c0_i32_0 : i32, i32
  }
  func.func @transform_21(%arg0: i32, %arg1: i32) -> (i32, i32) {
    %c0_i32 = arith.constant 0 : i32
    %c0_i32_0 = arith.constant 0 : i32
    %c0_i32_1 = arith.constant 0 : i32
    return %c0_i32, %c0_i32_0 : i32, i32
  }
  func.func @transform_22(%arg0: i32, %arg1: i32) -> (i32, i32) {
    %c0_i32 = arith.constant 0 : i32
    %c0_i32_0 = arith.constant 0 : i32
    %c0_i32_1 = arith.constant 0 : i32
    return %c0_i32, %c0_i32_0 : i32, i32
  }
  func.func @transform_23(%arg0: i32, %arg1: i32) -> (i32, i32) {
    %c0_i32 = arith.constant 0 : i32
    %c0_i32_0 = arith.constant 0 : i32
    %c0_i32_1 = arith.constant 0 : i32
    return %c0_i32, %c0_i32_0 : i32, i32
  }
}

</mosaic_0001>

<llo_original>
// kernel: tpu_custom_call.1
$region0: #{tpu_custom_call.1}
  #allocation0 [shape = 'u32[]', space=smem, size = 0x4, offset = 0x4, fixed_abs, tag = 'smem constant byte address 0x4 - core index']
  #allocation1 [shape = 'u32[144,128]{1,0:T(1,128)}', space=vmem, size = 0x12000, scoped, tag = 'internal scratch']
  #allocation2 [shape = 'f32[16,256]{1,0:T(8,128)}', space=vmem, size = 0x4000, scoped, tag = 'scratch operand']
  %s0 = inlined_call_operand.hbm [shape: f32[16,256], index: 0, kind: input, shape index: {}]
  %s1 = inlined_call_operand.hbm [shape: bf16[2,256,256], index: 1, kind: input, shape index: {}]
  %s2 = inlined_call_operand.hbm [shape: f32[2,8,256], index: 2, kind: input, shape index: {}]
  %s3 = inlined_call_operand.hbm [shape: f32[2,2,1,256], index: 3, kind: input, shape index: {}]
  %s4 = inlined_call_operand.hbm [shape: f32[2,2,1,256], index: 4, kind: input, shape index: {}]
  %s5 = inlined_call_operand.hbm [shape: bf16[2,2,256,768], index: 5, kind: input, shape index: {}]
  %s6 = inlined_call_operand.hbm [shape: f32[2,2,1,768], index: 6, kind: input, shape index: {}]
  %s7 = inlined_call_operand.hbm [shape: bf16[2,2,256,256], index: 7, kind: input, shape index: {}]
  %s8 = inlined_call_operand.hbm [shape: f32[2,2,1,256], index: 8, kind: input, shape index: {}]
  %s9 = inlined_call_operand.hbm [shape: f32[2,2,1,256], index: 9, kind: input, shape index: {}]
  %s10 = inlined_call_operand.hbm [shape: f32[2,2,1,256], index: 10, kind: input, shape index: {}]
  %s11 = inlined_call_operand.hbm [shape: bf16[2,2,256,512], index: 11, kind: input, shape index: {}]
  %s12 = inlined_call_operand.hbm [shape: f32[2,2,1,512], index: 12, kind: input, shape index: {}]
  %s13 = inlined_call_operand.hbm [shape: bf16[2,2,512,256], index: 13, kind: input, shape index: {}]
  %s14 = inlined_call_operand.hbm [shape: f32[2,2,1,256], index: 14, kind: input, shape index: {}]
  %s15 = inlined_call_operand.hbm [shape: f32[2,1,256], index: 15, kind: input, shape index: {}]
  %s16 = inlined_call_operand.hbm [shape: f32[2,1,256], index: 16, kind: input, shape index: {}]
  %s17 = inlined_call_operand.hbm [shape: bf16[512,128], index: 17, kind: input, shape index: {}]
  %s18 = inlined_call_operand.hbm [shape: f32[1,128], index: 18, kind: input, shape index: {}]
  %s19 = inlined_call_operand.hbm [shape: bf16[256,128], index: 19, kind: input, shape index: {}]
  %s20 = inlined_call_operand.hbm [shape: f32[1,128], index: 20, kind: input, shape index: {}]
  %s21 = inlined_call_operand.hbm [shape: f32[2,512], index: 21, kind: output, shape index: {0}]
  %s22 = inlined_call_operand.hbm [shape: f32[2,128], index: 22, kind: output, shape index: {1}]
  %s23 = inlined_call_operand.hbm [shape: f32[2,128], index: 23, kind: output, shape index: {2}]
  %24 = xla_tuple %s21, %s22, %s23
  %s25 = sld [smem:[#allocation0]]
  $region237: #{tpu_custom_call.1} parent=0
    _
  %s27 = ssub.s32 1, %s25
  %s28 = scalar_select 0, %s27, %s25
  $region1: #{tpu_custom_call.1} parent=0
    #allocation3 [shape = 'u8[16384]{0}', space=vmem, size = 0x4000, scoped, tag = 'input window, operand 0, single buffered']
    #allocation4 [shape = 's32[2]{0}', space=sflag, size = 0x8, scoped, tag = 'scoped memory for tpu_custom_call.1']
    #allocation5 [shape = 's32[2]{0}', space=sflag, size = 0x8, scoped, tag = 'scoped memory for tpu_custom_call.1']
    #allocation6 [shape = 'u8[262144]{0}', space=vmem, size = 0x40000, scoped, tag = 'input window, operand 1']
    #allocation7 [shape = 's32[2]{0}', space=sflag, size = 0x8, scoped, tag = 'scoped memory for tpu_custom_call.1']
    #allocation8 [shape = 'u8[16384]{0}', space=vmem, size = 0x4000, scoped, tag = 'input window, operand 2']
    #allocation9 [shape = 'u8[2048]{0}', space=vmem, size = 0x800, scoped, tag = 'input window, operand 3']
    #allocation10 [shape = 's32[2]{0}', space=sflag, size = 0x8, scoped, tag = 'scoped memory for tpu_custom_call.1']
    #allocation11 [shape = 'u8[2048]{0}', space=vmem, size = 0x800, scoped, tag = 'input window, operand 4']
    #allocation12 [shape = 'u8[786432]{0}', space=vmem, size = 0xc0000, scoped, tag = 'input window, operand 5']
    #allocation13 [shape = 's32[2]{0}', space=sflag, size = 0x8, scoped, tag = 'scoped memory for tpu_custom_call.1']
    #allocation14 [shape = 'u8[6144]{0}', space=vmem, size = 0x1800, scoped, tag = 'input window, operand 6']
    #allocation15 [shape = 'u8[262144]{0}', space=vmem, size = 0x40000, scoped, tag = 'input window, operand 7']
    #allocation16 [shape = 's32[2]{0}', space=sflag, size = 0x8, scoped, tag = 'scoped memory for tpu_custom_call.1']
    #allocation17 [shape = 'u8[2048]{0}', space=vmem, size = 0x800, scoped, tag = 'input window, operand 8']
    #allocation18 [shape = 'u8[2048]{0}', space=vmem, size = 0x800, scoped, tag = 'input window, operand 9']
    #allocation19 [shape = 's32[2]{0}', space=sflag, size = 0x8, scoped, tag = 'scoped memory for tpu_custom_call.1']
    #allocation20 [shape = 'u8[2048]{0}', space=vmem, size = 0x800, scoped, tag = 'input window, operand 10']
    #allocation21 [shape = 'u8[524288]{0}', space=vmem, size = 0x80000, scoped, tag = 'input window, operand 11']
    #allocation22 [shape = 's32[2]{0}', space=sflag, size = 0x8, scoped, tag = 'scoped memory for tpu_custom_call.1']
    #allocation23 [shape = 'u8[4096]{0}', space=vmem, size = 0x1000, scoped, tag = 'input window, operand 12']
    #allocation24 [shape = 'u8[524288]{0}', space=vmem, size = 0x80000, scoped, tag = 'input window, operand 13']
    #allocation25 [shape = 's32[2]{0}', space=sflag, size = 0x8, scoped, tag = 'scoped memory for tpu_custom_call.1']
    #allocation26 [shape = 'u8[2048]{0}', space=vmem, size = 0x800, scoped, tag = 'input window, operand 14']
    #allocation27 [shape = 'u8[2048]{0}', space=vmem, size = 0x800, scoped, tag = 'input window, operand 15']
    #allocation28 [shape = 's32[2]{0}', space=sflag, size = 0x8, scoped, tag = 'scoped memory for tpu_custom_call.1']
    #allocation29 [shape = 'u8[2048]{0}', space=vmem, size = 0x800, scoped, tag = 'input window, operand 16']
    #allocation30 [shape = 'u8[131072]{0}', space=vmem, size = 0x20000, scoped, tag = 'input window, operand 17, single buffered']
    #allocation31 [shape = 's32[1]{0}', space=sflag, size = 0x4, scoped, tag = 'scoped memory for tpu_custom_call.1']
    #allocation32 [shape = 'u8[512]{0}', space=vmem, size = 0x400, scoped, tag = 'input window, operand 18, single buffered']
    #allocation33 [shape = 'u8[65536]{0}', space=vmem, size = 0x10000, scoped, tag = 'input window, operand 19, single buffered']
    #allocation34 [shape = 's32[1]{0}', space=sflag, size = 0x4, scoped, tag = 'scoped memory for tpu_custom_call.1']
    #allocation35 [shape = 'u8[512]{0}', space=vmem, size = 0x400, scoped, tag = 'input window, operand 20, single buffered']
    #allocation36 [shape = 'u8[4096]{0}', space=vmem, size = 0x1000, scoped, tag = 'output window, operand 0, single buffered']
    #allocation37 [shape = 'u8[1024]{0}', space=vmem, size = 0x400, scoped, tag = 'output window, operand 1, single buffered']
    #allocation38 [shape = 's32[1]{0}', space=sflag, size = 0x4, scoped, tag = 'scoped memory for tpu_custom_call.1']
    #allocation39 [shape = 'u8[1024]{0}', space=vmem, size = 0x400, scoped, tag = 'output window, operand 2, single buffered']
    %29 = vsyncpa [#allocation4], 0
    %30 = vsyncpa [#allocation7], 0
    %s31 = scalar_lea.sflag [#allocation7], 1
    %32 = vsyncpa %s31, 0
    %33 = vsyncpa [#allocation10], 0
    %s34 = scalar_lea.sflag [#allocation10], 1
    %35 = vsyncpa %s34, 0
    %36 = vsyncpa [#allocation13], 0
    %s37 = scalar_lea.sflag [#allocation13], 1
    %38 = vsyncpa %s37, 0
    %39 = vsyncpa [#allocation16], 0
    %s40 = scalar_lea.sflag [#allocation16], 1
    %41 = vsyncpa %s40, 0
    %42 = vsyncpa [#allocation19], 0
    %s43 = scalar_lea.sflag [#allocation19], 1
    %44 = vsyncpa %s43, 0
    %45 = vsyncpa [#allocation22], 0
    %s46 = scalar_lea.sflag [#allocation22], 1
    %47 = vsyncpa %s46, 0
    %48 = vsyncpa [#allocation25], 0
    %s49 = scalar_lea.sflag [#allocation25], 1
    %50 = vsyncpa %s49, 0
    %51 = vsyncpa [#allocation28], 0
    %s52 = scalar_lea.sflag [#allocation28], 1
    %53 = vsyncpa %s52, 0
    %54 = vsyncpa [#allocation31], 0
    %55 = vsyncpa [#allocation34], 0
    %56 = vsyncpa [#allocation5], 0
    %57 = vsyncpa [#allocation38], 0
    loop: start=0, step=1, limit=6
    $region2: #{tpu_custom_call.1} parent=1 // loop_pre_header
      _
    $region3: #{tpu_custom_call.1} parent=1 // loop_header
      %s59 = sphi 0, %s63
      %p60 = scmp.ge.s32.totalorder %s59, 6
      %s66 = sphi 0, %s78
      %s67 = sphi 0, %s74
      %s68 = sphi 0, %s66
      %s69 = sphi 0, %s67
      %s70 = sphi 0, %s68
      %s71 = sphi 0, %s69
      %s79 = sphi 0, %s79
      %s81 = sphi 0, %s79
      %s82 = sphi 0, %s81
      %s96 = sphi 0, %s82
      %s102 = sphi 0, %s104
      %s105 = sphi 0, %s102
      %s106 = sphi 0, %s105
      %s122 = sphi 0, %s106
      %s128 = sphi 0, %s130
      %s131 = sphi 0, %s128
      %s132 = sphi 0, %s131
      %s148 = sphi 0, %s132
      %s156 = sphi 0, %s158
      %s159 = sphi 0, %s156
      %s160 = sphi 0, %s159
      %s176 = sphi 0, %s160
      %s184 = sphi 0, %s186
      %s187 = sphi 0, %s184
      %s188 = sphi 0, %s187
      %s204 = sphi 0, %s188
      %s212 = sphi 0, %s214
      %s215 = sphi 0, %s212
      %s216 = sphi 0, %s215
      %s232 = sphi 0, %s216
      %s240 = sphi 0, %s242
      %s243 = sphi 0, %s240
      %s244 = sphi 0, %s243
      %s260 = sphi 0, %s244
      %s268 = sphi 0, %s270
      %s271 = sphi 0, %s268
      %s272 = sphi 0, %s271
      %s288 = sphi 0, %s272
      %s296 = sphi 0, %s298
      %s299 = sphi 0, %s296
      %s300 = sphi 0, %s299
      %s316 = sphi 0, %s300
      %s324 = sphi 0, %s326
      %s327 = sphi 0, %s324
      %s328 = sphi 0, %s327
      %s344 = sphi 0, %s328
      %s352 = sphi 0, %s354
      %s355 = sphi 0, %s352
      %s356 = sphi 0, %s355
      %s372 = sphi 0, %s356
      %s380 = sphi 0, %s382
      %s383 = sphi 0, %s380
      %s384 = sphi 0, %s383
      %s400 = sphi 0, %s384
      %s408 = sphi 0, %s410
      %s411 = sphi 0, %s408
      %s412 = sphi 0, %s411
      %s428 = sphi 0, %s412
      %s436 = sphi 0, %s438
      %s439 = sphi 0, %s436
      %s440 = sphi 0, %s439
      %s456 = sphi 0, %s440
      %s464 = sphi 0, %s466
      %s467 = sphi 0, %s464
      %s468 = sphi 0, %s467
      %s484 = sphi 0, %s468
      %s490 = sphi 0, %s492
      %s493 = sphi 0, %s490
      %s494 = sphi 0, %s493
      %s510 = sphi 0, %s494
      %s516 = sphi 0, %s518
      %s519 = sphi 0, %s516
      %s520 = sphi 0, %s519
      %s536 = sphi 0, %s520
      %s540 = sphi 0, %s540
      %s542 = sphi 0, %s540
      %s543 = sphi 0, %s542
      %s557 = sphi 0, %s543
      %s561 = sphi 0, %s561
      %s563 = sphi 0, %s561
      %s564 = sphi 0, %s563
      %s578 = sphi 0, %s564
      %s582 = sphi 0, %s582
      %s584 = sphi 0, %s582
      %s585 = sphi 0, %s584
      %s599 = sphi 0, %s585
      %s603 = sphi 0, %s603
      %s605 = sphi 0, %s603
      %s606 = sphi 0, %s605
      %s620 = sphi 0, %s606
      %s624 = sphi 0, %s624
      %s626 = sphi 0, %s624
      %s627 = sphi 0, %s626
      %s641 = sphi 0, %s627
      %s645 = sphi 0, %s645
      %s647 = sphi 0, %s645
      %s648 = sphi 0, %s647
      %s662 = sphi 0, %s648
      %s666 = sphi 0, %s666
      %s668 = sphi 0, %s666
      %s669 = sphi 0, %s668
      %s683 = sphi 0, %s669
    $region4: #{tpu_custom_call.1} parent=1 // loop_header_branch
      %62 = sbr.rel (%p60) target = $region8
    $region5: #{tpu_custom_call.1} parent=1 // loop_body
      %s64 = ssub.s32 %s59, 1
      %s65 = ssub.s32 %s59, 2
      %s72 = sadd.s32 1, %s67
      %p73 = scmp.ge.s32.totalorder %s72, 2
      %s74 = scalar_select %p73, 0, %s72
      %s75 = sadd.s32 1, %s66
      %s76 = scalar_select %p73, %s75, %s66
      %p77 = scmp.ge.s32.totalorder %s76, 2
      %s78 = scalar_select %p77, 0, %s76
      %s80 = sadd.s32 %s79, 1
      %p83 = scmp.eq.s32.totalorder %s59, 3
      %p84 = scmp.ne.s32.totalorder %s79, %s81
      %p85 = scmp.eq.s32.totalorder %s59, 0
      %p86 = por %p84, %p85
      %p87 = scmp.ne.s32.totalorder %s79, %s81
      %p88 = scmp.eq.s32.totalorder %s64, 3
      %p89 = por %p87, %p88
      %p90 = scmp.ne.s32.totalorder %s81, %s82
      %p91 = scmp.eq.s32.totalorder %s64, 0
      %p92 = por %p90, %p91
      %p93 = scmp.ne.s32.totalorder %s81, %s82
      %p94 = scmp.eq.s32.totalorder %s65, 3
      %p95 = por %p93, %p94
      %p97 = scmp.ne.s32.totalorder %s82, %s96
      %p98 = scmp.eq.s32.totalorder %s65, 0
      %p99 = por %p97, %p98
      %s100 = ssub.s32 %s66, %s78
      %p101 = scmp.eq.s32.totalorder %s100, 0
      %s103 = sadd.s32 %s102, 1
      %s104 = scalar_select %p101, %s102, %s103
      %p107 = pneg %p101
      %p108 = scmp.eq.s32.totalorder %s59, 3
      %p109 = por %p107, %p108
      %p110 = scmp.ne.s32.totalorder %s102, %s105
      %p111 = scmp.eq.s32.totalorder %s59, 0
      %p112 = por %p110, %p111
      %p113 = scmp.ne.s32.totalorder %s102, %s105
      %p114 = scmp.eq.s32.totalorder %s64, 3
      %p115 = por %p113, %p114
      %p116 = scmp.ne.s32.totalorder %s105, %s106
      %p117 = scmp.eq.s32.totalorder %s64, 0
      %p118 = por %p116, %p117
      %p119 = scmp.ne.s32.totalorder %s105, %s106
      %p120 = scmp.eq.s32.totalorder %s65, 3
      %p121 = por %p119, %p120
      %p123 = scmp.ne.s32.totalorder %s106, %s122
      %p124 = scmp.eq.s32.totalorder %s65, 0
      %p125 = por %p123, %p124
      %s126 = ssub.s32 %s66, %s78
      %p127 = scmp.eq.s32.totalorder %s126, 0
      %s129 = sadd.s32 %s128, 1
      %s130 = scalar_select %p127, %s128, %s129
      %p133 = pneg %p127
      %p134 = scmp.eq.s32.totalorder %s59, 3
      %p135 = por %p133, %p134
      %p136 = scmp.ne.s32.totalorder %s128, %s131
      %p137 = scmp.eq.s32.totalorder %s59, 0
      %p138 = por %p136, %p137
      %p139 = scmp.ne.s32.totalorder %s128, %s131
      %p140 = scmp.eq.s32.totalorder %s64, 3
      %p141 = por %p139, %p140
      %p142 = scmp.ne.s32.totalorder %s131, %s132
      %p143 = scmp.eq.s32.totalorder %s64, 0
      %p144 = por %p142, %p143
      %p145 = scmp.ne.s32.totalorder %s131, %s132
      %p146 = scmp.eq.s32.totalorder %s65, 3
      %p147 = por %p145, %p146
      %p149 = scmp.ne.s32.totalorder %s132, %s148
      %p150 = scmp.eq.s32.totalorder %s65, 0
      %p151 = por %p149, %p150
      %s152 = ssub.s32 %s66, %s78
      %s153 = ssub.s32 %s67, %s74
      %s154 = sor.u32 %s152, %s153
      %p155 = scmp.eq.s32.totalorder %s154, 0
      %s157 = sadd.s32 %s156, 1
      %s158 = scalar_select %p155, %s156, %s157
      %p161 = pneg %p155
      %p162 = scmp.eq.s32.totalorder %s59, 3
      %p163 = por %p161, %p162
      %p164 = scmp.ne.s32.totalorder %s156, %s159
      %p165 = scmp.eq.s32.totalorder %s59, 0
      %p166 = por %p164, %p165
      %p167 = scmp.ne.s32.totalorder %s156, %s159
      %p168 = scmp.eq.s32.totalorder %s64, 3
      %p169 = por %p167, %p168
      %p170 = scmp.ne.s32.totalorder %s159, %s160
      %p171 = scmp.eq.s32.totalorder %s64, 0
      %p172 = por %p170, %p171
      %p173 = scmp.ne.s32.totalorder %s159, %s160
      %p174 = scmp.eq.s32.totalorder %s65, 3
      %p175 = por %p173, %p174
      %p177 = scmp.ne.s32.totalorder %s160, %s176
      %p178 = scmp.eq.s32.totalorder %s65, 0
      %p179 = por %p177, %p178
      %s180 = ssub.s32 %s66, %s78
      %s181 = ssub.s32 %s67, %s74
      %s182 = sor.u32 %s180, %s181
      %p183 = scmp.eq.s32.totalorder %s182, 0
      %s185 = sadd.s32 %s184, 1
      %s186 = scalar_select %p183, %s184, %s185
      %p189 = pneg %p183
      %p190 = scmp.eq.s32.totalorder %s59, 3
      %p191 = por %p189, %p190
      %p192 = scmp.ne.s32.totalorder %s184, %s187
      %p193 = scmp.eq.s32.totalorder %s59, 0
      %p194 = por %p192, %p193
      %p195 = scmp.ne.s32.totalorder %s184, %s187
      %p196 = scmp.eq.s32.totalorder %s64, 3
      %p197 = por %p195, %p196
      %p198 = scmp.ne.s32.totalorder %s187, %s188
      %p199 = scmp.eq.s32.totalorder %s64, 0
      %p200 = por %p198, %p199
      %p201 = scmp.ne.s32.totalorder %s187, %s188
      %p202 = scmp.eq.s32.totalorder %s65, 3
      %p203 = por %p201, %p202
      %p205 = scmp.ne.s32.totalorder %s188, %s204
      %p206 = scmp.eq.s32.totalorder %s65, 0
      %p207 = por %p205, %p206
      %s208 = ssub.s32 %s66, %s78
      %s209 = ssub.s32 %s67, %s74
      %s210 = sor.u32 %s208, %s209
      %p211 = scmp.eq.s32.totalorder %s210, 0
      %s213 = sadd.s32 %s212, 1
      %s214 = scalar_select %p211, %s212, %s213
      %p217 = pneg %p211
      %p218 = scmp.eq.s32.totalorder %s59, 3
      %p219 = por %p217, %p218
      %p220 = scmp.ne.s32.totalorder %s212, %s215
      %p221 = scmp.eq.s32.totalorder %s59, 0
      %p222 = por %p220, %p221
      %p223 = scmp.ne.s32.totalorder %s212, %s215
      %p224 = scmp.eq.s32.totalorder %s64, 3
      %p225 = por %p223, %p224
      %p226 = scmp.ne.s32.totalorder %s215, %s216
      %p227 = scmp.eq.s32.totalorder %s64, 0
      %p228 = por %p226, %p227
      %p229 = scmp.ne.s32.totalorder %s215, %s216
      %p230 = scmp.eq.s32.totalorder %s65, 3
      %p231 = por %p229, %p230
      %p233 = scmp.ne.s32.totalorder %s216, %s232
      %p234 = scmp.eq.s32.totalorder %s65, 0
      %p235 = por %p233, %p234
      %s236 = ssub.s32 %s66, %s78
      %s237 = ssub.s32 %s67, %s74
      %s238 = sor.u32 %s236, %s237
      %p239 = scmp.eq.s32.totalorder %s238, 0
      %s241 = sadd.s32 %s240, 1
      %s242 = scalar_select %p239, %s240, %s241
      %p245 = pneg %p239
      %p246 = scmp.eq.s32.totalorder %s59, 3
      %p247 = por %p245, %p246
      %p248 = scmp.ne.s32.totalorder %s240, %s243
      %p249 = scmp.eq.s32.totalorder %s59, 0
      %p250 = por %p248, %p249
      %p251 = scmp.ne.s32.totalorder %s240, %s243
      %p252 = scmp.eq.s32.totalorder %s64, 3
      %p253 = por %p251, %p252
      %p254 = scmp.ne.s32.totalorder %s243, %s244
      %p255 = scmp.eq.s32.totalorder %s64, 0
      %p256 = por %p254, %p255
      %p257 = scmp.ne.s32.totalorder %s243, %s244
      %p258 = scmp.eq.s32.totalorder %s65, 3
      %p259 = por %p257, %p258
      %p261 = scmp.ne.s32.totalorder %s244, %s260
      %p262 = scmp.eq.s32.totalorder %s65, 0
      %p263 = por %p261, %p262
      %s264 = ssub.s32 %s66, %s78
      %s265 = ssub.s32 %s67, %s74
      %s266 = sor.u32 %s264, %s265
      %p267 = scmp.eq.s32.totalorder %s266, 0
      %s269 = sadd.s32 %s268, 1
      %s270 = scalar_select %p267, %s268, %s269
      %p273 = pneg %p267
      %p274 = scmp.eq.s32.totalorder %s59, 3
      %p275 = por %p273, %p274
      %p276 = scmp.ne.s32.totalorder %s268, %s271
      %p277 = scmp.eq.s32.totalorder %s59, 0
      %p278 = por %p276, %p277
      %p279 = scmp.ne.s32.totalorder %s268, %s271
      %p280 = scmp.eq.s32.totalorder %s64, 3
      %p281 = por %p279, %p280
      %p282 = scmp.ne.s32.totalorder %s271, %s272
      %p283 = scmp.eq.s32.totalorder %s64, 0
      %p284 = por %p282, %p283
      %p285 = scmp.ne.s32.totalorder %s271, %s272
      %p286 = scmp.eq.s32.totalorder %s65, 3
      %p287 = por %p285, %p286
      %p289 = scmp.ne.s32.totalorder %s272, %s288
      %p290 = scmp.eq.s32.totalorder %s65, 0
      %p291 = por %p289, %p290
      %s292 = ssub.s32 %s66, %s78
      %s293 = ssub.s32 %s67, %s74
      %s294 = sor.u32 %s292, %s293
      %p295 = scmp.eq.s32.totalorder %s294, 0
      %s297 = sadd.s32 %s296, 1
      %s298 = scalar_select %p295, %s296, %s297
      %p301 = pneg %p295
      %p302 = scmp.eq.s32.totalorder %s59, 3
      %p303 = por %p301, %p302
      %p304 = scmp.ne.s32.totalorder %s296, %s299
      %p305 = scmp.eq.s32.totalorder %s59, 0
      %p306 = por %p304, %p305
      %p307 = scmp.ne.s32.totalorder %s296, %s299
      %p308 = scmp.eq.s32.totalorder %s64, 3
      %p309 = por %p307, %p308
      %p310 = scmp.ne.s32.totalorder %s299, %s300
      %p311 = scmp.eq.s32.totalorder %s64, 0
      %p312 = por %p310, %p311
      %p313 = scmp.ne.s32.totalorder %s299, %s300
      %p314 = scmp.eq.s32.totalorder %s65, 3
      %p315 = por %p313, %p314
      %p317 = scmp.ne.s32.totalorder %s300, %s316
      %p318 = scmp.eq.s32.totalorder %s65, 0
      %p319 = por %p317, %p318
      %s320 = ssub.s32 %s66, %s78
      %s321 = ssub.s32 %s67, %s74
      %s322 = sor.u32 %s320, %s321
      %p323 = scmp.eq.s32.totalorder %s322, 0
      %s325 = sadd.s32 %s324, 1
      %s326 = scalar_select %p323, %s324, %s325
      %p329 = pneg %p323
      %p330 = scmp.eq.s32.totalorder %s59, 3
      %p331 = por %p329, %p330
      %p332 = scmp.ne.s32.totalorder %s324, %s327
      %p333 = scmp.eq.s32.totalorder %s59, 0
      %p334 = por %p332, %p333
      %p335 = scmp.ne.s32.totalorder %s324, %s327
      %p336 = scmp.eq.s32.totalorder %s64, 3
      %p337 = por %p335, %p336
      %p338 = scmp.ne.s32.totalorder %s327, %s328
      %p339 = scmp.eq.s32.totalorder %s64, 0
      %p340 = por %p338, %p339
      %p341 = scmp.ne.s32.totalorder %s327, %s328
      %p342 = scmp.eq.s32.totalorder %s65, 3
      %p343 = por %p341, %p342
      %p345 = scmp.ne.s32.totalorder %s328, %s344
      %p346 = scmp.eq.s32.totalorder %s65, 0
      %p347 = por %p345, %p346
      %s348 = ssub.s32 %s66, %s78
      %s349 = ssub.s32 %s67, %s74
      %s350 = sor.u32 %s348, %s349
      %p351 = scmp.eq.s32.totalorder %s350, 0
      %s353 = sadd.s32 %s352, 1
      %s354 = scalar_select %p351, %s352, %s353
      %p357 = pneg %p351
      %p358 = scmp.eq.s32.totalorder %s59, 3
      %p359 = por %p357, %p358
      %p360 = scmp.ne.s32.totalorder %s352, %s355
      %p361 = scmp.eq.s32.totalorder %s59, 0
      %p362 = por %p360, %p361
      %p363 = scmp.ne.s32.totalorder %s352, %s355
      %p364 = scmp.eq.s32.totalorder %s64, 3
      %p365 = por %p363, %p364
      %p366 = scmp.ne.s32.totalorder %s355, %s356
      %p367 = scmp.eq.s32.totalorder %s64, 0
      %p368 = por %p366, %p367
      %p369 = scmp.ne.s32.totalorder %s355, %s356
      %p370 = scmp.eq.s32.totalorder %s65, 3
      %p371 = por %p369, %p370
      %p373 = scmp.ne.s32.totalorder %s356, %s372
      %p374 = scmp.eq.s32.totalorder %s65, 0
      %p375 = por %p373, %p374
      %s376 = ssub.s32 %s66, %s78
      %s377 = ssub.s32 %s67, %s74
      %s378 = sor.u32 %s376, %s377
      %p379 = scmp.eq.s32.totalorder %s378, 0
      %s381 = sadd.s32 %s380, 1
      %s382 = scalar_select %p379, %s380, %s381
      %p385 = pneg %p379
      %p386 = scmp.eq.s32.totalorder %s59, 3
      %p387 = por %p385, %p386
      %p388 = scmp.ne.s32.totalorder %s380, %s383
      %p389 = scmp.eq.s32.totalorder %s59, 0
      %p390 = por %p388, %p389
      %p391 = scmp.ne.s32.totalorder %s380, %s383
      %p392 = scmp.eq.s32.totalorder %s64, 3
      %p393 = por %p391, %p392
      %p394 = scmp.ne.s32.totalorder %s383, %s384
      %p395 = scmp.eq.s32.totalorder %s64, 0
      %p396 = por %p394, %p395
      %p397 = scmp.ne.s32.totalorder %s383, %s384
      %p398 = scmp.eq.s32.totalorder %s65, 3
      %p399 = por %p397, %p398
      %p401 = scmp.ne.s32.totalorder %s384, %s400
      %p402 = scmp.eq.s32.totalorder %s65, 0
      %p403 = por %p401, %p402
      %s404 = ssub.s32 %s66, %s78
      %s405 = ssub.s32 %s67, %s74
      %s406 = sor.u32 %s404, %s405
      %p407 = scmp.eq.s32.totalorder %s406, 0
      %s409 = sadd.s32 %s408, 1
      %s410 = scalar_select %p407, %s408, %s409
      %p413 = pneg %p407
      %p414 = scmp.eq.s32.totalorder %s59, 3
      %p415 = por %p413, %p414
      %p416 = scmp.ne.s32.totalorder %s408, %s411
      %p417 = scmp.eq.s32.totalorder %s59, 0
      %p418 = por %p416, %p417
      %p419 = scmp.ne.s32.totalorder %s408, %s411
      %p420 = scmp.eq.s32.totalorder %s64, 3
      %p421 = por %p419, %p420
      %p422 = scmp.ne.s32.totalorder %s411, %s412
      %p423 = scmp.eq.s32.totalorder %s64, 0
      %p424 = por %p422, %p423
      %p425 = scmp.ne.s32.totalorder %s411, %s412
      %p426 = scmp.eq.s32.totalorder %s65, 3
      %p427 = por %p425, %p426
      %p429 = scmp.ne.s32.totalorder %s412, %s428
      %p430 = scmp.eq.s32.totalorder %s65, 0
      %p431 = por %p429, %p430
      %s432 = ssub.s32 %s66, %s78
      %s433 = ssub.s32 %s67, %s74
      %s434 = sor.u32 %s432, %s433
      %p435 = scmp.eq.s32.totalorder %s434, 0
      %s437 = sadd.s32 %s436, 1
      %s438 = scalar_select %p435, %s436, %s437
      %p441 = pneg %p435
      %p442 = scmp.eq.s32.totalorder %s59, 3
      %p443 = por %p441, %p442
      %p444 = scmp.ne.s32.totalorder %s436, %s439
      %p445 = scmp.eq.s32.totalorder %s59, 0
      %p446 = por %p444, %p445
      %p447 = scmp.ne.s32.totalorder %s436, %s439
      %p448 = scmp.eq.s32.totalorder %s64, 3
      %p449 = por %p447, %p448
      %p450 = scmp.ne.s32.totalorder %s439, %s440
      %p451 = scmp.eq.s32.totalorder %s64, 0
      %p452 = por %p450, %p451
      %p453 = scmp.ne.s32.totalorder %s439, %s440
      %p454 = scmp.eq.s32.totalorder %s65, 3
      %p455 = por %p453, %p454
      %p457 = scmp.ne.s32.totalorder %s440, %s456
      %p458 = scmp.eq.s32.totalorder %s65, 0
      %p459 = por %p457, %p458
      %s460 = ssub.s32 %s66, %s78
      %s461 = ssub.s32 %s67, %s74
      %s462 = sor.u32 %s460, %s461
      %p463 = scmp.eq.s32.totalorder %s462, 0
      %s465 = sadd.s32 %s464, 1
      %s466 = scalar_select %p463, %s464, %s465
      %p469 = pneg %p463
      %p470 = scmp.eq.s32.totalorder %s59, 3
      %p471 = por %p469, %p470
      %p472 = scmp.ne.s32.totalorder %s464, %s467
      %p473 = scmp.eq.s32.totalorder %s59, 0
      %p474 = por %p472, %p473
      %p475 = scmp.ne.s32.totalorder %s464, %s467
      %p476 = scmp.eq.s32.totalorder %s64, 3
      %p477 = por %p475, %p476
      %p478 = scmp.ne.s32.totalorder %s467, %s468
      %p479 = scmp.eq.s32.totalorder %s64, 0
      %p480 = por %p478, %p479
      %p481 = scmp.ne.s32.totalorder %s467, %s468
      %p482 = scmp.eq.s32.totalorder %s65, 3
      %p483 = por %p481, %p482
      %p485 = scmp.ne.s32.totalorder %s468, %s484
      %p486 = scmp.eq.s32.totalorder %s65, 0
      %p487 = por %p485, %p486
      %s488 = ssub.s32 %s66, %s78
      %p489 = scmp.eq.s32.totalorder %s488, 0
      %s491 = sadd.s32 %s490, 1
      %s492 = scalar_select %p489, %s490, %s491
      %p495 = pneg %p489
      %p496 = scmp.eq.s32.totalorder %s59, 3
      %p497 = por %p495, %p496
      %p498 = scmp.ne.s32.totalorder %s490, %s493
      %p499 = scmp.eq.s32.totalorder %s59, 0
      %p500 = por %p498, %p499
      %p501 = scmp.ne.s32.totalorder %s490, %s493
      %p502 = scmp.eq.s32.totalorder %s64, 3
      %p503 = por %p501, %p502
      %p504 = scmp.ne.s32.totalorder %s493, %s494
      %p505 = scmp.eq.s32.totalorder %s64, 0
      %p506 = por %p504, %p505
      %p507 = scmp.ne.s32.totalorder %s493, %s494
      %p508 = scmp.eq.s32.totalorder %s65, 3
      %p509 = por %p507, %p508
      %p511 = scmp.ne.s32.totalorder %s494, %s510
      %p512 = scmp.eq.s32.totalorder %s65, 0
      %p513 = por %p511, %p512
      %s514 = ssub.s32 %s66, %s78
      %p515 = scmp.eq.s32.totalorder %s514, 0
      %s517 = sadd.s32 %s516, 1
      %s518 = scalar_select %p515, %s516, %s517
      %p521 = pneg %p515
      %p522 = scmp.eq.s32.totalorder %s59, 3
      %p523 = por %p521, %p522
      %p524 = scmp.ne.s32.totalorder %s516, %s519
      %p525 = scmp.eq.s32.totalorder %s59, 0
      %p526 = por %p524, %p525
      %p527 = scmp.ne.s32.totalorder %s516, %s519
      %p528 = scmp.eq.s32.totalorder %s64, 3
      %p529 = por %p527, %p528
      %p530 = scmp.ne.s32.totalorder %s519, %s520
      %p531 = scmp.eq.s32.totalorder %s64, 0
      %p532 = por %p530, %p531
      %p533 = scmp.ne.s32.totalorder %s519, %s520
      %p534 = scmp.eq.s32.totalorder %s65, 3
      %p535 = por %p533, %p534
      %p537 = scmp.ne.s32.totalorder %s520, %s536
      %p538 = scmp.eq.s32.totalorder %s65, 0
      %p539 = por %p537, %p538
      %s541 = sadd.s32 %s540, 1
      %p544 = scmp.eq.s32.totalorder %s59, 3
      %p545 = scmp.ne.s32.totalorder %s540, %s542
      %p546 = scmp.eq.s32.totalorder %s59, 0
      %p547 = por %p545, %p546
      %p548 = scmp.ne.s32.totalorder %s540, %s542
      %p549 = scmp.eq.s32.totalorder %s64, 3
      %p550 = por %p548, %p549
      %p551 = scmp.ne.s32.totalorder %s542, %s543
      %p552 = scmp.eq.s32.totalorder %s64, 0
      %p553 = por %p551, %p552
      %p554 = scmp.ne.s32.totalorder %s542, %s543
      %p555 = scmp.eq.s32.totalorder %s65, 3
      %p556 = por %p554, %p555
      %p558 = scmp.ne.s32.totalorder %s543, %s557
      %p559 = scmp.eq.s32.totalorder %s65, 0
      %p560 = por %p558, %p559
      %s562 = sadd.s32 %s561, 1
      %p565 = scmp.eq.s32.totalorder %s59, 3
      %p566 = scmp.ne.s32.totalorder %s561, %s563
      %p567 = scmp.eq.s32.totalorder %s59, 0
      %p568 = por %p566, %p567
      %p569 = scmp.ne.s32.totalorder %s561, %s563
      %p570 = scmp.eq.s32.totalorder %s64, 3
      %p571 = por %p569, %p570
      %p572 = scmp.ne.s32.totalorder %s563, %s564
      %p573 = scmp.eq.s32.totalorder %s64, 0
      %p574 = por %p572, %p573
      %p575 = scmp.ne.s32.totalorder %s563, %s564
      %p576 = scmp.eq.s32.totalorder %s65, 3
      %p577 = por %p575, %p576
      %p579 = scmp.ne.s32.totalorder %s564, %s578
      %p580 = scmp.eq.s32.totalorder %s65, 0
      %p581 = por %p579, %p580
      %s583 = sadd.s32 %s582, 1
      %p586 = scmp.eq.s32.totalorder %s59, 3
      %p587 = scmp.ne.s32.totalorder %s582, %s584
      %p588 = scmp.eq.s32.totalorder %s59, 0
      %p589 = por %p587, %p588
      %p590 = scmp.ne.s32.totalorder %s582, %s584
      %p591 = scmp.eq.s32.totalorder %s64, 3
      %p592 = por %p590, %p591
      %p593 = scmp.ne.s32.totalorder %s584, %s585
      %p594 = scmp.eq.s32.totalorder %s64, 0
      %p595 = por %p593, %p594
      %p596 = scmp.ne.s32.totalorder %s584, %s585
      %p597 = scmp.eq.s32.totalorder %s65, 3
      %p598 = por %p596, %p597
      %p600 = scmp.ne.s32.totalorder %s585, %s599
      %p601 = scmp.eq.s32.totalorder %s65, 0
      %p602 = por %p600, %p601
      %s604 = sadd.s32 %s603, 1
      %p607 = scmp.eq.s32.totalorder %s59, 3
      %p608 = scmp.ne.s32.totalorder %s603, %s605
      %p609 = scmp.eq.s32.totalorder %s59, 0
      %p610 = por %p608, %p609
      %p611 = scmp.ne.s32.totalorder %s603, %s605
      %p612 = scmp.eq.s32.totalorder %s64, 3
      %p613 = por %p611, %p612
      %p614 = scmp.ne.s32.totalorder %s605, %s606
      %p615 = scmp.eq.s32.totalorder %s64, 0
      %p616 = por %p614, %p615
      %p617 = scmp.ne.s32.totalorder %s605, %s606
      %p618 = scmp.eq.s32.totalorder %s65, 3
      %p619 = por %p617, %p618
      %p621 = scmp.ne.s32.totalorder %s606, %s620
      %p622 = scmp.eq.s32.totalorder %s65, 0
      %p623 = por %p621, %p622
      %s625 = sadd.s32 %s624, 1
      %p628 = scmp.eq.s32.totalorder %s59, 3
      %p629 = scmp.ne.s32.totalorder %s624, %s626
      %p630 = scmp.eq.s32.totalorder %s59, 0
      %p631 = por %p629, %p630
      %p632 = scmp.ne.s32.totalorder %s624, %s626
      %p633 = scmp.eq.s32.totalorder %s64, 3
      %p634 = por %p632, %p633
      %p635 = scmp.ne.s32.totalorder %s626, %s627
      %p636 = scmp.eq.s32.totalorder %s64, 0
      %p637 = por %p635, %p636
      %p638 = scmp.ne.s32.totalorder %s626, %s627
      %p639 = scmp.eq.s32.totalorder %s65, 3
      %p640 = por %p638, %p639
      %p642 = scmp.ne.s32.totalorder %s627, %s641
      %p643 = scmp.eq.s32.totalorder %s65, 0
      %p644 = por %p642, %p643
      %s646 = sadd.s32 %s645, 1
      %p649 = scmp.eq.s32.totalorder %s59, 3
      %p650 = scmp.ne.s32.totalorder %s645, %s647
      %p651 = scmp.eq.s32.totalorder %s59, 0
      %p652 = por %p650, %p651
      %p653 = scmp.ne.s32.totalorder %s645, %s647
      %p654 = scmp.eq.s32.totalorder %s64, 3
      %p655 = por %p653, %p654
      %p656 = scmp.ne.s32.totalorder %s647, %s648
      %p657 = scmp.eq.s32.totalorder %s64, 0
      %p658 = por %p656, %p657
      %p659 = scmp.ne.s32.totalorder %s647, %s648
      %p660 = scmp.eq.s32.totalorder %s65, 3
      %p661 = por %p659, %p660
      %p663 = scmp.ne.s32.totalorder %s648, %s662
      %p664 = scmp.eq.s32.totalorder %s65, 0
      %p665 = por %p663, %p664
      %s667 = sadd.s32 %s666, 1
      %p670 = scmp.eq.s32.totalorder %s59, 3
      %p671 = scmp.ne.s32.totalorder %s666, %s668
      %p672 = scmp.eq.s32.totalorder %s59, 0
      %p673 = por %p671, %p672
      %p674 = scmp.ne.s32.totalorder %s666, %s668
      %p675 = scmp.eq.s32.totalorder %s64, 3
      %p676 = por %p674, %p675
      %p677 = scmp.ne.s32.totalorder %s668, %s669
      %p678 = scmp.eq.s32.totalorder %s64, 0
      %p679 = por %p677, %p678
      %p680 = scmp.ne.s32.totalorder %s668, %s669
      %p681 = scmp.eq.s32.totalorder %s65, 3
      %p682 = por %p680, %p681
      %p684 = scmp.ne.s32.totalorder %s669, %s683
      %p685 = scmp.eq.s32.totalorder %s65, 0
      %p686 = por %p684, %p685
      %p687 = scmp.le.s32.totalorder 1, %s59
      %p688 = scmp.lt.s32.totalorder %s59, 5
      %p689 = pnand %p687, %p688
      %p690 = pneg %p689
      // Predicated region
      $region9: #{tpu_custom_call.1} parent=5 // pred_check
        _
      $region10: #{tpu_custom_call.1} parent=5 // pred_check_branch
        %692 = sbr.rel (%p689) target = $region12
      $region11: #{tpu_custom_call.1} parent=5 // pred_region
        %s693 = ssub.s32 %s59, 1
        // Predicated region
        $region13: #{tpu_custom_call.1} parent=11 // pred_check
          %p694 = pneg %p92
        $region14: #{tpu_custom_call.1} parent=11 // pred_check_branch
          %696 = sbr.rel (%p694) target = $region16
        $region15: #{tpu_custom_call.1} parent=11 // pred_region
          %s698 = ssub.s32 512, 512
          %699 = vsyncadd [#allocation4], %s698
          %s700 = sshll.u32 [#allocation3], 4
          %s701 = int_to_ptr.vmem [resolvable:$true] %s700
          %706 = dma.hbm_to_vmem [thread:$0]  %s0, 512, %s701, [#allocation4], 256, 256, 16
        $region16: #{tpu_custom_call.1} parent=11 // pred_fallthru
          _
        // Predicated region
        $region17: #{tpu_custom_call.1} parent=11 // pred_check
          %p707 = pneg %p553
        $region18: #{tpu_custom_call.1} parent=11 // pred_check_branch
          %709 = sbr.rel (%p707) target = $region20
        $region19: #{tpu_custom_call.1} parent=11 // pred_region
          %s711 = ssub.s32 4096, 4096
          %712 = vsyncadd [#allocation31], %s711
          %s713 = sshll.u32 [#allocation30], 4
          %s714 = int_to_ptr.vmem [resolvable:$true] %s713
          %719 = dma.hbm_to_vmem [thread:$0]  %s17, 4096, %s714, [#allocation31], 64, 64, 4
        $region20: #{tpu_custom_call.1} parent=11 // pred_fallthru
          _
        // Predicated region
        $region21: #{tpu_custom_call.1} parent=11 // pred_check
          %p720 = pneg %p574
        $region22: #{tpu_custom_call.1} parent=11 // pred_check_branch
          %722 = sbr.rel (%p720) target = $region24
        $region23: #{tpu_custom_call.1} parent=11 // pred_region
          %s724 = ssub.s32 16, 16
          %725 = vsyncadd [#allocation31], %s724
          %s727 = sshll.u32 [#allocation32], 4
          %s728 = int_to_ptr.vmem [resolvable:$true] %s727
          %730 = dma.hbm_to_vmem [thread:$0]  %s18, 16, %s728, [#allocation31]
        $region24: #{tpu_custom_call.1} parent=11 // pred_fallthru
          _
        // Predicated region
        $region25: #{tpu_custom_call.1} parent=11 // pred_check
          %p731 = pneg %p595
        $region26: #{tpu_custom_call.1} parent=11 // pred_check_branch
          %733 = sbr.rel (%p731) target = $region28
        $region27: #{tpu_custom_call.1} parent=11 // pred_region
          %s735 = ssub.s32 2048, 2048
          %736 = vsyncadd [#allocation34], %s735
          %s737 = sshll.u32 [#allocation33], 4
          %s738 = int_to_ptr.vmem [resolvable:$true] %s737
          %743 = dma.hbm_to_vmem [thread:$0]  %s19, 2048, %s738, [#allocation34], 64, 64, 4
        $region28: #{tpu_custom_call.1} parent=11 // pred_fallthru
          _
        // Predicated region
        $region29: #{tpu_custom_call.1} parent=11 // pred_check
          %p744 = pneg %p616
        $region30: #{tpu_custom_call.1} parent=11 // pred_check_branch
          %746 = sbr.rel (%p744) target = $region32
        $region31: #{tpu_custom_call.1} parent=11 // pred_region
          %s748 = ssub.s32 16, 16
          %749 = vsyncadd [#allocation34], %s748
          %s751 = sshll.u32 [#allocation35], 4
          %s752 = int_to_ptr.vmem [resolvable:$true] %s751
          %754 = dma.hbm_to_vmem [thread:$0]  %s20, 16, %s752, [#allocation34]
        $region32: #{tpu_custom_call.1} parent=11 // pred_fallthru
          _
      $region12: #{tpu_custom_call.1} parent=5 // pred_fallthru
        _
      %p755 = scmp.lt.s32.totalorder %s59, 4
      // Predicated region
      $region33: #{tpu_custom_call.1} parent=5 // pred_check
        %p756 = pneg %p755
      $region34: #{tpu_custom_call.1} parent=5 // pred_check_branch
        %758 = sbr.rel (%p756) target = $region36
      $region35: #{tpu_custom_call.1} parent=5 // pred_region
        // Predicated region
        $region37: #{tpu_custom_call.1} parent=35 // pred_check
          %p759 = pneg %p112
        $region38: #{tpu_custom_call.1} parent=35 // pred_check_branch
          %761 = sbr.rel (%p759) target = $region40
        $region39: #{tpu_custom_call.1} parent=35 // pred_region
          %s762 = sand.u32 %s59, 1
          %s763 = scalar_lea.sflag [#allocation7], %s762
          %s764 = sand.u32 %s102, 1
          %s765 = smul.addr %s764, 256
          %s766 = scalar_lea.vmem [#allocation6], %s765
          %s768 = ssub.s32 4096, 4096
          %769 = vsyncadd %s763, %s768
          %s770 = smul.addr %s66, 64
          %s771 = smul.addr %s770, 64
          %s772 = scalar_lea.hbm %s1, %s771
          %s773 = sshll.u32 %s766, 4
          %s774 = int_to_ptr.vmem [resolvable:$true] %s773
          %779 = dma.hbm_to_vmem [thread:$0]  %s772, 4096, %s774, %s763, 128, 128, 8
        $region40: #{tpu_custom_call.1} parent=35 // pred_fallthru
          _
        // Predicated region
        $region41: #{tpu_custom_call.1} parent=35 // pred_check
          %p780 = pneg %p138
        $region42: #{tpu_custom_call.1} parent=35 // pred_check_branch
          %782 = sbr.rel (%p780) target = $region44
        $region43: #{tpu_custom_call.1} parent=35 // pred_region
          %s783 = sand.u32 %s59, 1
          %s784 = scalar_lea.sflag [#allocation7], %s783
          %s785 = sand.u32 %s128, 1
          %s786 = smul.addr %s785, 16
          %s787 = scalar_lea.vmem [#allocation8], %s786
          %s789 = ssub.s32 256, 256
          %790 = vsyncadd %s784, %s789
          %s791 = smul.addr %s66, 2
          %s792 = smul.addr %s791, 128
          %s793 = scalar_lea.hbm %s2, %s792
          %s795 = sshll.u32 %s787, 4
          %s796 = int_to_ptr.vmem [resolvable:$true] %s795
          %798 = dma.hbm_to_vmem [thread:$0]  %s793, 256, %s796, %s784
        $region44: #{tpu_custom_call.1} parent=35 // pred_fallthru
          _
        // Predicated region
        $region45: #{tpu_custom_call.1} parent=35 // pred_check
          %p799 = pneg %p166
        $region46: #{tpu_custom_call.1} parent=35 // pred_check_branch
          %801 = sbr.rel (%p799) target = $region48
        $region47: #{tpu_custom_call.1} parent=35 // pred_region
          %s802 = sand.u32 %s59, 1
          %s803 = scalar_lea.sflag [#allocation10], %s802
          %s804 = sand.u32 %s156, 1
          %s805 = smul.addr %s804, 2
          %s806 = scalar_lea.vmem [#allocation9], %s805
          %s808 = ssub.s32 32, 32
          %809 = vsyncadd %s803, %s808
          %s810 = smul.addr %s67, 2
          %s811 = smul.addr %s66, 4
          %s812 = sadd.s32 %s810, %s811
          %s813 = smul.addr %s812, 16
          %s814 = scalar_lea.hbm %s3, %s813
          %s816 = sshll.u32 %s806, 4
          %s817 = int_to_ptr.vmem [resolvable:$true] %s816
          %819 = dma.hbm_to_vmem [thread:$0]  %s814, 32, %s817, %s803
        $region48: #{tpu_custom_call.1} parent=35 // pred_fallthru
          _
        // Predicated region
        $region49: #{tpu_custom_call.1} parent=35 // pred_check
          %p820 = pneg %p194
        $region50: #{tpu_custom_call.1} parent=35 // pred_check_branch
          %822 = sbr.rel (%p820) target = $region52
        $region51: #{tpu_custom_call.1} parent=35 // pred_region
          %s823 = sand.u32 %s59, 1
          %s824 = scalar_lea.sflag [#allocation10], %s823
          %s825 = sand.u32 %s184, 1
          %s826 = smul.addr %s825, 2
          %s827 = scalar_lea.vmem [#allocation11], %s826
          %s829 = ssub.s32 32, 32
          %830 = vsyncadd %s824, %s829
          %s831 = smul.addr %s67, 2
          %s832 = smul.addr %s66, 4
          %s833 = sadd.s32 %s831, %s832
          %s834 = smul.addr %s833, 16
          %s835 = scalar_lea.hbm %s4, %s834
          %s837 = sshll.u32 %s827, 4
          %s838 = int_to_ptr.vmem [resolvable:$true] %s837
          %840 = dma.hbm_to_vmem [thread:$0]  %s835, 32, %s838, %s824
        $region52: #{tpu_custom_call.1} parent=35 // pred_fallthru
          _
        // Predicated region
        $region53: #{tpu_custom_call.1} parent=35 // pred_check
          %p841 = pneg %p222
        $region54: #{tpu_custom_call.1} parent=35 // pred_check_branch
          %843 = sbr.rel (%p841) target = $region56
        $region55: #{tpu_custom_call.1} parent=35 // pred_region
          %s844 = sand.u32 %s59, 1
          %s845 = scalar_lea.sflag [#allocation13], %s844
          %s846 = sand.u32 %s212, 1
          %s847 = smul.addr %s846, 768
          %s848 = scalar_lea.vmem [#allocation12], %s847
          %s850 = ssub.s32 12288, 12288
          %851 = vsyncadd %s845, %s850
          %s852 = smul.addr %s67, 192
          %s853 = smul.addr %s66, 384
          %s854 = sadd.s32 %s852, %s853
          %s855 = smul.addr %s854, 64
          %s856 = scalar_lea.hbm %s5, %s855
          %s857 = sshll.u32 %s848, 4
          %s858 = int_to_ptr.vmem [resolvable:$true] %s857
          %863 = dma.hbm_to_vmem [thread:$0]  %s856, 12288, %s858, %s845, 384, 384, 24
        $region56: #{tpu_custom_call.1} parent=35 // pred_fallthru
          _
        // Predicated region
        $region57: #{tpu_custom_call.1} parent=35 // pred_check
          %p864 = pneg %p250
        $region58: #{tpu_custom_call.1} parent=35 // pred_check_branch
          %866 = sbr.rel (%p864) target = $region60
        $region59: #{tpu_custom_call.1} parent=35 // pred_region
          %s867 = sand.u32 %s59, 1
          %s868 = scalar_lea.sflag [#allocation13], %s867
          %s869 = sand.u32 %s240, 1
          %s870 = smul.addr %s869, 6
          %s871 = scalar_lea.vmem [#allocation14], %s870
          %s873 = ssub.s32 96, 96
          %874 = vsyncadd %s868, %s873
          %s875 = smul.addr %s67, 6
          %s876 = smul.addr %s66, 12
          %s877 = sadd.s32 %s875, %s876
          %s878 = smul.addr %s877, 16
          %s879 = scalar_lea.hbm %s6, %s878
          %s881 = sshll.u32 %s871, 4
          %s882 = int_to_ptr.vmem [resolvable:$true] %s881
          %884 = dma.hbm_to_vmem [thread:$0]  %s879, 96, %s882, %s868
        $region60: #{tpu_custom_call.1} parent=35 // pred_fallthru
          _
        // Predicated region
        $region61: #{tpu_custom_call.1} parent=35 // pred_check
          %p885 = pneg %p278
        $region62: #{tpu_custom_call.1} parent=35 // pred_check_branch
          %887 = sbr.rel (%p885) target = $region64
        $region63: #{tpu_custom_call.1} parent=35 // pred_region
          %s888 = sand.u32 %s59, 1
          %s889 = scalar_lea.sflag [#allocation16], %s888
          %s890 = sand.u32 %s268, 1
          %s891 = smul.addr %s890, 256
          %s892 = scalar_lea.vmem [#allocation15], %s891
          %s894 = ssub.s32 4096, 4096
          %895 = vsyncadd %s889, %s894
          %s896 = smul.addr %s67, 64
          %s897 = smul.addr %s66, 128
          %s898 = sadd.s32 %s896, %s897
          %s899 = smul.addr %s898, 64
          %s900 = scalar_lea.hbm %s7, %s899
          %s901 = sshll.u32 %s892, 4
          %s902 = int_to_ptr.vmem [resolvable:$true] %s901
          %907 = dma.hbm_to_vmem [thread:$0]  %s900, 4096, %s902, %s889, 128, 128, 8
        $region64: #{tpu_custom_call.1} parent=35 // pred_fallthru
          _
        // Predicated region
        $region65: #{tpu_custom_call.1} parent=35 // pred_check
          %p908 = pneg %p306
        $region66: #{tpu_custom_call.1} parent=35 // pred_check_branch
          %910 = sbr.rel (%p908) target = $region68
        $region67: #{tpu_custom_call.1} parent=35 // pred_region
          %s911 = sand.u32 %s59, 1
          %s912 = scalar_lea.sflag [#allocation16], %s911
          %s913 = sand.u32 %s296, 1
          %s914 = smul.addr %s913, 2
          %s915 = scalar_lea.vmem [#allocation17], %s914
          %s917 = ssub.s32 32, 32
          %918 = vsyncadd %s912, %s917
          %s919 = smul.addr %s67, 2
          %s920 = smul.addr %s66, 4
          %s921 = sadd.s32 %s919, %s920
          %s922 = smul.addr %s921, 16
          %s923 = scalar_lea.hbm %s8, %s922
          %s925 = sshll.u32 %s915, 4
          %s926 = int_to_ptr.vmem [resolvable:$true] %s925
          %928 = dma.hbm_to_vmem [thread:$0]  %s923, 32, %s926, %s912
        $region68: #{tpu_custom_call.1} parent=35 // pred_fallthru
          _
        // Predicated region
        $region69: #{tpu_custom_call.1} parent=35 // pred_check
          %p929 = pneg %p334
        $region70: #{tpu_custom_call.1} parent=35 // pred_check_branch
          %931 = sbr.rel (%p929) target = $region72
        $region71: #{tpu_custom_call.1} parent=35 // pred_region
          %s932 = sand.u32 %s59, 1
          %s933 = scalar_lea.sflag [#allocation19], %s932
          %s934 = sand.u32 %s324, 1
          %s935 = smul.addr %s934, 2
          %s936 = scalar_lea.vmem [#allocation18], %s935
          %s938 = ssub.s32 32, 32
          %939 = vsyncadd %s933, %s938
          %s940 = smul.addr %s67, 2
          %s941 = smul.addr %s66, 4
          %s942 = sadd.s32 %s940, %s941
          %s943 = smul.addr %s942, 16
          %s944 = scalar_lea.hbm %s9, %s943
          %s946 = sshll.u32 %s936, 4
          %s947 = int_to_ptr.vmem [resolvable:$true] %s946
          %949 = dma.hbm_to_vmem [thread:$0]  %s944, 32, %s947, %s933
        $region72: #{tpu_custom_call.1} parent=35 // pred_fallthru
          _
        // Predicated region
        $region73: #{tpu_custom_call.1} parent=35 // pred_check
          %p950 = pneg %p362
        $region74: #{tpu_custom_call.1} parent=35 // pred_check_branch
          %952 = sbr.rel (%p950) target = $region76
        $region75: #{tpu_custom_call.1} parent=35 // pred_region
          %s953 = sand.u32 %s59, 1
          %s954 = scalar_lea.sflag [#allocation19], %s953
          %s955 = sand.u32 %s352, 1
          %s956 = smul.addr %s955, 2
          %s957 = scalar_lea.vmem [#allocation20], %s956
          %s959 = ssub.s32 32, 32
          %960 = vsyncadd %s954, %s959
          %s961 = smul.addr %s67, 2
          %s962 = smul.addr %s66, 4
          %s963 = sadd.s32 %s961, %s962
          %s964 = smul.addr %s963, 16
          %s965 = scalar_lea.hbm %s10, %s964
          %s967 = sshll.u32 %s957, 4
          %s968 = int_to_ptr.vmem [resolvable:$true] %s967
          %970 = dma.hbm_to_vmem [thread:$0]  %s965, 32, %s968, %s954
        $region76: #{tpu_custom_call.1} parent=35 // pred_fallthru
          _
        // Predicated region
        $region77: #{tpu_custom_call.1} parent=35 // pred_check
          %p971 = pneg %p390
        $region78: #{tpu_custom_call.1} parent=35 // pred_check_branch
          %973 = sbr.rel (%p971) target = $region80
        $region79: #{tpu_custom_call.1} parent=35 // pred_region
          %s974 = sand.u32 %s59, 1
          %s975 = scalar_lea.sflag [#allocation22], %s974
          %s976 = sand.u32 %s380, 1
          %s977 = smul.addr %s976, 512
          %s978 = scalar_lea.vmem [#allocation21], %s977
          %s980 = ssub.s32 8192, 8192
          %981 = vsyncadd %s975, %s980
          %s982 = smul.addr %s67, 128
          %s983 = smul.addr %s66, 256
          %s984 = sadd.s32 %s982, %s983
          %s985 = smul.addr %s984, 64
          %s986 = scalar_lea.hbm %s11, %s985
          %s987 = sshll.u32 %s978, 4
          %s988 = int_to_ptr.vmem [resolvable:$true] %s987
          %993 = dma.hbm_to_vmem [thread:$0]  %s986, 8192, %s988, %s975, 256, 256, 16
        $region80: #{tpu_custom_call.1} parent=35 // pred_fallthru
          _
        // Predicated region
        $region81: #{tpu_custom_call.1} parent=35 // pred_check
          %p994 = pneg %p418
        $region82: #{tpu_custom_call.1} parent=35 // pred_check_branch
          %996 = sbr.rel (%p994) target = $region84
        $region83: #{tpu_custom_call.1} parent=35 // pred_region
          %s997 = sand.u32 %s59, 1
          %s998 = scalar_lea.sflag [#allocation22], %s997
          %s999 = sand.u32 %s408, 1
          %s1000 = smul.addr %s999, 4
          %s1001 = scalar_lea.vmem [#allocation23], %s1000
          %s1003 = ssub.s32 64, 64
          %1004 = vsyncadd %s998, %s1003
          %s1005 = smul.addr %s67, 4
          %s1006 = smul.addr %s66, 8
          %s1007 = sadd.s32 %s1005, %s1006
          %s1008 = smul.addr %s1007, 16
          %s1009 = scalar_lea.hbm %s12, %s1008
          %s1011 = sshll.u32 %s1001, 4
          %s1012 = int_to_ptr.vmem [resolvable:$true] %s1011
          %1014 = dma.hbm_to_vmem [thread:$0]  %s1009, 64, %s1012, %s998
        $region84: #{tpu_custom_call.1} parent=35 // pred_fallthru
          _
        // Predicated region
        $region85: #{tpu_custom_call.1} parent=35 // pred_check
          %p1015 = pneg %p446
        $region86: #{tpu_custom_call.1} parent=35 // pred_check_branch
          %1017 = sbr.rel (%p1015) target = $region88
        $region87: #{tpu_custom_call.1} parent=35 // pred_region
          %s1018 = sand.u32 %s59, 1
          %s1019 = scalar_lea.sflag [#allocation25], %s1018
          %s1020 = sand.u32 %s436, 1
          %s1021 = smul.addr %s1020, 512
          %s1022 = scalar_lea.vmem [#allocation24], %s1021
          %s1024 = ssub.s32 8192, 8192
          %1025 = vsyncadd %s1019, %s1024
          %s1026 = smul.addr %s67, 128
          %s1027 = smul.addr %s66, 256
          %s1028 = sadd.s32 %s1026, %s1027
          %s1029 = smul.addr %s1028, 64
          %s1030 = scalar_lea.hbm %s13, %s1029
          %s1031 = sshll.u32 %s1022, 4
          %s1032 = int_to_ptr.vmem [resolvable:$true] %s1031
          %1037 = dma.hbm_to_vmem [thread:$0]  %s1030, 8192, %s1032, %s1019, 128, 128, 8
        $region88: #{tpu_custom_call.1} parent=35 // pred_fallthru
          _
        // Predicated region
        $region89: #{tpu_custom_call.1} parent=35 // pred_check
          %p1038 = pneg %p474
        $region90: #{tpu_custom_call.1} parent=35 // pred_check_branch
          %1040 = sbr.rel (%p1038) target = $region92
        $region91: #{tpu_custom_call.1} parent=35 // pred_region
          %s1041 = sand.u32 %s59, 1
          %s1042 = scalar_lea.sflag [#allocation25], %s1041
          %s1043 = sand.u32 %s464, 1
          %s1044 = smul.addr %s1043, 2
          %s1045 = scalar_lea.vmem [#allocation26], %s1044
          %s1047 = ssub.s32 32, 32
          %1048 = vsyncadd %s1042, %s1047
          %s1049 = smul.addr %s67, 2
          %s1050 = smul.addr %s66, 4
          %s1051 = sadd.s32 %s1049, %s1050
          %s1052 = smul.addr %s1051, 16
          %s1053 = scalar_lea.hbm %s14, %s1052
          %s1055 = sshll.u32 %s1045, 4
          %s1056 = int_to_ptr.vmem [resolvable:$true] %s1055
          %1058 = dma.hbm_to_vmem [thread:$0]  %s1053, 32, %s1056, %s1042
        $region92: #{tpu_custom_call.1} parent=35 // pred_fallthru
          _
        // Predicated region
        $region93: #{tpu_custom_call.1} parent=35 // pred_check
          %p1059 = pneg %p500
        $region94: #{tpu_custom_call.1} parent=35 // pred_check_branch
          %1061 = sbr.rel (%p1059) target = $region96
        $region95: #{tpu_custom_call.1} parent=35 // pred_region
          %s1062 = sand.u32 %s59, 1
          %s1063 = scalar_lea.sflag [#allocation28], %s1062
          %s1064 = sand.u32 %s490, 1
          %s1065 = smul.addr %s1064, 2
          %s1066 = scalar_lea.vmem [#allocation27], %s1065
          %s1068 = ssub.s32 32, 32
          %1069 = vsyncadd %s1063, %s1068
          %s1070 = smul.addr %s66, 2
          %s1071 = smul.addr %s1070, 16
          %s1072 = scalar_lea.hbm %s15, %s1071
          %s1074 = sshll.u32 %s1066, 4
          %s1075 = int_to_ptr.vmem [resolvable:$true] %s1074
          %1077 = dma.hbm_to_vmem [thread:$0]  %s1072, 32, %s1075, %s1063
        $region96: #{tpu_custom_call.1} parent=35 // pred_fallthru
          _
        // Predicated region
        $region97: #{tpu_custom_call.1} parent=35 // pred_check
          %p1078 = pneg %p526
        $region98: #{tpu_custom_call.1} parent=35 // pred_check_branch
          %1080 = sbr.rel (%p1078) target = $region100
        $region99: #{tpu_custom_call.1} parent=35 // pred_region
          %s1081 = sand.u32 %s59, 1
          %s1082 = scalar_lea.sflag [#allocation28], %s1081
          %s1083 = sand.u32 %s516, 1
          %s1084 = smul.addr %s1083, 2
          %s1085 = scalar_lea.vmem [#allocation29], %s1084
          %s1087 = ssub.s32 32, 32
          %1088 = vsyncadd %s1082, %s1087
          %s1089 = smul.addr %s66, 2
          %s1090 = smul.addr %s1089, 16
          %s1091 = scalar_lea.hbm %s16, %s1090
          %s1093 = sshll.u32 %s1085, 4
          %s1094 = int_to_ptr.vmem [resolvable:$true] %s1093
          %1096 = dma.hbm_to_vmem [thread:$0]  %s1091, 32, %s1094, %s1082
        $region100: #{tpu_custom_call.1} parent=35 // pred_fallthru
          _
      $region36: #{tpu_custom_call.1} parent=5 // pred_fallthru
        _
      %p1097 = scmp.le.s32.totalorder 1, %s59
      %p1098 = scmp.lt.s32.totalorder %s59, 5
      %p1099 = pnand %p1097, %p1098
      %p1100 = pneg %p1099
      // Predicated region
      $region101: #{tpu_custom_call.1} parent=5 // pred_check
        _
      $region102: #{tpu_custom_call.1} parent=5 // pred_check_branch
        %1102 = sbr.rel (%p1099) target = $region104
      $region103: #{tpu_custom_call.1} parent=5 // pred_region
        %s1103 = ssub.s32 %s59, 1
        // Predicated region
        $region105: #{tpu_custom_call.1} parent=103 // pred_check
          %p1104 = pneg %p92
        $region106: #{tpu_custom_call.1} parent=103 // pred_check_branch
          %1106 = sbr.rel (%p1104) target = $region108
        $region107: #{tpu_custom_call.1} parent=103 // pred_region
          %1107 = dma.done [#allocation4], 512
        $region108: #{tpu_custom_call.1} parent=103 // pred_fallthru
          _
        %s1108 = sand.u32 %s64, 1
        %s1109 = scalar_lea.sflag [#allocation7], %s1108
        %s1110 = sand.u32 %s105, 1
        %s1111 = smul.addr %s1110, 256
        %s1112 = scalar_lea.vmem [#allocation6], %s1111
        // Predicated region
        $region109: #{tpu_custom_call.1} parent=103 // pred_check
          %p1113 = pneg %p118
        $region110: #{tpu_custom_call.1} parent=103 // pred_check_branch
          %1115 = sbr.rel (%p1113) target = $region112
        $region111: #{tpu_custom_call.1} parent=103 // pred_region
          %1116 = dma.done %s1109, 4096
        $region112: #{tpu_custom_call.1} parent=103 // pred_fallthru
          _
        %s1117 = sand.u32 %s64, 1
        %s1118 = scalar_lea.sflag [#allocation7], %s1117
        %s1119 = sand.u32 %s131, 1
        %s1120 = smul.addr %s1119, 16
        %s1121 = scalar_lea.vmem [#allocation8], %s1120
        // Predicated region
        $region113: #{tpu_custom_call.1} parent=103 // pred_check
          %p1122 = pneg %p144
        $region114: #{tpu_custom_call.1} parent=103 // pred_check_branch
          %1124 = sbr.rel (%p1122) target = $region116
        $region115: #{tpu_custom_call.1} parent=103 // pred_region
          %1125 = dma.done %s1118, 256
        $region116: #{tpu_custom_call.1} parent=103 // pred_fallthru
          _
        %s1126 = sand.u32 %s64, 1
        %s1127 = scalar_lea.sflag [#allocation10], %s1126
        %s1128 = sand.u32 %s159, 1
        %s1129 = smul.addr %s1128, 2
        %s1130 = scalar_lea.vmem [#allocation9], %s1129
        // Predicated region
        $region117: #{tpu_custom_call.1} parent=103 // pred_check
          %p1131 = pneg %p172
        $region118: #{tpu_custom_call.1} parent=103 // pred_check_branch
          %1133 = sbr.rel (%p1131) target = $region120
        $region119: #{tpu_custom_call.1} parent=103 // pred_region
          %1134 = dma.done %s1127, 32
        $region120: #{tpu_custom_call.1} parent=103 // pred_fallthru
          _
        %s1135 = sand.u32 %s64, 1
        %s1136 = scalar_lea.sflag [#allocation10], %s1135
        %s1137 = sand.u32 %s187, 1
        %s1138 = smul.addr %s1137, 2
        %s1139 = scalar_lea.vmem [#allocation11], %s1138
        // Predicated region
        $region121: #{tpu_custom_call.1} parent=103 // pred_check
          %p1140 = pneg %p200
        $region122: #{tpu_custom_call.1} parent=103 // pred_check_branch
          %1142 = sbr.rel (%p1140) target = $region124
        $region123: #{tpu_custom_call.1} parent=103 // pred_region
          %1143 = dma.done %s1136, 32
        $region124: #{tpu_custom_call.1} parent=103 // pred_fallthru
          _
        %s1144 = sand.u32 %s64, 1
        %s1145 = scalar_lea.sflag [#allocation13], %s1144
        %s1146 = sand.u32 %s215, 1
        %s1147 = smul.addr %s1146, 768
        %s1148 = scalar_lea.vmem [#allocation12], %s1147
        // Predicated region
        $region125: #{tpu_custom_call.1} parent=103 // pred_check
          %p1149 = pneg %p228
        $region126: #{tpu_custom_call.1} parent=103 // pred_check_branch
          %1151 = sbr.rel (%p1149) target = $region128
        $region127: #{tpu_custom_call.1} parent=103 // pred_region
          %1152 = dma.done %s1145, 12288
        $region128: #{tpu_custom_call.1} parent=103 // pred_fallthru
          _
        %s1153 = sand.u32 %s64, 1
        %s1154 = scalar_lea.sflag [#allocation13], %s1153
        %s1155 = sand.u32 %s243, 1
        %s1156 = smul.addr %s1155, 6
        %s1157 = scalar_lea.vmem [#allocation14], %s1156
        // Predicated region
        $region129: #{tpu_custom_call.1} parent=103 // pred_check
          %p1158 = pneg %p256
        $region130: #{tpu_custom_call.1} parent=103 // pred_check_branch
          %1160 = sbr.rel (%p1158) target = $region132
        $region131: #{tpu_custom_call.1} parent=103 // pred_region
          %1161 = dma.done %s1154, 96
        $region132: #{tpu_custom_call.1} parent=103 // pred_fallthru
          _
        %s1162 = sand.u32 %s64, 1
        %s1163 = scalar_lea.sflag [#allocation16], %s1162
        %s1164 = sand.u32 %s271, 1
        %s1165 = smul.addr %s1164, 256
        %s1166 = scalar_lea.vmem [#allocation15], %s1165
        // Predicated region
        $region133: #{tpu_custom_call.1} parent=103 // pred_check
          %p1167 = pneg %p284
        $region134: #{tpu_custom_call.1} parent=103 // pred_check_branch
          %1169 = sbr.rel (%p1167) target = $region136
        $region135: #{tpu_custom_call.1} parent=103 // pred_region
          %1170 = dma.done %s1163, 4096
        $region136: #{tpu_custom_call.1} parent=103 // pred_fallthru
          _
        %s1171 = sand.u32 %s64, 1
        %s1172 = scalar_lea.sflag [#allocation16], %s1171
        %s1173 = sand.u32 %s299, 1
        %s1174 = smul.addr %s1173, 2
        %s1175 = scalar_lea.vmem [#allocation17], %s1174
        // Predicated region
        $region137: #{tpu_custom_call.1} parent=103 // pred_check
          %p1176 = pneg %p312
        $region138: #{tpu_custom_call.1} parent=103 // pred_check_branch
          %1178 = sbr.rel (%p1176) target = $region140
        $region139: #{tpu_custom_call.1} parent=103 // pred_region
          %1179 = dma.done %s1172, 32
        $region140: #{tpu_custom_call.1} parent=103 // pred_fallthru
          _
        %s1180 = sand.u32 %s64, 1
        %s1181 = scalar_lea.sflag [#allocation19], %s1180
        %s1182 = sand.u32 %s327, 1
        %s1183 = smul.addr %s1182, 2
        %s1184 = scalar_lea.vmem [#allocation18], %s1183
        // Predicated region
        $region141: #{tpu_custom_call.1} parent=103 // pred_check
          %p1185 = pneg %p340
        $region142: #{tpu_custom_call.1} parent=103 // pred_check_branch
          %1187 = sbr.rel (%p1185) target = $region144
        $region143: #{tpu_custom_call.1} parent=103 // pred_region
          %1188 = dma.done %s1181, 32
        $region144: #{tpu_custom_call.1} parent=103 // pred_fallthru
          _
        %s1189 = sand.u32 %s64, 1
        %s1190 = scalar_lea.sflag [#allocation19], %s1189
        %s1191 = sand.u32 %s355, 1
        %s1192 = smul.addr %s1191, 2
        %s1193 = scalar_lea.vmem [#allocation20], %s1192
        // Predicated region
        $region145: #{tpu_custom_call.1} parent=103 // pred_check
          %p1194 = pneg %p368
        $region146: #{tpu_custom_call.1} parent=103 // pred_check_branch
          %1196 = sbr.rel (%p1194) target = $region148
        $region147: #{tpu_custom_call.1} parent=103 // pred_region
          %1197 = dma.done %s1190, 32
        $region148: #{tpu_custom_call.1} parent=103 // pred_fallthru
          _
        %s1198 = sand.u32 %s64, 1
        %s1199 = scalar_lea.sflag [#allocation22], %s1198
        %s1200 = sand.u32 %s383, 1
        %s1201 = smul.addr %s1200, 512
        %s1202 = scalar_lea.vmem [#allocation21], %s1201
        // Predicated region
        $region149: #{tpu_custom_call.1} parent=103 // pred_check
          %p1203 = pneg %p396
        $region150: #{tpu_custom_call.1} parent=103 // pred_check_branch
          %1205 = sbr.rel (%p1203) target = $region152
        $region151: #{tpu_custom_call.1} parent=103 // pred_region
          %1206 = dma.done %s1199, 8192
        $region152: #{tpu_custom_call.1} parent=103 // pred_fallthru
          _
        %s1207 = sand.u32 %s64, 1
        %s1208 = scalar_lea.sflag [#allocation22], %s1207
        %s1209 = sand.u32 %s411, 1
        %s1210 = smul.addr %s1209, 4
        %s1211 = scalar_lea.vmem [#allocation23], %s1210
        // Predicated region
        $region153: #{tpu_custom_call.1} parent=103 // pred_check
          %p1212 = pneg %p424
        $region154: #{tpu_custom_call.1} parent=103 // pred_check_branch
          %1214 = sbr.rel (%p1212) target = $region156
        $region155: #{tpu_custom_call.1} parent=103 // pred_region
          %1215 = dma.done %s1208, 64
        $region156: #{tpu_custom_call.1} parent=103 // pred_fallthru
          _
        %s1216 = sand.u32 %s64, 1
        %s1217 = scalar_lea.sflag [#allocation25], %s1216
        %s1218 = sand.u32 %s439, 1
        %s1219 = smul.addr %s1218, 512
        %s1220 = scalar_lea.vmem [#allocation24], %s1219
        // Predicated region
        $region157: #{tpu_custom_call.1} parent=103 // pred_check
          %p1221 = pneg %p452
        $region158: #{tpu_custom_call.1} parent=103 // pred_check_branch
          %1223 = sbr.rel (%p1221) target = $region160
        $region159: #{tpu_custom_call.1} parent=103 // pred_region
          %1224 = dma.done %s1217, 8192
        $region160: #{tpu_custom_call.1} parent=103 // pred_fallthru
          _
        %s1225 = sand.u32 %s64, 1
        %s1226 = scalar_lea.sflag [#allocation25], %s1225
        %s1227 = sand.u32 %s467, 1
        %s1228 = smul.addr %s1227, 2
        %s1229 = scalar_lea.vmem [#allocation26], %s1228
        // Predicated region
        $region161: #{tpu_custom_call.1} parent=103 // pred_check
          %p1230 = pneg %p480
        $region162: #{tpu_custom_call.1} parent=103 // pred_check_branch
          %1232 = sbr.rel (%p1230) target = $region164
        $region163: #{tpu_custom_call.1} parent=103 // pred_region
          %1233 = dma.done %s1226, 32
        $region164: #{tpu_custom_call.1} parent=103 // pred_fallthru
          _
        %s1234 = sand.u32 %s64, 1
        %s1235 = scalar_lea.sflag [#allocation28], %s1234
        %s1236 = sand.u32 %s493, 1
        %s1237 = smul.addr %s1236, 2
        %s1238 = scalar_lea.vmem [#allocation27], %s1237
        // Predicated region
        $region165: #{tpu_custom_call.1} parent=103 // pred_check
          %p1239 = pneg %p506
        $region166: #{tpu_custom_call.1} parent=103 // pred_check_branch
          %1241 = sbr.rel (%p1239) target = $region168
        $region167: #{tpu_custom_call.1} parent=103 // pred_region
          %1242 = dma.done %s1235, 32
        $region168: #{tpu_custom_call.1} parent=103 // pred_fallthru
          _
        %s1243 = sand.u32 %s64, 1
        %s1244 = scalar_lea.sflag [#allocation28], %s1243
        %s1245 = sand.u32 %s519, 1
        %s1246 = smul.addr %s1245, 2
        %s1247 = scalar_lea.vmem [#allocation29], %s1246
        // Predicated region
        $region169: #{tpu_custom_call.1} parent=103 // pred_check
          %p1248 = pneg %p532
        $region170: #{tpu_custom_call.1} parent=103 // pred_check_branch
          %1250 = sbr.rel (%p1248) target = $region172
        $region171: #{tpu_custom_call.1} parent=103 // pred_region
          %1251 = dma.done %s1244, 32
        $region172: #{tpu_custom_call.1} parent=103 // pred_fallthru
          _
        // Predicated region
        $region173: #{tpu_custom_call.1} parent=103 // pred_check
          %p1252 = pneg %p553
        $region174: #{tpu_custom_call.1} parent=103 // pred_check_branch
          %1254 = sbr.rel (%p1252) target = $region176
        $region175: #{tpu_custom_call.1} parent=103 // pred_region
          %1255 = dma.done [#allocation31], 4096
        $region176: #{tpu_custom_call.1} parent=103 // pred_fallthru
          _
        // Predicated region
        $region177: #{tpu_custom_call.1} parent=103 // pred_check
          %p1256 = pneg %p574
        $region178: #{tpu_custom_call.1} parent=103 // pred_check_branch
          %1258 = sbr.rel (%p1256) target = $region180
        $region179: #{tpu_custom_call.1} parent=103 // pred_region
          %1259 = dma.done [#allocation31], 16
        $region180: #{tpu_custom_call.1} parent=103 // pred_fallthru
          _
        // Predicated region
        $region181: #{tpu_custom_call.1} parent=103 // pred_check
          %p1260 = pneg %p595
        $region182: #{tpu_custom_call.1} parent=103 // pred_check_branch
          %1262 = sbr.rel (%p1260) target = $region184
        $region183: #{tpu_custom_call.1} parent=103 // pred_region
          %1263 = dma.done [#allocation34], 2048
        $region184: #{tpu_custom_call.1} parent=103 // pred_fallthru
          _
        // Predicated region
        $region185: #{tpu_custom_call.1} parent=103 // pred_check
          %p1264 = pneg %p616
        $region186: #{tpu_custom_call.1} parent=103 // pred_check_branch
          %1266 = sbr.rel (%p1264) target = $region188
        $region187: #{tpu_custom_call.1} parent=103 // pred_region
          %1267 = dma.done [#allocation34], 16
        $region188: #{tpu_custom_call.1} parent=103 // pred_fallthru
          _
        %p1268 = pneg %p92
        %p1269 = pneg %p89
        %s1270 = sand.u32 %s64, 1
        %s1271 = scalar_lea.sflag [#allocation7], %s1270
        %s1272 = sand.u32 %s105, 1
        %s1273 = smul.addr %s1272, 256
        %s1274 = scalar_lea.vmem [#allocation6], %s1273
        %p1275 = pneg %p118
        %p1276 = pneg %p115
        %s1277 = sand.u32 %s64, 1
        %s1278 = scalar_lea.sflag [#allocation7], %s1277
        %s1279 = sand.u32 %s131, 1
        %s1280 = smul.addr %s1279, 16
        %s1281 = scalar_lea.vmem [#allocation8], %s1280
        %p1282 = pneg %p144
        %p1283 = pneg %p141
        %s1284 = sand.u32 %s64, 1
        %s1285 = scalar_lea.sflag [#allocation10], %s1284
        %s1286 = sand.u32 %s159, 1
        %s1287 = smul.addr %s1286, 2
        %s1288 = scalar_lea.vmem [#allocation9], %s1287
        %p1289 = pneg %p172
        %p1290 = pneg %p169
        %s1291 = sand.u32 %s64, 1
        %s1292 = scalar_lea.sflag [#allocation10], %s1291
        %s1293 = sand.u32 %s187, 1
        %s1294 = smul.addr %s1293, 2
        %s1295 = scalar_lea.vmem [#allocation11], %s1294
        %p1296 = pneg %p200
        %p1297 = pneg %p197
        %s1298 = sand.u32 %s64, 1
        %s1299 = scalar_lea.sflag [#allocation13], %s1298
        %s1300 = sand.u32 %s215, 1
        %s1301 = smul.addr %s1300, 768
        %s1302 = scalar_lea.vmem [#allocation12], %s1301
        %p1303 = pneg %p228
        %p1304 = pneg %p225
        %s1305 = sand.u32 %s64, 1
        %s1306 = scalar_lea.sflag [#allocation13], %s1305
        %s1307 = sand.u32 %s243, 1
        %s1308 = smul.addr %s1307, 6
        %s1309 = scalar_lea.vmem [#allocation14], %s1308
        %p1310 = pneg %p256
        %p1311 = pneg %p253
        %s1312 = sand.u32 %s64, 1
        %s1313 = scalar_lea.sflag [#allocation16], %s1312
        %s1314 = sand.u32 %s271, 1
        %s1315 = smul.addr %s1314, 256
        %s1316 = scalar_lea.vmem [#allocation15], %s1315
        %p1317 = pneg %p284
        %p1318 = pneg %p281
        %s1319 = sand.u32 %s64, 1
        %s1320 = scalar_lea.sflag [#allocation16], %s1319
        %s1321 = sand.u32 %s299, 1
        %s1322 = smul.addr %s1321, 2
        %s1323 = scalar_lea.vmem [#allocation17], %s1322
        %p1324 = pneg %p312
        %p1325 = pneg %p309
        %s1326 = sand.u32 %s64, 1
        %s1327 = scalar_lea.sflag [#allocation19], %s1326
        %s1328 = sand.u32 %s327, 1
        %s1329 = smul.addr %s1328, 2
        %s1330 = scalar_lea.vmem [#allocation18], %s1329
        %p1331 = pneg %p340
        %p1332 = pneg %p337
        %s1333 = sand.u32 %s64, 1
        %s1334 = scalar_lea.sflag [#allocation19], %s1333
        %s1335 = sand.u32 %s355, 1
        %s1336 = smul.addr %s1335, 2
        %s1337 = scalar_lea.vmem [#allocation20], %s1336
        %p1338 = pneg %p368
        %p1339 = pneg %p365
        %s1340 = sand.u32 %s64, 1
        %s1341 = scalar_lea.sflag [#allocation22], %s1340
        %s1342 = sand.u32 %s383, 1
        %s1343 = smul.addr %s1342, 512
        %s1344 = scalar_lea.vmem [#allocation21], %s1343
        %p1345 = pneg %p396
        %p1346 = pneg %p393
        %s1347 = sand.u32 %s64, 1
        %s1348 = scalar_lea.sflag [#allocation22], %s1347
        %s1349 = sand.u32 %s411, 1
        %s1350 = smul.addr %s1349, 4
        %s1351 = scalar_lea.vmem [#allocation23], %s1350
        %p1352 = pneg %p424
        %p1353 = pneg %p421
        %s1354 = sand.u32 %s64, 1
        %s1355 = scalar_lea.sflag [#allocation25], %s1354
        %s1356 = sand.u32 %s439, 1
        %s1357 = smul.addr %s1356, 512
        %s1358 = scalar_lea.vmem [#allocation24], %s1357
        %p1359 = pneg %p452
        %p1360 = pneg %p449
        %s1361 = sand.u32 %s64, 1
        %s1362 = scalar_lea.sflag [#allocation25], %s1361
        %s1363 = sand.u32 %s467, 1
        %s1364 = smul.addr %s1363, 2
        %s1365 = scalar_lea.vmem [#allocation26], %s1364
        %p1366 = pneg %p480
        %p1367 = pneg %p477
        %s1368 = sand.u32 %s64, 1
        %s1369 = scalar_lea.sflag [#allocation28], %s1368
        %s1370 = sand.u32 %s493, 1
        %s1371 = smul.addr %s1370, 2
        %s1372 = scalar_lea.vmem [#allocation27], %s1371
        %p1373 = pneg %p506
        %p1374 = pneg %p503
        %s1375 = sand.u32 %s64, 1
        %s1376 = scalar_lea.sflag [#allocation28], %s1375
        %s1377 = sand.u32 %s519, 1
        %s1378 = smul.addr %s1377, 2
        %s1379 = scalar_lea.vmem [#allocation29], %s1378
        %p1380 = pneg %p532
        %p1381 = pneg %p529
        %p1382 = pneg %p553
        %p1383 = pneg %p550
        %p1384 = pneg %p574
        %p1385 = pneg %p571
        %p1386 = pneg %p595
        %p1387 = pneg %p592
        %p1388 = pneg %p616
        %p1389 = pneg %p613
        %p1390 = pneg %p637
        %p1391 = pneg %p634
        %p1392 = pneg %p658
        %p1393 = pneg %p655
        %p1394 = pneg %p679
        %p1395 = pneg %p676
        %p1397 = scmp.eq.s32.totalorder %s69, 0
        // Predicated region
        $region189: #{tpu_custom_call.1} parent=103 // pred_check
          %p1398 = pneg %p1397
        $region190: #{tpu_custom_call.1} parent=103 // pred_check_branch
          %1400 = sbr.rel (%p1398) target = $region192
        $region191: #{tpu_custom_call.1} parent=103 // pred_region
          %v1401 = vld [vmem:[#allocation3] sm:$0xff]
          %v1402 = vld [vmem:[#allocation3 + $0x8] sm:$0xff]
          %v1403 = vld [vmem:[#allocation3 + $0x10] sm:$0xff]
          %v1404 = vld [vmem:[#allocation3 + $0x18] sm:$0xff]
          %v1405 = vpack.c.bf16 %v1403, %v1401
          %v1406 = vpack.c.bf16 %v1404, %v1402
          %v1407 = vld [vmem:[%s1112] sm:$0xff]
          %v1408 = vld [vmem:[%s1112 + $0x8] sm:$0xff]
          %v1409 = vld [vmem:[%s1112 + $0x10] sm:$0xff]
          %v1410 = vld [vmem:[%s1112 + $0x18] sm:$0xff]
          %v1411 = vld [vmem:[%s1112 + $0x20] sm:$0xff]
          %v1412 = vld [vmem:[%s1112 + $0x28] sm:$0xff]
          %v1413 = vld [vmem:[%s1112 + $0x30] sm:$0xff]
          %v1414 = vld [vmem:[%s1112 + $0x38] sm:$0xff]
          %v1415 = vld [vmem:[%s1112 + $0x40] sm:$0xff]
          %v1416 = vld [vmem:[%s1112 + $0x48] sm:$0xff]
          %v1417 = vld [vmem:[%s1112 + $0x50] sm:$0xff]
          %v1418 = vld [vmem:[%s1112 + $0x58] sm:$0xff]
          %v1419 = vld [vmem:[%s1112 + $0x60] sm:$0xff]
          %v1420 = vld [vmem:[%s1112 + $0x68] sm:$0xff]
          %v1421 = vld [vmem:[%s1112 + $0x70] sm:$0xff]
          %v1422 = vld [vmem:[%s1112 + $0x78] sm:$0xff]
          %v1423 = vld [vmem:[%s1112 + $0x80] sm:$0xff]
          %v1424 = vld [vmem:[%s1112 + $0x88] sm:$0xff]
          %v1425 = vld [vmem:[%s1112 + $0x90] sm:$0xff]
          %v1426 = vld [vmem:[%s1112 + $0x98] sm:$0xff]
          %v1427 = vld [vmem:[%s1112 + $0xa0] sm:$0xff]
          %v1428 = vld [vmem:[%s1112 + $0xa8] sm:$0xff]
          %v1429 = vld [vmem:[%s1112 + $0xb0] sm:$0xff]
          %v1430 = vld [vmem:[%s1112 + $0xb8] sm:$0xff]
          %v1431 = vld [vmem:[%s1112 + $0xc0] sm:$0xff]
          %v1432 = vld [vmem:[%s1112 + $0xc8] sm:$0xff]
          %v1433 = vld [vmem:[%s1112 + $0xd0] sm:$0xff]
          %v1434 = vld [vmem:[%s1112 + $0xd8] sm:$0xff]
          %v1435 = vld [vmem:[%s1112 + $0xe0] sm:$0xff]
          %v1436 = vld [vmem:[%s1112 + $0xe8] sm:$0xff]
          %v1437 = vld [vmem:[%s1112 + $0xf0] sm:$0xff]
          %v1438 = vld [vmem:[%s1112 + $0xf8] sm:$0xff]
          %v1471 = vunpack.c.l.b16 %v1407
          %v1472 = vunpack.c.h.b16 %v1407
          %v1473 = vunpack.c.l.b16 %v1408
          %v1474 = vunpack.c.h.b16 %v1408
          %v1475 = vunpack.c.l.b16 %v1409
          %v1476 = vunpack.c.h.b16 %v1409
          %v1477 = vunpack.c.l.b16 %v1410
          %v1478 = vunpack.c.h.b16 %v1410
          %v1479 = vunpack.c.l.b16 %v1411
          %v1480 = vunpack.c.h.b16 %v1411
          %v1481 = vunpack.c.l.b16 %v1412
          %v1482 = vunpack.c.h.b16 %v1412
          %v1483 = vunpack.c.l.b16 %v1413
          %v1484 = vunpack.c.h.b16 %v1413
          %v1485 = vunpack.c.l.b16 %v1414
          %v1486 = vunpack.c.h.b16 %v1414
          %v1487 = vunpack.c.l.b16 %v1415
          %v1488 = vunpack.c.h.b16 %v1415
          %v1489 = vunpack.c.l.b16 %v1416
          %v1490 = vunpack.c.h.b16 %v1416
          %v1491 = vunpack.c.l.b16 %v1417
          %v1492 = vunpack.c.h.b16 %v1417
          %v1493 = vunpack.c.l.b16 %v1418
          %v1494 = vunpack.c.h.b16 %v1418
          %v1495 = vunpack.c.l.b16 %v1419
          %v1496 = vunpack.c.h.b16 %v1419
          %v1497 = vunpack.c.l.b16 %v1420
          %v1498 = vunpack.c.h.b16 %v1420
          %v1499 = vunpack.c.l.b16 %v1421
          %v1500 = vunpack.c.h.b16 %v1421
          %v1501 = vunpack.c.l.b16 %v1422
          %v1502 = vunpack.c.h.b16 %v1422
          %v1503 = vunpack.c.l.b16 %v1423
          %v1504 = vunpack.c.h.b16 %v1423
          %v1505 = vunpack.c.l.b16 %v1424
          %v1506 = vunpack.c.h.b16 %v1424
          %v1507 = vunpack.c.l.b16 %v1425
          %v1508 = vunpack.c.h.b16 %v1425
          %v1509 = vunpack.c.l.b16 %v1426
          %v1510 = vunpack.c.h.b16 %v1426
          %v1511 = vunpack.c.l.b16 %v1427
          %v1512 = vunpack.c.h.b16 %v1427
          %v1513 = vunpack.c.l.b16 %v1428
          %v1514 = vunpack.c.h.b16 %v1428
          %v1515 = vunpack.c.l.b16 %v1429
          %v1516 = vunpack.c.h.b16 %v1429
          %v1517 = vunpack.c.l.b16 %v1430
          %v1518 = vunpack.c.h.b16 %v1430
          %v1519 = vunpack.c.l.b16 %v1431
          %v1520 = vunpack.c.h.b16 %v1431
          %v1521 = vunpack.c.l.b16 %v1432
          %v1522 = vunpack.c.h.b16 %v1432
          %v1523 = vunpack.c.l.b16 %v1433
          %v1524 = vunpack.c.h.b16 %v1433
          %v1525 = vunpack.c.l.b16 %v1434
          %v1526 = vunpack.c.h.b16 %v1434
          %v1527 = vunpack.c.l.b16 %v1435
          %v1528 = vunpack.c.h.b16 %v1435
          %v1529 = vunpack.c.l.b16 %v1436
          %v1530 = vunpack.c.h.b16 %v1436
          %v1531 = vunpack.c.l.b16 %v1437
          %v1532 = vunpack.c.h.b16 %v1437
          %v1533 = vunpack.c.l.b16 %v1438
          %v1534 = vunpack.c.h.b16 %v1438
          %v1535 = vpack.c.b16 %v1473, %v1471
          %v1536 = vpack.c.b16 %v1474, %v1472
          %v1537 = vpack.c.b16 %v1477, %v1475
          %v1538 = vpack.c.b16 %v1478, %v1476
          %v1539 = vpack.c.b16 %v1481, %v1479
          %v1540 = vpack.c.b16 %v1482, %v1480
          %v1541 = vpack.c.b16 %v1485, %v1483
          %v1542 = vpack.c.b16 %v1486, %v1484
          %v1543 = vpack.c.b16 %v1489, %v1487
          %v1544 = vpack.c.b16 %v1490, %v1488
          %v1545 = vpack.c.b16 %v1493, %v1491
          %v1546 = vpack.c.b16 %v1494, %v1492
          %v1547 = vpack.c.b16 %v1497, %v1495
          %v1548 = vpack.c.b16 %v1498, %v1496
          %v1549 = vpack.c.b16 %v1501, %v1499
          %v1550 = vpack.c.b16 %v1502, %v1500
          %v1551 = vpack.c.b16 %v1505, %v1503
          %v1552 = vpack.c.b16 %v1506, %v1504
          %v1553 = vpack.c.b16 %v1509, %v1507
          %v1554 = vpack.c.b16 %v1510, %v1508
          %v1555 = vpack.c.b16 %v1513, %v1511
          %v1556 = vpack.c.b16 %v1514, %v1512
          %v1557 = vpack.c.b16 %v1517, %v1515
          %v1558 = vpack.c.b16 %v1518, %v1516
          %v1559 = vpack.c.b16 %v1521, %v1519
          %v1560 = vpack.c.b16 %v1522, %v1520
          %v1561 = vpack.c.b16 %v1525, %v1523
          %v1562 = vpack.c.b16 %v1526, %v1524
          %v1563 = vpack.c.b16 %v1529, %v1527
          %v1564 = vpack.c.b16 %v1530, %v1528
          %v1565 = vpack.c.b16 %v1533, %v1531
          %v1566 = vpack.c.b16 %v1534, %v1532
          %1599 = vmatprep.subr.bf16.mxu0 %v1550
          %1600 = vmatpush1.bf16.msra.mxu0 %v1549
          %1601 = vmatprep.subr.bf16.mxu0 %v1548
          %1602 = vmatpush1.bf16.msra.mxu0 %v1547
          %1603 = vmatprep.subr.bf16.mxu0 %v1546
          %1604 = vmatpush1.bf16.msra.mxu0 %v1545
          %1605 = vmatprep.subr.bf16.mxu0 %v1544
          %1606 = vmatpush1.bf16.msra.mxu0 %v1543
          %1607 = vmatprep.subr.bf16.mxu0 %v1542
          %1608 = vmatpush1.bf16.msra.mxu0 %v1541
          %1609 = vmatprep.subr.bf16.mxu0 %v1540
          %1610 = vmatpush1.bf16.msra.mxu0 %v1539
          %1611 = vmatprep.subr.bf16.mxu0 %v1538
          %1612 = vmatpush1.bf16.msra.mxu0 %v1537
          %1613 = vmatprep.subr.bf16.mxu0 %v1536
          %1614 = vmatpush1.bf16.msra.mxu0 %v1535
          %1615 = vmatprep.subr.bf16.mxu0 %v1566
          %1616 = vmatpush2.bf16.msra.mxu0 %v1565
          %1617 = vmatprep.subr.bf16.mxu0 %v1564
          %1618 = vmatpush2.bf16.msra.mxu0 %v1563
          %1619 = vmatprep.subr.bf16.mxu0 %v1562
          %1620 = vmatpush2.bf16.msra.mxu0 %v1561
          %1621 = vmatprep.subr.bf16.mxu0 %v1560
          %1622 = vmatpush2.bf16.msra.mxu0 %v1559
          %1623 = vmatprep.subr.bf16.mxu0 %v1558
          %1624 = vmatpush2.bf16.msra.mxu0 %v1557
          %1625 = vmatprep.subr.bf16.mxu0 %v1556
          %1626 = vmatpush2.bf16.msra.mxu0 %v1555
          %1627 = vmatprep.subr.bf16.mxu0 %v1554
          %1628 = vmatpush2.bf16.msra.mxu0 %v1553
          %1629 = vmatprep.subr.bf16.mxu0 %v1552
          %1630 = vmatpush2.bf16.msra.mxu0 %v1551
          %1631 = vmatprep.mubr.bf16.mxu0 %v1406
          %1632 = vmatmul.mubr.bf16.gmra.mxu0 %v1405
          %v1633 = vpop.f32.mrf.mxu0
          %v1634 = vadd.f32 0.0, %v1633
          %v1635 = vpop.f32.mrf.mxu0
          %v1636 = vadd.f32 0.0, %v1635
          %v1637 = vpop.f32.mrf.mxu0
          %v1638 = vadd.f32 0.0, %v1637
          %v1639 = vpop.f32.mrf.mxu0
          %v1640 = vadd.f32 0.0, %v1639
          %1641 = vdwg.mxu0
          %v1642 = vld [vmem:[%s1121] sm:$0xff]
          %v1643 = vld [vmem:[%s1121 + $0x8] sm:$0xff]
          %v1644 = vadd.f32 %v1634, %v1642
          %v1645 = vadd.f32 %v1636, %v1643
          %v1646 = vadd.f32 %v1638, %v1642
          %v1647 = vadd.f32 %v1640, %v1643
          %1648 = vst [vmem:[#allocation2] sm:$0xff] %v1644
          %1649 = vst [vmem:[#allocation2 + $0x8] sm:$0xff] %v1645
          %1650 = vst [vmem:[#allocation2 + $0x10] sm:$0xff] %v1646
          %1651 = vst [vmem:[#allocation2 + $0x18] sm:$0xff] %v1647
        $region192: #{tpu_custom_call.1} parent=103 // pred_fallthru
          _
        %v1652 = vld [vmem:[#allocation2] sm:$0xff]
        %v1653 = vld [vmem:[#allocation2 + $0x8] sm:$0xff]
        %v1654 = vld [vmem:[#allocation2 + $0x10] sm:$0xff]
        %v1655 = vld [vmem:[#allocation2 + $0x18] sm:$0xff]
        %v1656 = vld [vmem:[%s1130] sm:$0x3]
        %v1657 = vld [vmem:[%s1139] sm:$0x3]
        %v1658 = vadd.f32 %v1652, %v1653
        %1659 = vadd.xlane.f32.xlu0 %v1658
        %v1660 = vpop.xlane.xlu0 %1659
        %v1661 = vadd.f32 %v1654, %v1655
        %1662 = vadd.xlane.f32.xlu0 %v1661
        %v1663 = vpop.xlane.xlu0 %1662
        %v1664 = vrcp.pop 256.0
        %v1665 = vmul.f32 %v1660, %v1664
        %v1666 = vmul.f32 %v1663, %v1664
        %v1667 = vsub.f32 %v1652, %v1665
        %v1668 = vsub.f32 %v1653, %v1665
        %v1669 = vsub.f32 %v1654, %v1666
        %v1670 = vsub.f32 %v1655, %v1666
        %v1671 = vmul.f32 %v1667, %v1667
        %v1672 = vmul.f32 %v1668, %v1668
        %v1673 = vmul.f32 %v1669, %v1669
        %v1674 = vmul.f32 %v1670, %v1670
        %v1675 = vadd.f32 %v1671, %v1672
        %1676 = vadd.xlane.f32.xlu0 %v1675
        %v1677 = vpop.xlane.xlu0 %1676
        %v1678 = vadd.f32 %v1673, %v1674
        %1679 = vadd.xlane.f32.xlu0 %v1678
        %v1680 = vpop.xlane.xlu0 %1679
        %v1681 = vmul.f32 %v1677, %v1664
        %v1682 = vmul.f32 %v1680, %v1664
        %v1683 = vadd.f32 %v1681, 1e-06
        %v1684 = vadd.f32 %v1682, 1e-06
        %v1685 = vrsqrt.pop %v1683
        %v1686 = vrsqrt.pop %v1684
        %v1687 = vmul.f32 %v1667, %v1685
        %v1688 = vmul.f32 %v1668, %v1685
        %v1689 = vmul.f32 %v1669, %v1686
        %v1690 = vmul.f32 %v1670, %v1686
        %v1692 = vlaneseq
        %v1693 = vshrl.u32 %v1692, 7
        %v1694 = vsub.s32 0, %v1693
        %v1695 = vrot.slane %v1656, %v1694
        %v1696 = vlaneseq
        %v1697 = vshrl.u32 %v1696, 7
        %v1698 = vsub.s32 1, %v1697
        %v1699 = vrot.slane %v1656, %v1698
        %v1702 = vmul.f32 %v1687, %v1695
        %v1703 = vmul.f32 %v1688, %v1699
        %v1704 = vmul.f32 %v1689, %v1695
        %v1705 = vmul.f32 %v1690, %v1699
        %v1707 = vlaneseq
        %v1708 = vshrl.u32 %v1707, 7
        %v1709 = vsub.s32 0, %v1708
        %v1710 = vrot.slane %v1657, %v1709
        %v1711 = vlaneseq
        %v1712 = vshrl.u32 %v1711, 7
        %v1713 = vsub.s32 1, %v1712
        %v1714 = vrot.slane %v1657, %v1713
        %v1717 = vadd.f32 %v1702, %v1710
        %v1718 = vadd.f32 %v1703, %v1714
        %v1719 = vadd.f32 %v1704, %v1710
        %v1720 = vadd.f32 %v1705, %v1714
        %v1721 = vpack.c.bf16 %v1719, %v1717
        %v1722 = vpack.c.bf16 %v1720, %v1718
        %v1723 = vld [vmem:[%s1148] sm:$0xff]
        %v1724 = vld [vmem:[%s1148 + $0x8] sm:$0xff]
        %v1725 = vld [vmem:[%s1148 + $0x10] sm:$0xff]
        %v1726 = vld [vmem:[%s1148 + $0x18] sm:$0xff]
        %v1727 = vld [vmem:[%s1148 + $0x20] sm:$0xff]
        %v1728 = vld [vmem:[%s1148 + $0x28] sm:$0xff]
        %v1729 = vld [vmem:[%s1148 + $0x30] sm:$0xff]
        %v1730 = vld [vmem:[%s1148 + $0x38] sm:$0xff]
        %v1731 = vld [vmem:[%s1148 + $0x40] sm:$0xff]
        %v1732 = vld [vmem:[%s1148 + $0x48] sm:$0xff]
        %v1733 = vld [vmem:[%s1148 + $0x50] sm:$0xff]
        %v1734 = vld [vmem:[%s1148 + $0x58] sm:$0xff]
        %v1735 = vld [vmem:[%s1148 + $0x60] sm:$0xff]
        %v1736 = vld [vmem:[%s1148 + $0x68] sm:$0xff]
        %v1737 = vld [vmem:[%s1148 + $0x70] sm:$0xff]
        %v1738 = vld [vmem:[%s1148 + $0x78] sm:$0xff]
        %v1739 = vld [vmem:[%s1148 + $0x80] sm:$0xff]
        %v1740 = vld [vmem:[%s1148 + $0x88] sm:$0xff]
        %v1741 = vld [vmem:[%s1148 + $0x90] sm:$0xff]
        %v1742 = vld [vmem:[%s1148 + $0x98] sm:$0xff]
        %v1743 = vld [vmem:[%s1148 + $0xa0] sm:$0xff]
        %v1744 = vld [vmem:[%s1148 + $0xa8] sm:$0xff]
        %v1745 = vld [vmem:[%s1148 + $0xb0] sm:$0xff]
        %v1746 = vld [vmem:[%s1148 + $0xb8] sm:$0xff]
        %v1747 = vld [vmem:[%s1148 + $0xc0] sm:$0xff]
        %v1748 = vld [vmem:[%s1148 + $0xc8] sm:$0xff]
        %v1749 = vld [vmem:[%s1148 + $0xd0] sm:$0xff]
        %v1750 = vld [vmem:[%s1148 + $0xd8] sm:$0xff]
        %v1751 = vld [vmem:[%s1148 + $0xe0] sm:$0xff]
        %v1752 = vld [vmem:[%s1148 + $0xe8] sm:$0xff]
        %v1753 = vld [vmem:[%s1148 + $0xf0] sm:$0xff]
        %v1754 = vld [vmem:[%s1148 + $0xf8] sm:$0xff]
        %v1755 = vld [vmem:[%s1148 + $0x100] sm:$0xff]
        %v1756 = vld [vmem:[%s1148 + $0x108] sm:$0xff]
        %v1757 = vld [vmem:[%s1148 + $0x110] sm:$0xff]
        %v1758 = vld [vmem:[%s1148 + $0x118] sm:$0xff]
        %v1759 = vld [vmem:[%s1148 + $0x120] sm:$0xff]
        %v1760 = vld [vmem:[%s1148 + $0x128] sm:$0xff]
        %v1761 = vld [vmem:[%s1148 + $0x130] sm:$0xff]
        %v1762 = vld [vmem:[%s1148 + $0x138] sm:$0xff]
        %v1763 = vld [vmem:[%s1148 + $0x140] sm:$0xff]
        %v1764 = vld [vmem:[%s1148 + $0x148] sm:$0xff]
        %v1765 = vld [vmem:[%s1148 + $0x150] sm:$0xff]
        %v1766 = vld [vmem:[%s1148 + $0x158] sm:$0xff]
        %v1767 = vld [vmem:[%s1148 + $0x160] sm:$0xff]
        %v1768 = vld [vmem:[%s1148 + $0x168] sm:$0xff]
        %v1769 = vld [vmem:[%s1148 + $0x170] sm:$0xff]
        %v1770 = vld [vmem:[%s1148 + $0x178] sm:$0xff]
        %v1771 = vld [vmem:[%s1148 + $0x180] sm:$0xff]
        %v1772 = vld [vmem:[%s1148 + $0x188] sm:$0xff]
        %v1773 = vld [vmem:[%s1148 + $0x190] sm:$0xff]
        %v1774 = vld [vmem:[%s1148 + $0x198] sm:$0xff]
        %v1775 = vld [vmem:[%s1148 + $0x1a0] sm:$0xff]
        %v1776 = vld [vmem:[%s1148 + $0x1a8] sm:$0xff]
        %v1777 = vld [vmem:[%s1148 + $0x1b0] sm:$0xff]
        %v1778 = vld [vmem:[%s1148 + $0x1b8] sm:$0xff]
        %v1779 = vld [vmem:[%s1148 + $0x1c0] sm:$0xff]
        %v1780 = vld [vmem:[%s1148 + $0x1c8] sm:$0xff]
        %v1781 = vld [vmem:[%s1148 + $0x1d0] sm:$0xff]
        %v1782 = vld [vmem:[%s1148 + $0x1d8] sm:$0xff]
        %v1783 = vld [vmem:[%s1148 + $0x1e0] sm:$0xff]
        %v1784 = vld [vmem:[%s1148 + $0x1e8] sm:$0xff]
        %v1785 = vld [vmem:[%s1148 + $0x1f0] sm:$0xff]
        %v1786 = vld [vmem:[%s1148 + $0x1f8] sm:$0xff]
        %v1787 = vld [vmem:[%s1148 + $0x200] sm:$0xff]
        %v1788 = vld [vmem:[%s1148 + $0x208] sm:$0xff]
        %v1789 = vld [vmem:[%s1148 + $0x210] sm:$0xff]
        %v1790 = vld [vmem:[%s1148 + $0x218] sm:$0xff]
        %v1791 = vld [vmem:[%s1148 + $0x220] sm:$0xff]
        %v1792 = vld [vmem:[%s1148 + $0x228] sm:$0xff]
        %v1793 = vld [vmem:[%s1148 + $0x230] sm:$0xff]
        %v1794 = vld [vmem:[%s1148 + $0x238] sm:$0xff]
        %v1795 = vld [vmem:[%s1148 + $0x240] sm:$0xff]
        %v1796 = vld [vmem:[%s1148 + $0x248] sm:$0xff]
        %v1797 = vld [vmem:[%s1148 + $0x250] sm:$0xff]
        %v1798 = vld [vmem:[%s1148 + $0x258] sm:$0xff]
        %v1799 = vld [vmem:[%s1148 + $0x260] sm:$0xff]
        %v1800 = vld [vmem:[%s1148 + $0x268] sm:$0xff]
        %v1801 = vld [vmem:[%s1148 + $0x270] sm:$0xff]
        %v1802 = vld [vmem:[%s1148 + $0x278] sm:$0xff]
        %v1803 = vld [vmem:[%s1148 + $0x280] sm:$0xff]
        %v1804 = vld [vmem:[%s1148 + $0x288] sm:$0xff]
        %v1805 = vld [vmem:[%s1148 + $0x290] sm:$0xff]
        %v1806 = vld [vmem:[%s1148 + $0x298] sm:$0xff]
        %v1807 = vld [vmem:[%s1148 + $0x2a0] sm:$0xff]
        %v1808 = vld [vmem:[%s1148 + $0x2a8] sm:$0xff]
        %v1809 = vld [vmem:[%s1148 + $0x2b0] sm:$0xff]
        %v1810 = vld [vmem:[%s1148 + $0x2b8] sm:$0xff]
        %v1811 = vld [vmem:[%s1148 + $0x2c0] sm:$0xff]
        %v1812 = vld [vmem:[%s1148 + $0x2c8] sm:$0xff]
        %v1813 = vld [vmem:[%s1148 + $0x2d0] sm:$0xff]
        %v1814 = vld [vmem:[%s1148 + $0x2d8] sm:$0xff]
        %v1815 = vld [vmem:[%s1148 + $0x2e0] sm:$0xff]
        %v1816 = vld [vmem:[%s1148 + $0x2e8] sm:$0xff]
        %v1817 = vld [vmem:[%s1148 + $0x2f0] sm:$0xff]
        %v1818 = vld [vmem:[%s1148 + $0x2f8] sm:$0xff]
        %v1819 = vld [vmem:[%s1157] sm:$0x3f]
        %v1821 = vlaneseq
        %v1822 = vshrl.u32 %v1821, 7
        %v1823 = vsub.s32 0, %v1822
        %v1824 = vrot.slane %v1819, %v1823
        %v1825 = vlaneseq
        %v1826 = vshrl.u32 %v1825, 7
        %v1827 = vsub.s32 1, %v1826
        %v1828 = vrot.slane %v1819, %v1827
        %v1829 = vlaneseq
        %v1830 = vshrl.u32 %v1829, 7
        %v1831 = vsub.s32 2, %v1830
        %v1832 = vrot.slane %v1819, %v1831
        %v1833 = vlaneseq
        %v1834 = vshrl.u32 %v1833, 7
        %v1835 = vsub.s32 3, %v1834
        %v1836 = vrot.slane %v1819, %v1835
        %v1837 = vlaneseq
        %v1838 = vshrl.u32 %v1837, 7
        %v1839 = vsub.s32 4, %v1838
        %v1840 = vrot.slane %v1819, %v1839
        %v1841 = vlaneseq
        %v1842 = vshrl.u32 %v1841, 7
        %v1843 = vsub.s32 5, %v1842
        %v1844 = vrot.slane %v1819, %v1843
        %v1947 = vunpack.c.l.b16 %v1723
        %v1948 = vunpack.c.h.b16 %v1723
        %v1949 = vunpack.c.l.b16 %v1724
        %v1950 = vunpack.c.h.b16 %v1724
        %v1951 = vunpack.c.l.b16 %v1725
        %v1952 = vunpack.c.h.b16 %v1725
        %v1953 = vunpack.c.l.b16 %v1726
        %v1954 = vunpack.c.h.b16 %v1726
        %v1955 = vunpack.c.l.b16 %v1727
        %v1956 = vunpack.c.h.b16 %v1727
        %v1957 = vunpack.c.l.b16 %v1728
        %v1958 = vunpack.c.h.b16 %v1728
        %v1959 = vunpack.c.l.b16 %v1729
        %v1960 = vunpack.c.h.b16 %v1729
        %v1961 = vunpack.c.l.b16 %v1730
        %v1962 = vunpack.c.h.b16 %v1730
        %v1963 = vunpack.c.l.b16 %v1731
        %v1964 = vunpack.c.h.b16 %v1731
        %v1965 = vunpack.c.l.b16 %v1732
        %v1966 = vunpack.c.h.b16 %v1732
        %v1967 = vunpack.c.l.b16 %v1733
        %v1968 = vunpack.c.h.b16 %v1733
        %v1969 = vunpack.c.l.b16 %v1734
        %v1970 = vunpack.c.h.b16 %v1734
        %v1971 = vunpack.c.l.b16 %v1735
        %v1972 = vunpack.c.h.b16 %v1735
        %v1973 = vunpack.c.l.b16 %v1736
        %v1974 = vunpack.c.h.b16 %v1736
        %v1975 = vunpack.c.l.b16 %v1737
        %v1976 = vunpack.c.h.b16 %v1737
        %v1977 = vunpack.c.l.b16 %v1738
        %v1978 = vunpack.c.h.b16 %v1738
        %v1979 = vunpack.c.l.b16 %v1739
        %v1980 = vunpack.c.h.b16 %v1739
        %v1981 = vunpack.c.l.b16 %v1740
        %v1982 = vunpack.c.h.b16 %v1740
        %v1983 = vunpack.c.l.b16 %v1741
        %v1984 = vunpack.c.h.b16 %v1741
        %v1985 = vunpack.c.l.b16 %v1742
        %v1986 = vunpack.c.h.b16 %v1742
        %v1987 = vunpack.c.l.b16 %v1743
        %v1988 = vunpack.c.h.b16 %v1743
        %v1989 = vunpack.c.l.b16 %v1744
        %v1990 = vunpack.c.h.b16 %v1744
        %v1991 = vunpack.c.l.b16 %v1745
        %v1992 = vunpack.c.h.b16 %v1745
        %v1993 = vunpack.c.l.b16 %v1746
        %v1994 = vunpack.c.h.b16 %v1746
        %v1995 = vunpack.c.l.b16 %v1747
        %v1996 = vunpack.c.h.b16 %v1747
        %v1997 = vunpack.c.l.b16 %v1748
        %v1998 = vunpack.c.h.b16 %v1748
        %v1999 = vunpack.c.l.b16 %v1749
        %v2000 = vunpack.c.h.b16 %v1749
        %v2001 = vunpack.c.l.b16 %v1750
        %v2002 = vunpack.c.h.b16 %v1750
        %v2003 = vunpack.c.l.b16 %v1751
        %v2004 = vunpack.c.h.b16 %v1751
        %v2005 = vunpack.c.l.b16 %v1752
        %v2006 = vunpack.c.h.b16 %v1752
        %v2007 = vunpack.c.l.b16 %v1753
        %v2008 = vunpack.c.h.b16 %v1753
        %v2009 = vunpack.c.l.b16 %v1754
        %v2010 = vunpack.c.h.b16 %v1754
        %v2011 = vunpack.c.l.b16 %v1755
        %v2012 = vunpack.c.h.b16 %v1755
        %v2013 = vunpack.c.l.b16 %v1756
        %v2014 = vunpack.c.h.b16 %v1756
        %v2015 = vunpack.c.l.b16 %v1757
        %v2016 = vunpack.c.h.b16 %v1757
        %v2017 = vunpack.c.l.b16 %v1758
        %v2018 = vunpack.c.h.b16 %v1758
        %v2019 = vunpack.c.l.b16 %v1759
        %v2020 = vunpack.c.h.b16 %v1759
        %v2021 = vunpack.c.l.b16 %v1760
        %v2022 = vunpack.c.h.b16 %v1760
        %v2023 = vunpack.c.l.b16 %v1761
        %v2024 = vunpack.c.h.b16 %v1761
        %v2025 = vunpack.c.l.b16 %v1762
        %v2026 = vunpack.c.h.b16 %v1762
        %v2027 = vunpack.c.l.b16 %v1763
        %v2028 = vunpack.c.h.b16 %v1763
        %v2029 = vunpack.c.l.b16 %v1764
        %v2030 = vunpack.c.h.b16 %v1764
        %v2031 = vunpack.c.l.b16 %v1765
        %v2032 = vunpack.c.h.b16 %v1765
        %v2033 = vunpack.c.l.b16 %v1766
        %v2034 = vunpack.c.h.b16 %v1766
        %v2035 = vunpack.c.l.b16 %v1767
        %v2036 = vunpack.c.h.b16 %v1767
        %v2037 = vunpack.c.l.b16 %v1768
        %v2038 = vunpack.c.h.b16 %v1768
        %v2039 = vunpack.c.l.b16 %v1769
        %v2040 = vunpack.c.h.b16 %v1769
        %v2041 = vunpack.c.l.b16 %v1770
        %v2042 = vunpack.c.h.b16 %v1770
        %v2043 = vunpack.c.l.b16 %v1771
        %v2044 = vunpack.c.h.b16 %v1771
        %v2045 = vunpack.c.l.b16 %v1772
        %v2046 = vunpack.c.h.b16 %v1772
        %v2047 = vunpack.c.l.b16 %v1773
        %v2048 = vunpack.c.h.b16 %v1773
        %v2049 = vunpack.c.l.b16 %v1774
        %v2050 = vunpack.c.h.b16 %v1774
        %v2051 = vunpack.c.l.b16 %v1775
        %v2052 = vunpack.c.h.b16 %v1775
        %v2053 = vunpack.c.l.b16 %v1776
        %v2054 = vunpack.c.h.b16 %v1776
        %v2055 = vunpack.c.l.b16 %v1777
        %v2056 = vunpack.c.h.b16 %v1777
        %v2057 = vunpack.c.l.b16 %v1778
        %v2058 = vunpack.c.h.b16 %v1778
        %v2059 = vunpack.c.l.b16 %v1779
        %v2060 = vunpack.c.h.b16 %v1779
        %v2061 = vunpack.c.l.b16 %v1780
        %v2062 = vunpack.c.h.b16 %v1780
        %v2063 = vunpack.c.l.b16 %v1781
        %v2064 = vunpack.c.h.b16 %v1781
        %v2065 = vunpack.c.l.b16 %v1782
        %v2066 = vunpack.c.h.b16 %v1782
        %v2067 = vunpack.c.l.b16 %v1783
        %v2068 = vunpack.c.h.b16 %v1783
        %v2069 = vunpack.c.l.b16 %v1784
        %v2070 = vunpack.c.h.b16 %v1784
        %v2071 = vunpack.c.l.b16 %v1785
        %v2072 = vunpack.c.h.b16 %v1785
        %v2073 = vunpack.c.l.b16 %v1786
        %v2074 = vunpack.c.h.b16 %v1786
        %v2075 = vunpack.c.l.b16 %v1787
        %v2076 = vunpack.c.h.b16 %v1787
        %v2077 = vunpack.c.l.b16 %v1788
        %v2078 = vunpack.c.h.b16 %v1788
        %v2079 = vunpack.c.l.b16 %v1789
        %v2080 = vunpack.c.h.b16 %v1789
        %v2081 = vunpack.c.l.b16 %v1790
        %v2082 = vunpack.c.h.b16 %v1790
        %v2083 = vunpack.c.l.b16 %v1791
        %v2084 = vunpack.c.h.b16 %v1791
        %v2085 = vunpack.c.l.b16 %v1792
        %v2086 = vunpack.c.h.b16 %v1792
        %v2087 = vunpack.c.l.b16 %v1793
        %v2088 = vunpack.c.h.b16 %v1793
        %v2089 = vunpack.c.l.b16 %v1794
        %v2090 = vunpack.c.h.b16 %v1794
        %v2091 = vunpack.c.l.b16 %v1795
        %v2092 = vunpack.c.h.b16 %v1795
        %v2093 = vunpack.c.l.b16 %v1796
        %v2094 = vunpack.c.h.b16 %v1796
        %v2095 = vunpack.c.l.b16 %v1797
        %v2096 = vunpack.c.h.b16 %v1797
        %v2097 = vunpack.c.l.b16 %v1798
        %v2098 = vunpack.c.h.b16 %v1798
        %v2099 = vunpack.c.l.b16 %v1799
        %v2100 = vunpack.c.h.b16 %v1799
        %v2101 = vunpack.c.l.b16 %v1800
        %v2102 = vunpack.c.h.b16 %v1800
        %v2103 = vunpack.c.l.b16 %v1801
        %v2104 = vunpack.c.h.b16 %v1801
        %v2105 = vunpack.c.l.b16 %v1802
        %v2106 = vunpack.c.h.b16 %v1802
        %v2107 = vunpack.c.l.b16 %v1803
        %v2108 = vunpack.c.h.b16 %v1803
        %v2109 = vunpack.c.l.b16 %v1804
        %v2110 = vunpack.c.h.b16 %v1804
        %v2111 = vunpack.c.l.b16 %v1805
        %v2112 = vunpack.c.h.b16 %v1805
        %v2113 = vunpack.c.l.b16 %v1806
        %v2114 = vunpack.c.h.b16 %v1806
        %v2115 = vunpack.c.l.b16 %v1807
        %v2116 = vunpack.c.h.b16 %v1807
        %v2117 = vunpack.c.l.b16 %v1808
        %v2118 = vunpack.c.h.b16 %v1808
        %v2119 = vunpack.c.l.b16 %v1809
        %v2120 = vunpack.c.h.b16 %v1809
        %v2121 = vunpack.c.l.b16 %v1810
        %v2122 = vunpack.c.h.b16 %v1810
        %v2123 = vunpack.c.l.b16 %v1811
        %v2124 = vunpack.c.h.b16 %v1811
        %v2125 = vunpack.c.l.b16 %v1812
        %v2126 = vunpack.c.h.b16 %v1812
        %v2127 = vunpack.c.l.b16 %v1813
        %v2128 = vunpack.c.h.b16 %v1813
        %v2129 = vunpack.c.l.b16 %v1814
        %v2130 = vunpack.c.h.b16 %v1814
        %v2131 = vunpack.c.l.b16 %v1815
        %v2132 = vunpack.c.h.b16 %v1815
        %v2133 = vunpack.c.l.b16 %v1816
        %v2134 = vunpack.c.h.b16 %v1816
        %v2135 = vunpack.c.l.b16 %v1817
        %v2136 = vunpack.c.h.b16 %v1817
        %v2137 = vunpack.c.l.b16 %v1818
        %v2138 = vunpack.c.h.b16 %v1818
        %v2139 = vpack.c.b16 %v1953, %v1947
        %v2140 = vpack.c.b16 %v1954, %v1948
        %v2141 = vpack.c.b16 %v1955, %v1949
        %v2142 = vpack.c.b16 %v1956, %v1950
        %v2143 = vpack.c.b16 %v1957, %v1951
        %v2144 = vpack.c.b16 %v1958, %v1952
        %v2145 = vpack.c.b16 %v1965, %v1959
        %v2146 = vpack.c.b16 %v1966, %v1960
        %v2147 = vpack.c.b16 %v1967, %v1961
        %v2148 = vpack.c.b16 %v1968, %v1962
        %v2149 = vpack.c.b16 %v1969, %v1963
        %v2150 = vpack.c.b16 %v1970, %v1964
        %v2151 = vpack.c.b16 %v1977, %v1971
        %v2152 = vpack.c.b16 %v1978, %v1972
        %v2153 = vpack.c.b16 %v1979, %v1973
        %v2154 = vpack.c.b16 %v1980, %v1974
        %v2155 = vpack.c.b16 %v1981, %v1975
        %v2156 = vpack.c.b16 %v1982, %v1976
        %v2157 = vpack.c.b16 %v1989, %v1983
        %v2158 = vpack.c.b16 %v1990, %v1984
        %v2159 = vpack.c.b16 %v1991, %v1985
        %v2160 = vpack.c.b16 %v1992, %v1986
        %v2161 = vpack.c.b16 %v1993, %v1987
        %v2162 = vpack.c.b16 %v1994, %v1988
        %v2163 = vpack.c.b16 %v2001, %v1995
        %v2164 = vpack.c.b16 %v2002, %v1996
        %v2165 = vpack.c.b16 %v2003, %v1997
        %v2166 = vpack.c.b16 %v2004, %v1998
        %v2167 = vpack.c.b16 %v2005, %v1999
        %v2168 = vpack.c.b16 %v2006, %v2000
        %v2169 = vpack.c.b16 %v2013, %v2007
        %v2170 = vpack.c.b16 %v2014, %v2008
        %v2171 = vpack.c.b16 %v2015, %v2009
        %v2172 = vpack.c.b16 %v2016, %v2010
        %v2173 = vpack.c.b16 %v2017, %v2011
        %v2174 = vpack.c.b16 %v2018, %v2012
        %v2175 = vpack.c.b16 %v2025, %v2019
        %v2176 = vpack.c.b16 %v2026, %v2020
        %v2177 = vpack.c.b16 %v2027, %v2021
        %v2178 = vpack.c.b16 %v2028, %v2022
        %v2179 = vpack.c.b16 %v2029, %v2023
        %v2180 = vpack.c.b16 %v2030, %v2024
        %v2181 = vpack.c.b16 %v2037, %v2031
        %v2182 = vpack.c.b16 %v2038, %v2032
        %v2183 = vpack.c.b16 %v2039, %v2033
        %v2184 = vpack.c.b16 %v2040, %v2034
        %v2185 = vpack.c.b16 %v2041, %v2035
        %v2186 = vpack.c.b16 %v2042, %v2036
        %v2187 = vpack.c.b16 %v2049, %v2043
        %v2188 = vpack.c.b16 %v2050, %v2044
        %v2189 = vpack.c.b16 %v2051, %v2045
        %v2190 = vpack.c.b16 %v2052, %v2046
        %v2191 = vpack.c.b16 %v2053, %v2047
        %v2192 = vpack.c.b16 %v2054, %v2048
        %v2193 = vpack.c.b16 %v2061, %v2055
        %v2194 = vpack.c.b16 %v2062, %v2056
        %v2195 = vpack.c.b16 %v2063, %v2057
        %v2196 = vpack.c.b16 %v2064, %v2058
        %v2197 = vpack.c.b16 %v2065, %v2059
        %v2198 = vpack.c.b16 %v2066, %v2060
        %v2199 = vpack.c.b16 %v2073, %v2067
        %v2200 = vpack.c.b16 %v2074, %v2068
        %v2201 = vpack.c.b16 %v2075, %v2069
        %v2202 = vpack.c.b16 %v2076, %v2070
        %v2203 = vpack.c.b16 %v2077, %v2071
        %v2204 = vpack.c.b16 %v2078, %v2072
        %v2205 = vpack.c.b16 %v2085, %v2079
        %v2206 = vpack.c.b16 %v2086, %v2080
        %v2207 = vpack.c.b16 %v2087, %v2081
        %v2208 = vpack.c.b16 %v2088, %v2082
        %v2209 = vpack.c.b16 %v2089, %v2083
        %v2210 = vpack.c.b16 %v2090, %v2084
        %v2211 = vpack.c.b16 %v2097, %v2091
        %v2212 = vpack.c.b16 %v2098, %v2092
        %v2213 = vpack.c.b16 %v2099, %v2093
        %v2214 = vpack.c.b16 %v2100, %v2094
        %v2215 = vpack.c.b16 %v2101, %v2095
        %v2216 = vpack.c.b16 %v2102, %v2096
        %v2217 = vpack.c.b16 %v2109, %v2103
        %v2218 = vpack.c.b16 %v2110, %v2104
        %v2219 = vpack.c.b16 %v2111, %v2105
        %v2220 = vpack.c.b16 %v2112, %v2106
        %v2221 = vpack.c.b16 %v2113, %v2107
        %v2222 = vpack.c.b16 %v2114, %v2108
        %v2223 = vpack.c.b16 %v2121, %v2115
        %v2224 = vpack.c.b16 %v2122, %v2116
        %v2225 = vpack.c.b16 %v2123, %v2117
        %v2226 = vpack.c.b16 %v2124, %v2118
        %v2227 = vpack.c.b16 %v2125, %v2119
        %v2228 = vpack.c.b16 %v2126, %v2120
        %v2229 = vpack.c.b16 %v2133, %v2127
        %v2230 = vpack.c.b16 %v2134, %v2128
        %v2231 = vpack.c.b16 %v2135, %v2129
        %v2232 = vpack.c.b16 %v2136, %v2130
        %v2233 = vpack.c.b16 %v2137, %v2131
        %v2234 = vpack.c.b16 %v2138, %v2132
        %2331 = vmatprep.subr.bf16.mxu0 %v2182
        %2332 = vmatpush1.bf16.msra.mxu0 %v2181
        %2333 = vmatprep.subr.bf16.mxu0 %v2176
        %2334 = vmatpush1.bf16.msra.mxu0 %v2175
        %2335 = vmatprep.subr.bf16.mxu0 %v2170
        %2336 = vmatpush1.bf16.msra.mxu0 %v2169
        %2337 = vmatprep.subr.bf16.mxu0 %v2164
        %2338 = vmatpush1.bf16.msra.mxu0 %v2163
        %2339 = vmatprep.subr.bf16.mxu0 %v2158
        %2340 = vmatpush1.bf16.msra.mxu0 %v2157
        %2341 = vmatprep.subr.bf16.mxu0 %v2152
        %2342 = vmatpush1.bf16.msra.mxu0 %v2151
        %2343 = vmatprep.subr.bf16.mxu0 %v2146
        %2344 = vmatpush1.bf16.msra.mxu0 %v2145
        %2345 = vmatprep.subr.bf16.mxu0 %v2140
        %2346 = vmatpush1.bf16.msra.mxu0 %v2139
        %2347 = vmatprep.subr.bf16.mxu0 %v2230
        %2348 = vmatpush2.bf16.msra.mxu0 %v2229
        %2349 = vmatprep.subr.bf16.mxu0 %v2224
        %2350 = vmatpush2.bf16.msra.mxu0 %v2223
        %2351 = vmatprep.subr.bf16.mxu0 %v2218
        %2352 = vmatpush2.bf16.msra.mxu0 %v2217
        %2353 = vmatprep.subr.bf16.mxu0 %v2212
        %2354 = vmatpush2.bf16.msra.mxu0 %v2211
        %2355 = vmatprep.subr.bf16.mxu0 %v2206
        %2356 = vmatpush2.bf16.msra.mxu0 %v2205
        %2357 = vmatprep.subr.bf16.mxu0 %v2200
        %2358 = vmatpush2.bf16.msra.mxu0 %v2199
        %2359 = vmatprep.subr.bf16.mxu0 %v2194
        %2360 = vmatpush2.bf16.msra.mxu0 %v2193
        %2361 = vmatprep.subr.bf16.mxu0 %v2188
        %2362 = vmatpush2.bf16.msra.mxu0 %v2187
        %2363 = vmatprep.mubr.bf16.mxu0 %v1722
        %2364 = vmatmul.mubr.bf16.gmra.mxu0 %v1721
        %v2365 = vpop.f32.mrf.mxu0
        %v2366 = vadd.f32 %v1824, %v2365
        %v2367 = vpop.f32.mrf.mxu0
        %v2368 = vadd.f32 %v1828, %v2367
        %v2369 = vpop.f32.mrf.mxu0
        %v2370 = vadd.f32 %v1824, %v2369
        %v2371 = vpop.f32.mrf.mxu0
        %v2372 = vadd.f32 %v1828, %v2371
        %2373 = vdwg.mxu0
        %2374 = vmatprep.subr.bf16.mxu0 %v2184
        %2375 = vmatpush1.bf16.msra.mxu0 %v2183
        %2376 = vmatprep.subr.bf16.mxu0 %v2178
        %2377 = vmatpush1.bf16.msra.mxu0 %v2177
        %2378 = vmatprep.subr.bf16.mxu0 %v2172
        %2379 = vmatpush1.bf16.msra.mxu0 %v2171
        %2380 = vmatprep.subr.bf16.mxu0 %v2166
        %2381 = vmatpush1.bf16.msra.mxu0 %v2165
        %2382 = vmatprep.subr.bf16.mxu0 %v2160
        %2383 = vmatpush1.bf16.msra.mxu0 %v2159
        %2384 = vmatprep.subr.bf16.mxu0 %v2154
        %2385 = vmatpush1.bf16.msra.mxu0 %v2153
        %2386 = vmatprep.subr.bf16.mxu0 %v2148
        %2387 = vmatpush1.bf16.msra.mxu0 %v2147
        %2388 = vmatprep.subr.bf16.mxu0 %v2142
        %2389 = vmatpush1.bf16.msra.mxu0 %v2141
        %2390 = vmatprep.subr.bf16.mxu0 %v2232
        %2391 = vmatpush2.bf16.msra.mxu0 %v2231
        %2392 = vmatprep.subr.bf16.mxu0 %v2226
        %2393 = vmatpush2.bf16.msra.mxu0 %v2225
        %2394 = vmatprep.subr.bf16.mxu0 %v2220
        %2395 = vmatpush2.bf16.msra.mxu0 %v2219
        %2396 = vmatprep.subr.bf16.mxu0 %v2214
        %2397 = vmatpush2.bf16.msra.mxu0 %v2213
        %2398 = vmatprep.subr.bf16.mxu0 %v2208
        %2399 = vmatpush2.bf16.msra.mxu0 %v2207
        %2400 = vmatprep.subr.bf16.mxu0 %v2202
        %2401 = vmatpush2.bf16.msra.mxu0 %v2201
        %2402 = vmatprep.subr.bf16.mxu0 %v2196
        %2403 = vmatpush2.bf16.msra.mxu0 %v2195
        %2404 = vmatprep.subr.bf16.mxu0 %v2190
        %2405 = vmatpush2.bf16.msra.mxu0 %v2189
        %2406 = vmatprep.mubr.bf16.mxu0 %v1722
        %2407 = vmatmul.mubr.bf16.gmra.mxu0 %v1721
        %v2408 = vpop.f32.mrf.mxu0
        %v2409 = vadd.f32 %v1832, %v2408
        %v2410 = vpop.f32.mrf.mxu0
        %v2411 = vadd.f32 %v1836, %v2410
        %v2412 = vpop.f32.mrf.mxu0
        %v2413 = vadd.f32 %v1832, %v2412
        %v2414 = vpop.f32.mrf.mxu0
        %v2415 = vadd.f32 %v1836, %v2414
        %2416 = vdwg.mxu0
        %2417 = vmatprep.subr.bf16.mxu0 %v2186
        %2418 = vmatpush1.bf16.msra.mxu0 %v2185
        %2419 = vmatprep.subr.bf16.mxu0 %v2180
        %2420 = vmatpush1.bf16.msra.mxu0 %v2179
        %2421 = vmatprep.subr.bf16.mxu0 %v2174
        %2422 = vmatpush1.bf16.msra.mxu0 %v2173
        %2423 = vmatprep.subr.bf16.mxu0 %v2168
        %2424 = vmatpush1.bf16.msra.mxu0 %v2167
        %2425 = vmatprep.subr.bf16.mxu0 %v2162
        %2426 = vmatpush1.bf16.msra.mxu0 %v2161
        %2427 = vmatprep.subr.bf16.mxu0 %v2156
        %2428 = vmatpush1.bf16.msra.mxu0 %v2155
        %2429 = vmatprep.subr.bf16.mxu0 %v2150
        %2430 = vmatpush1.bf16.msra.mxu0 %v2149
        %2431 = vmatprep.subr.bf16.mxu0 %v2144
        %2432 = vmatpush1.bf16.msra.mxu0 %v2143
        %2433 = vmatprep.subr.bf16.mxu0 %v2234
        %2434 = vmatpush2.bf16.msra.mxu0 %v2233
        %2435 = vmatprep.subr.bf16.mxu0 %v2228
        %2436 = vmatpush2.bf16.msra.mxu0 %v2227
        %2437 = vmatprep.subr.bf16.mxu0 %v2222
        %2438 = vmatpush2.bf16.msra.mxu0 %v2221
        %2439 = vmatprep.subr.bf16.mxu0 %v2216
        %2440 = vmatpush2.bf16.msra.mxu0 %v2215
        %2441 = vmatprep.subr.bf16.mxu0 %v2210
        %2442 = vmatpush2.bf16.msra.mxu0 %v2209
        %2443 = vmatprep.subr.bf16.mxu0 %v2204
        %2444 = vmatpush2.bf16.msra.mxu0 %v2203
        %2445 = vmatprep.subr.bf16.mxu0 %v2198
        %2446 = vmatpush2.bf16.msra.mxu0 %v2197
        %2447 = vmatprep.subr.bf16.mxu0 %v2192
        %2448 = vmatpush2.bf16.msra.mxu0 %v2191
        %2449 = vmatprep.mubr.bf16.mxu0 %v1722
        %2450 = vmatmul.mubr.bf16.gmra.mxu0 %v1721
        %v2451 = vpop.f32.mrf.mxu0
        %v2452 = vadd.f32 %v1840, %v2451
        %v2453 = vpop.f32.mrf.mxu0
        %v2454 = vadd.f32 %v1844, %v2453
        %v2455 = vpop.f32.mrf.mxu0
        %v2456 = vadd.f32 %v1840, %v2455
        %v2457 = vpop.f32.mrf.mxu0
        %v2458 = vadd.f32 %v1844, %v2457
        %2459 = vdwg.mxu0
        %v2460 = vpack.c.bf16 %v2370, %v2366
        %v2461 = vpack.c.bf16 %v2372, %v2368
        %v2462 = vpack.c.bf16 %v2413, %v2409
        %v2463 = vpack.c.bf16 %v2415, %v2411
        %v2464 = vpack.c.bf16 %v2456, %v2452
        %v2465 = vpack.c.bf16 %v2458, %v2454
        %v2466 = vlaneseq
        %v2467 = vand.u32 %v2466, 127
        %vm2468 = vcmp.ge.s32.totalorder %v2467, 5
        %v2469 = vsel %vm2468, -1e+09, 0.0
        %v2471 = vunpack.c.l.b16 %v2460
        %v2472 = vunpack.c.h.b16 %v2460
        %v2473 = vpack.c.b16 %v2471, %v2471
        %v2474 = vpack.c.b16 %v2472, %v2472
        %v2478 = vunpack.c.l.b16 %v2462
        %v2479 = vunpack.c.h.b16 %v2462
        %v2480 = vpack.c.b16 %v2478, %v2478
        %v2481 = vpack.c.b16 %v2479, %v2479
        %v2485 = vunpack.c.l.b16 %v2464
        %v2486 = vunpack.c.h.b16 %v2464
        %v2487 = vpack.c.b16 %v2485, %v2485
        %v2488 = vpack.c.b16 %v2486, %v2486
        %2489 = vmatprep.subr.bf16.mxu0 0
        %2490 = vmatpush1.bf16.xpose.msra.mxu0 0
        %2491 = vmatprep.subr.bf16.mxu0 0
        %2492 = vmatpush1.bf16.xpose.msra.mxu0 0
        %2493 = vmatprep.subr.bf16.mxu0 0
        %2494 = vmatpush1.bf16.xpose.msra.mxu0 0
        %2495 = vmatprep.subr.bf16.mxu0 0
        %2496 = vmatpush1.bf16.xpose.msra.mxu0 0
        %2497 = vmatprep.subr.bf16.mxu0 0
        %2498 = vmatpush1.bf16.xpose.msra.mxu0 0
        %2499 = vmatprep.subr.bf16.mxu0 0
        %2500 = vmatpush1.bf16.xpose.msra.mxu0 0
        %2501 = vmatprep.subr.bf16.mxu0 0
        %2502 = vmatpush1.bf16.xpose.msra.mxu0 0
        %2503 = vmatprep.subr.bf16.mxu0 0
        %2504 = vmatpush1.bf16.xpose.msra.mxu0 %v2480
        %2505 = vmatprep.subr.bf16.mxu0 0
        %2506 = vmatpush2.bf16.xpose.msra.mxu0 0
        %2507 = vmatprep.subr.bf16.mxu0 0
        %2508 = vmatpush2.bf16.xpose.msra.mxu0 0
        %2509 = vmatprep.subr.bf16.mxu0 0
        %2510 = vmatpush2.bf16.xpose.msra.mxu0 0
        %2511 = vmatprep.subr.bf16.mxu0 0
        %2512 = vmatpush2.bf16.xpose.msra.mxu0 0
        %2513 = vmatprep.subr.bf16.mxu0 0
        %2514 = vmatpush2.bf16.xpose.msra.mxu0 0
        %2515 = vmatprep.subr.bf16.mxu0 0
        %2516 = vmatpush2.bf16.xpose.msra.mxu0 0
        %2517 = vmatprep.subr.bf16.mxu0 0
        %2518 = vmatpush2.bf16.xpose.msra.mxu0 0
        %2519 = vmatprep.subr.bf16.mxu0 0
        %2520 = vmatpush2.bf16.xpose.msra.mxu0 0
        %2521 = vmatprep.mubr.bf16.mxu0 0
        %2522 = vmatmul.mubr.bf16.gmra.mxu0 %v2473
        %v2523 = vpop.f32.mrf.mxu0
        %v2524 = vadd.f32 %v2469, %v2523
        %v2525 = vpop.f32.mrf.mxu0
        %v2526 = vpop.f32.mrf.mxu0
        %v2527 = vpop.f32.mrf.mxu0
        %2528 = vdwg.mxu0
        %2529 = vmatprep.subr.bf16.mxu0 0
        %2530 = vmatpush1.bf16.xpose.msra.mxu0 0
        %2531 = vmatprep.subr.bf16.mxu0 0
        %2532 = vmatpush1.bf16.xpose.msra.mxu0 0
        %2533 = vmatprep.subr.bf16.mxu0 0
        %2534 = vmatpush1.bf16.xpose.msra.mxu0 0
        %2535 = vmatprep.subr.bf16.mxu0 0
        %2536 = vmatpush1.bf16.xpose.msra.mxu0 0
        %2537 = vmatprep.subr.bf16.mxu0 0
        %2538 = vmatpush1.bf16.xpose.msra.mxu0 0
        %2539 = vmatprep.subr.bf16.mxu0 0
        %2540 = vmatpush1.bf16.xpose.msra.mxu0 0
        %2541 = vmatprep.subr.bf16.mxu0 0
        %2542 = vmatpush1.bf16.xpose.msra.mxu0 0
        %2543 = vmatprep.subr.bf16.mxu0 0
        %2544 = vmatpush1.bf16.xpose.msra.mxu0 %v2481
        %2545 = vmatprep.subr.bf16.mxu0 0
        %2546 = vmatpush2.bf16.xpose.msra.mxu0 0
        %2547 = vmatprep.subr.bf16.mxu0 0
        %2548 = vmatpush2.bf16.xpose.msra.mxu0 0
        %2549 = vmatprep.subr.bf16.mxu0 0
        %2550 = vmatpush2.bf16.xpose.msra.mxu0 0
        %2551 = vmatprep.subr.bf16.mxu0 0
        %2552 = vmatpush2.bf16.xpose.msra.mxu0 0
        %2553 = vmatprep.subr.bf16.mxu0 0
        %2554 = vmatpush2.bf16.xpose.msra.mxu0 0
        %2555 = vmatprep.subr.bf16.mxu0 0
        %2556 = vmatpush2.bf16.xpose.msra.mxu0 0
        %2557 = vmatprep.subr.bf16.mxu0 0
        %2558 = vmatpush2.bf16.xpose.msra.mxu0 0
        %2559 = vmatprep.subr.bf16.mxu0 0
        %2560 = vmatpush2.bf16.xpose.msra.mxu0 0
        %2561 = vmatprep.mubr.bf16.mxu0 0
        %2562 = vmatmul.mubr.bf16.gmra.mxu0 %v2474
        %v2563 = vpop.f32.mrf.mxu0
        %v2564 = vadd.f32 %v2469, %v2563
        %v2565 = vpop.f32.mrf.mxu0
        %v2566 = vpop.f32.mrf.mxu0
        %v2567 = vpop.f32.mrf.mxu0
        %2568 = vdwg.mxu0
        %vm2569 = vcmask 64512
        %v2570 = vsel %vm2569, %v2524, -inf
        %2571 = vmax.xlane.f32.xlu0 %v2570
        %v2572 = vpop.xlane.xlu0 %2571
        %v2573 = vsel %vm2569, %v2564, -inf
        %2574 = vmax.xlane.f32.xlu0 %v2573
        %v2575 = vpop.xlane.xlu0 %2574
        %v2576 = vsub.f32 %v2524, %v2572
        %v2577 = vsub.f32 %v2564, %v2575
        %v2578 = vmul.f32 %v2576, 1.442695
        %v2579 = vpow.pop %v2578
        %v2580 = vmul.f32 %v2577, 1.442695
        %v2581 = vpow.pop %v2580
        %v2582 = vsel %vm2569, %v2579, 0.0
        %2583 = vadd.xlane.f32.xlu0 %v2582
        %v2584 = vpop.xlane.xlu0 %2583
        %v2585 = vsel %vm2569, %v2581, 0.0
        %2586 = vadd.xlane.f32.xlu0 %v2585
        %v2587 = vpop.xlane.xlu0 %2586
        %v2588 = vrcp.pop %v2584
        %v2589 = vrcp.pop %v2587
        %v2590 = vmul.f32 %v2579, %v2588
        %v2591 = vmul.f32 %v2581, %v2589
        %v2592 = vpack.c.bf16 %v2590, %v2590
        %v2593 = vpack.c.bf16 %v2591, %v2591
        %v2595 = vsel %vm2569, %v2592, 0
        %vm2597 = vcmask 1043456
        %v2599 = vsel %vm2597, %v2487, 0
        %2601 = vmatprep.subr.bf16.mxu0 0
        %2602 = vmatpush1.bf16.msra.mxu0 0
        %2603 = vmatprep.subr.bf16.mxu0 0
        %2604 = vmatpush1.bf16.msra.mxu0 0
        %2605 = vmatprep.subr.bf16.mxu0 0
        %2606 = vmatpush1.bf16.msra.mxu0 0
        %2607 = vmatprep.subr.bf16.mxu0 0
        %2608 = vmatpush1.bf16.msra.mxu0 0
        %2609 = vmatprep.subr.bf16.mxu0 0
        %2610 = vmatpush1.bf16.msra.mxu0 0
        %2611 = vmatprep.subr.bf16.mxu0 0
        %2612 = vmatpush1.bf16.msra.mxu0 0
        %2613 = vmatprep.subr.bf16.mxu0 0
        %2614 = vmatpush1.bf16.msra.mxu0 0
        %2615 = vmatprep.subr.bf16.mxu0 0
        %2616 = vmatpush1.bf16.msra.mxu0 %v2599
        %2617 = vmatprep.subr.bf16.mxu0 0
        %2618 = vmatpush2.bf16.msra.mxu0 0
        %2619 = vmatprep.subr.bf16.mxu0 0
        %2620 = vmatpush2.bf16.msra.mxu0 0
        %2621 = vmatprep.subr.bf16.mxu0 0
        %2622 = vmatpush2.bf16.msra.mxu0 0
        %2623 = vmatprep.subr.bf16.mxu0 0
        %2624 = vmatpush2.bf16.msra.mxu0 0
        %2625 = vmatprep.subr.bf16.mxu0 0
        %2626 = vmatpush2.bf16.msra.mxu0 0
        %2627 = vmatprep.subr.bf16.mxu0 0
        %2628 = vmatpush2.bf16.msra.mxu0 0
        %2629 = vmatprep.subr.bf16.mxu0 0
        %2630 = vmatpush2.bf16.msra.mxu0 0
        %2631 = vmatprep.subr.bf16.mxu0 0
        %2632 = vmatpush2.bf16.msra.mxu0 0
        %2633 = vmatprep.mubr.bf16.mxu0 0
        %2634 = vmatmul.mubr.bf16.gmra.mxu0 %v2595
        %v2635 = vpop.f32.mrf.mxu0
        %v2636 = vadd.f32 0.0, %v2635
        %v2637 = vpop.f32.mrf.mxu0
        %v2638 = vpop.f32.mrf.mxu0
        %v2639 = vpop.f32.mrf.mxu0
        %2640 = vdwg.mxu0
        %v2642 = vsel %vm2569, %v2593, 0
        %v2645 = vsel %vm2597, %v2488, 0
        %2647 = vmatprep.subr.bf16.mxu0 0
        %2648 = vmatpush1.bf16.msra.mxu0 0
        %2649 = vmatprep.subr.bf16.mxu0 0
        %2650 = vmatpush1.bf16.msra.mxu0 0
        %2651 = vmatprep.subr.bf16.mxu0 0
        %2652 = vmatpush1.bf16.msra.mxu0 0
        %2653 = vmatprep.subr.bf16.mxu0 0
        %2654 = vmatpush1.bf16.msra.mxu0 0
        %2655 = vmatprep.subr.bf16.mxu0 0
        %2656 = vmatpush1.bf16.msra.mxu0 0
        %2657 = vmatprep.subr.bf16.mxu0 0
        %2658 = vmatpush1.bf16.msra.mxu0 0
        %2659 = vmatprep.subr.bf16.mxu0 0
        %2660 = vmatpush1.bf16.msra.mxu0 0
        %2661 = vmatprep.subr.bf16.mxu0 0
        %2662 = vmatpush1.bf16.msra.mxu0 %v2645
        %2663 = vmatprep.subr.bf16.mxu0 0
        %2664 = vmatpush2.bf16.msra.mxu0 0
        %2665 = vmatprep.subr.bf16.mxu0 0
        %2666 = vmatpush2.bf16.msra.mxu0 0
        %2667 = vmatprep.subr.bf16.mxu0 0
        %2668 = vmatpush2.bf16.msra.mxu0 0
        %2669 = vmatprep.subr.bf16.mxu0 0
        %2670 = vmatpush2.bf16.msra.mxu0 0
        %2671 = vmatprep.subr.bf16.mxu0 0
        %2672 = vmatpush2.bf16.msra.mxu0 0
        %2673 = vmatprep.subr.bf16.mxu0 0
        %2674 = vmatpush2.bf16.msra.mxu0 0
        %2675 = vmatprep.subr.bf16.mxu0 0
        %2676 = vmatpush2.bf16.msra.mxu0 0
        %2677 = vmatprep.subr.bf16.mxu0 0
        %2678 = vmatpush2.bf16.msra.mxu0 0
        %2679 = vmatprep.mubr.bf16.mxu0 0
        %2680 = vmatmul.mubr.bf16.gmra.mxu0 %v2642
        %v2681 = vpop.f32.mrf.mxu0
        %v2682 = vadd.f32 0.0, %v2681
        %v2683 = vpop.f32.mrf.mxu0
        %v2684 = vpop.f32.mrf.mxu0
        %v2685 = vpop.f32.mrf.mxu0
        %2686 = vdwg.mxu0
        %v2687 = vpack.c.bf16 %v2636, %v2636
        %v2688 = vpack.c.bf16 %v2682, %v2682
        %v2690 = vunpack.c.l.b16 %v2461
        %v2691 = vunpack.c.h.b16 %v2461
        %v2692 = vpack.c.b16 %v2690, %v2690
        %v2693 = vpack.c.b16 %v2691, %v2691
        %v2697 = vunpack.c.l.b16 %v2463
        %v2698 = vunpack.c.h.b16 %v2463
        %v2699 = vpack.c.b16 %v2697, %v2697
        %v2700 = vpack.c.b16 %v2698, %v2698
        %v2704 = vunpack.c.l.b16 %v2465
        %v2705 = vunpack.c.h.b16 %v2465
        %v2706 = vpack.c.b16 %v2704, %v2704
        %v2707 = vpack.c.b16 %v2705, %v2705
        %2708 = vmatprep.subr.bf16.mxu0 0
        %2709 = vmatpush1.bf16.xpose.msra.mxu0 0
        %2710 = vmatprep.subr.bf16.mxu0 0
        %2711 = vmatpush1.bf16.xpose.msra.mxu0 0
        %2712 = vmatprep.subr.bf16.mxu0 0
        %2713 = vmatpush1.bf16.xpose.msra.mxu0 0
        %2714 = vmatprep.subr.bf16.mxu0 0
        %2715 = vmatpush1.bf16.xpose.msra.mxu0 0
        %2716 = vmatprep.subr.bf16.mxu0 0
        %2717 = vmatpush1.bf16.xpose.msra.mxu0 0
        %2718 = vmatprep.subr.bf16.mxu0 0
        %2719 = vmatpush1.bf16.xpose.msra.mxu0 0
        %2720 = vmatprep.subr.bf16.mxu0 0
        %2721 = vmatpush1.bf16.xpose.msra.mxu0 0
        %2722 = vmatprep.subr.bf16.mxu0 0
        %2723 = vmatpush1.bf16.xpose.msra.mxu0 %v2699
        %2724 = vmatprep.subr.bf16.mxu0 0
        %2725 = vmatpush2.bf16.xpose.msra.mxu0 0
        %2726 = vmatprep.subr.bf16.mxu0 0
        %2727 = vmatpush2.bf16.xpose.msra.mxu0 0
        %2728 = vmatprep.subr.bf16.mxu0 0
        %2729 = vmatpush2.bf16.xpose.msra.mxu0 0
        %2730 = vmatprep.subr.bf16.mxu0 0
        %2731 = vmatpush2.bf16.xpose.msra.mxu0 0
        %2732 = vmatprep.subr.bf16.mxu0 0
        %2733 = vmatpush2.bf16.xpose.msra.mxu0 0
        %2734 = vmatprep.subr.bf16.mxu0 0
        %2735 = vmatpush2.bf16.xpose.msra.mxu0 0
        %2736 = vmatprep.subr.bf16.mxu0 0
        %2737 = vmatpush2.bf16.xpose.msra.mxu0 0
        %2738 = vmatprep.subr.bf16.mxu0 0
        %2739 = vmatpush2.bf16.xpose.msra.mxu0 0
        %2740 = vmatprep.mubr.bf16.mxu0 0
        %2741 = vmatmul.mubr.bf16.gmra.mxu0 %v2692
        %v2742 = vpop.f32.mrf.mxu0
        %v2743 = vadd.f32 %v2469, %v2742
        %v2744 = vpop.f32.mrf.mxu0
        %v2745 = vpop.f32.mrf.mxu0
        %v2746 = vpop.f32.mrf.mxu0
        %2747 = vdwg.mxu0
        %2748 = vmatprep.subr.bf16.mxu0 0
        %2749 = vmatpush1.bf16.xpose.msra.mxu0 0
        %2750 = vmatprep.subr.bf16.mxu0 0
        %2751 = vmatpush1.bf16.xpose.msra.mxu0 0
        %2752 = vmatprep.subr.bf16.mxu0 0
        %2753 = vmatpush1.bf16.xpose.msra.mxu0 0
        %2754 = vmatprep.subr.bf16.mxu0 0
        %2755 = vmatpush1.bf16.xpose.msra.mxu0 0
        %2756 = vmatprep.subr.bf16.mxu0 0
        %2757 = vmatpush1.bf16.xpose.msra.mxu0 0
        %2758 = vmatprep.subr.bf16.mxu0 0
        %2759 = vmatpush1.bf16.xpose.msra.mxu0 0
        %2760 = vmatprep.subr.bf16.mxu0 0
        %2761 = vmatpush1.bf16.xpose.msra.mxu0 0
        %2762 = vmatprep.subr.bf16.mxu0 0
        %2763 = vmatpush1.bf16.xpose.msra.mxu0 %v2700
        %2764 = vmatprep.subr.bf16.mxu0 0
        %2765 = vmatpush2.bf16.xpose.msra.mxu0 0
        %2766 = vmatprep.subr.bf16.mxu0 0
        %2767 = vmatpush2.bf16.xpose.msra.mxu0 0
        %2768 = vmatprep.subr.bf16.mxu0 0
        %2769 = vmatpush2.bf16.xpose.msra.mxu0 0
        %2770 = vmatprep.subr.bf16.mxu0 0
        %2771 = vmatpush2.bf16.xpose.msra.mxu0 0
        %2772 = vmatprep.subr.bf16.mxu0 0
        %2773 = vmatpush2.bf16.xpose.msra.mxu0 0
        %2774 = vmatprep.subr.bf16.mxu0 0
        %2775 = vmatpush2.bf16.xpose.msra.mxu0 0
        %2776 = vmatprep.subr.bf16.mxu0 0
        %2777 = vmatpush2.bf16.xpose.msra.mxu0 0
        %2778 = vmatprep.subr.bf16.mxu0 0
        %2779 = vmatpush2.bf16.xpose.msra.mxu0 0
        %2780 = vmatprep.mubr.bf16.mxu0 0
        %2781 = vmatmul.mubr.bf16.gmra.mxu0 %v2693
        %v2782 = vpop.f32.mrf.mxu0
        %v2783 = vadd.f32 %v2469, %v2782
        %v2784 = vpop.f32.mrf.mxu0
        %v2785 = vpop.f32.mrf.mxu0
        %v2786 = vpop.f32.mrf.mxu0
        %2787 = vdwg.mxu0
        %v2788 = vsel %vm2569, %v2743, -inf
        %2789 = vmax.xlane.f32.xlu0 %v2788
        %v2790 = vpop.xlane.xlu0 %2789
        %v2791 = vsel %vm2569, %v2783, -inf
        %2792 = vmax.xlane.f32.xlu0 %v2791
        %v2793 = vpop.xlane.xlu0 %2792
        %v2794 = vsub.f32 %v2743, %v2790
        %v2795 = vsub.f32 %v2783, %v2793
        %v2796 = vmul.f32 %v2794, 1.442695
        %v2797 = vpow.pop %v2796
        %v2798 = vmul.f32 %v2795, 1.442695
        %v2799 = vpow.pop %v2798
        %v2800 = vsel %vm2569, %v2797, 0.0
        %2801 = vadd.xlane.f32.xlu0 %v2800
        %v2802 = vpop.xlane.xlu0 %2801
        %v2803 = vsel %vm2569, %v2799, 0.0
        %2804 = vadd.xlane.f32.xlu0 %v2803
        %v2805 = vpop.xlane.xlu0 %2804
        %v2806 = vrcp.pop %v2802
        %v2807 = vrcp.pop %v2805
        %v2808 = vmul.f32 %v2797, %v2806
        %v2809 = vmul.f32 %v2799, %v2807
        %v2810 = vpack.c.bf16 %v2808, %v2808
        %v2811 = vpack.c.bf16 %v2809, %v2809
        %v2813 = vsel %vm2569, %v2810, 0
        %v2816 = vsel %vm2597, %v2706, 0
        %2818 = vmatprep.subr.bf16.mxu0 0
        %2819 = vmatpush1.bf16.msra.mxu0 0
        %2820 = vmatprep.subr.bf16.mxu0 0
        %2821 = vmatpush1.bf16.msra.mxu0 0
        %2822 = vmatprep.subr.bf16.mxu0 0
        %2823 = vmatpush1.bf16.msra.mxu0 0
        %2824 = vmatprep.subr.bf16.mxu0 0
        %2825 = vmatpush1.bf16.msra.mxu0 0
        %2826 = vmatprep.subr.bf16.mxu0 0
        %2827 = vmatpush1.bf16.msra.mxu0 0
        %2828 = vmatprep.subr.bf16.mxu0 0
        %2829 = vmatpush1.bf16.msra.mxu0 0
        %2830 = vmatprep.subr.bf16.mxu0 0
        %2831 = vmatpush1.bf16.msra.mxu0 0
        %2832 = vmatprep.subr.bf16.mxu0 0
        %2833 = vmatpush1.bf16.msra.mxu0 %v2816
        %2834 = vmatprep.subr.bf16.mxu0 0
        %2835 = vmatpush2.bf16.msra.mxu0 0
        %2836 = vmatprep.subr.bf16.mxu0 0
        %2837 = vmatpush2.bf16.msra.mxu0 0
        %2838 = vmatprep.subr.bf16.mxu0 0
        %2839 = vmatpush2.bf16.msra.mxu0 0
        %2840 = vmatprep.subr.bf16.mxu0 0
        %2841 = vmatpush2.bf16.msra.mxu0 0
        %2842 = vmatprep.subr.bf16.mxu0 0
        %2843 = vmatpush2.bf16.msra.mxu0 0
        %2844 = vmatprep.subr.bf16.mxu0 0
        %2845 = vmatpush2.bf16.msra.mxu0 0
        %2846 = vmatprep.subr.bf16.mxu0 0
        %2847 = vmatpush2.bf16.msra.mxu0 0
        %2848 = vmatprep.subr.bf16.mxu0 0
        %2849 = vmatpush2.bf16.msra.mxu0 0
        %2850 = vmatprep.mubr.bf16.mxu0 0
        %2851 = vmatmul.mubr.bf16.gmra.mxu0 %v2813
        %v2852 = vpop.f32.mrf.mxu0
        %v2853 = vadd.f32 0.0, %v2852
        %v2854 = vpop.f32.mrf.mxu0
        %v2855 = vpop.f32.mrf.mxu0
        %v2856 = vpop.f32.mrf.mxu0
        %2857 = vdwg.mxu0
        %v2859 = vsel %vm2569, %v2811, 0
        %v2862 = vsel %vm2597, %v2707, 0
        %2864 = vmatprep.subr.bf16.mxu0 0
        %2865 = vmatpush1.bf16.msra.mxu0 0
        %2866 = vmatprep.subr.bf16.mxu0 0
        %2867 = vmatpush1.bf16.msra.mxu0 0
        %2868 = vmatprep.subr.bf16.mxu0 0
        %2869 = vmatpush1.bf16.msra.mxu0 0
        %2870 = vmatprep.subr.bf16.mxu0 0
        %2871 = vmatpush1.bf16.msra.mxu0 0
        %2872 = vmatprep.subr.bf16.mxu0 0
        %2873 = vmatpush1.bf16.msra.mxu0 0
        %2874 = vmatprep.subr.bf16.mxu0 0
        %2875 = vmatpush1.bf16.msra.mxu0 0
        %2876 = vmatprep.subr.bf16.mxu0 0
        %2877 = vmatpush1.bf16.msra.mxu0 0
        %2878 = vmatprep.subr.bf16.mxu0 0
        %2879 = vmatpush1.bf16.msra.mxu0 %v2862
        %2880 = vmatprep.subr.bf16.mxu0 0
        %2881 = vmatpush2.bf16.msra.mxu0 0
        %2882 = vmatprep.subr.bf16.mxu0 0
        %2883 = vmatpush2.bf16.msra.mxu0 0
        %2884 = vmatprep.subr.bf16.mxu0 0
        %2885 = vmatpush2.bf16.msra.mxu0 0
        %2886 = vmatprep.subr.bf16.mxu0 0
        %2887 = vmatpush2.bf16.msra.mxu0 0
        %2888 = vmatprep.subr.bf16.mxu0 0
        %2889 = vmatpush2.bf16.msra.mxu0 0
        %2890 = vmatprep.subr.bf16.mxu0 0
        %2891 = vmatpush2.bf16.msra.mxu0 0
        %2892 = vmatprep.subr.bf16.mxu0 0
        %2893 = vmatpush2.bf16.msra.mxu0 0
        %2894 = vmatprep.subr.bf16.mxu0 0
        %2895 = vmatpush2.bf16.msra.mxu0 0
        %2896 = vmatprep.mubr.bf16.mxu0 0
        %2897 = vmatmul.mubr.bf16.gmra.mxu0 %v2859
        %v2898 = vpop.f32.mrf.mxu0
        %v2899 = vadd.f32 0.0, %v2898
        %v2900 = vpop.f32.mrf.mxu0
        %v2901 = vpop.f32.mrf.mxu0
        %v2902 = vpop.f32.mrf.mxu0
        %2903 = vdwg.mxu0
        %v2904 = vpack.c.bf16 %v2853, %v2853
        %v2905 = vpack.c.bf16 %v2899, %v2899
        %v2908 = vunpack.c.l.b16 %v2687
        %v2909 = vunpack.c.l.b16 %v2688
        %v2910 = vpack.c.b16 %v2909, %v2908
        %v2914 = vunpack.c.l.b16 %v2904
        %v2915 = vunpack.c.l.b16 %v2905
        %v2916 = vpack.c.b16 %v2915, %v2914
        %v2918 = vld [vmem:[%s1166] sm:$0xff]
        %v2919 = vld [vmem:[%s1166 + $0x8] sm:$0xff]
        %v2920 = vld [vmem:[%s1166 + $0x10] sm:$0xff]
        %v2921 = vld [vmem:[%s1166 + $0x18] sm:$0xff]
        %v2922 = vld [vmem:[%s1166 + $0x20] sm:$0xff]
        %v2923 = vld [vmem:[%s1166 + $0x28] sm:$0xff]
        %v2924 = vld [vmem:[%s1166 + $0x30] sm:$0xff]
        %v2925 = vld [vmem:[%s1166 + $0x38] sm:$0xff]
        %v2926 = vld [vmem:[%s1166 + $0x40] sm:$0xff]
        %v2927 = vld [vmem:[%s1166 + $0x48] sm:$0xff]
        %v2928 = vld [vmem:[%s1166 + $0x50] sm:$0xff]
        %v2929 = vld [vmem:[%s1166 + $0x58] sm:$0xff]
        %v2930 = vld [vmem:[%s1166 + $0x60] sm:$0xff]
        %v2931 = vld [vmem:[%s1166 + $0x68] sm:$0xff]
        %v2932 = vld [vmem:[%s1166 + $0x70] sm:$0xff]
        %v2933 = vld [vmem:[%s1166 + $0x78] sm:$0xff]
        %v2934 = vld [vmem:[%s1166 + $0x80] sm:$0xff]
        %v2935 = vld [vmem:[%s1166 + $0x88] sm:$0xff]
        %v2936 = vld [vmem:[%s1166 + $0x90] sm:$0xff]
        %v2937 = vld [vmem:[%s1166 + $0x98] sm:$0xff]
        %v2938 = vld [vmem:[%s1166 + $0xa0] sm:$0xff]
        %v2939 = vld [vmem:[%s1166 + $0xa8] sm:$0xff]
        %v2940 = vld [vmem:[%s1166 + $0xb0] sm:$0xff]
        %v2941 = vld [vmem:[%s1166 + $0xb8] sm:$0xff]
        %v2942 = vld [vmem:[%s1166 + $0xc0] sm:$0xff]
        %v2943 = vld [vmem:[%s1166 + $0xc8] sm:$0xff]
        %v2944 = vld [vmem:[%s1166 + $0xd0] sm:$0xff]
        %v2945 = vld [vmem:[%s1166 + $0xd8] sm:$0xff]
        %v2946 = vld [vmem:[%s1166 + $0xe0] sm:$0xff]
        %v2947 = vld [vmem:[%s1166 + $0xe8] sm:$0xff]
        %v2948 = vld [vmem:[%s1166 + $0xf0] sm:$0xff]
        %v2949 = vld [vmem:[%s1166 + $0xf8] sm:$0xff]
        %v2950 = vld [vmem:[%s1175] sm:$0x3]
        %v2952 = vlaneseq
        %v2953 = vshrl.u32 %v2952, 7
        %v2954 = vsub.s32 0, %v2953
        %v2955 = vrot.slane %v2950, %v2954
        %v2956 = vlaneseq
        %v2957 = vshrl.u32 %v2956, 7
        %v2958 = vsub.s32 1, %v2957
        %v2959 = vrot.slane %v2950, %v2958
        %v2994 = vunpack.c.l.b16 %v2918
        %v2995 = vunpack.c.h.b16 %v2918
        %v2996 = vunpack.c.l.b16 %v2919
        %v2997 = vunpack.c.h.b16 %v2919
        %v2998 = vunpack.c.l.b16 %v2920
        %v2999 = vunpack.c.h.b16 %v2920
        %v3000 = vunpack.c.l.b16 %v2921
        %v3001 = vunpack.c.h.b16 %v2921
        %v3002 = vunpack.c.l.b16 %v2922
        %v3003 = vunpack.c.h.b16 %v2922
        %v3004 = vunpack.c.l.b16 %v2923
        %v3005 = vunpack.c.h.b16 %v2923
        %v3006 = vunpack.c.l.b16 %v2924
        %v3007 = vunpack.c.h.b16 %v2924
        %v3008 = vunpack.c.l.b16 %v2925
        %v3009 = vunpack.c.h.b16 %v2925
        %v3010 = vunpack.c.l.b16 %v2926
        %v3011 = vunpack.c.h.b16 %v2926
        %v3012 = vunpack.c.l.b16 %v2927
        %v3013 = vunpack.c.h.b16 %v2927
        %v3014 = vunpack.c.l.b16 %v2928
        %v3015 = vunpack.c.h.b16 %v2928
        %v3016 = vunpack.c.l.b16 %v2929
        %v3017 = vunpack.c.h.b16 %v2929
        %v3018 = vunpack.c.l.b16 %v2930
        %v3019 = vunpack.c.h.b16 %v2930
        %v3020 = vunpack.c.l.b16 %v2931
        %v3021 = vunpack.c.h.b16 %v2931
        %v3022 = vunpack.c.l.b16 %v2932
        %v3023 = vunpack.c.h.b16 %v2932
        %v3024 = vunpack.c.l.b16 %v2933
        %v3025 = vunpack.c.h.b16 %v2933
        %v3026 = vunpack.c.l.b16 %v2934
        %v3027 = vunpack.c.h.b16 %v2934
        %v3028 = vunpack.c.l.b16 %v2935
        %v3029 = vunpack.c.h.b16 %v2935
        %v3030 = vunpack.c.l.b16 %v2936
        %v3031 = vunpack.c.h.b16 %v2936
        %v3032 = vunpack.c.l.b16 %v2937
        %v3033 = vunpack.c.h.b16 %v2937
        %v3034 = vunpack.c.l.b16 %v2938
        %v3035 = vunpack.c.h.b16 %v2938
        %v3036 = vunpack.c.l.b16 %v2939
        %v3037 = vunpack.c.h.b16 %v2939
        %v3038 = vunpack.c.l.b16 %v2940
        %v3039 = vunpack.c.h.b16 %v2940
        %v3040 = vunpack.c.l.b16 %v2941
        %v3041 = vunpack.c.h.b16 %v2941
        %v3042 = vunpack.c.l.b16 %v2942
        %v3043 = vunpack.c.h.b16 %v2942
        %v3044 = vunpack.c.l.b16 %v2943
        %v3045 = vunpack.c.h.b16 %v2943
        %v3046 = vunpack.c.l.b16 %v2944
        %v3047 = vunpack.c.h.b16 %v2944
        %v3048 = vunpack.c.l.b16 %v2945
        %v3049 = vunpack.c.h.b16 %v2945
        %v3050 = vunpack.c.l.b16 %v2946
        %v3051 = vunpack.c.h.b16 %v2946
        %v3052 = vunpack.c.l.b16 %v2947
        %v3053 = vunpack.c.h.b16 %v2947
        %v3054 = vunpack.c.l.b16 %v2948
        %v3055 = vunpack.c.h.b16 %v2948
        %v3056 = vunpack.c.l.b16 %v2949
        %v3057 = vunpack.c.h.b16 %v2949
        %v3058 = vpack.c.b16 %v2996, %v2994
        %v3059 = vpack.c.b16 %v2997, %v2995
        %v3060 = vpack.c.b16 %v3000, %v2998
        %v3061 = vpack.c.b16 %v3001, %v2999
        %v3062 = vpack.c.b16 %v3004, %v3002
        %v3063 = vpack.c.b16 %v3005, %v3003
        %v3064 = vpack.c.b16 %v3008, %v3006
        %v3065 = vpack.c.b16 %v3009, %v3007
        %v3066 = vpack.c.b16 %v3012, %v3010
        %v3067 = vpack.c.b16 %v3013, %v3011
        %v3068 = vpack.c.b16 %v3016, %v3014
        %v3069 = vpack.c.b16 %v3017, %v3015
        %v3070 = vpack.c.b16 %v3020, %v3018
        %v3071 = vpack.c.b16 %v3021, %v3019
        %v3072 = vpack.c.b16 %v3024, %v3022
        %v3073 = vpack.c.b16 %v3025, %v3023
        %v3074 = vpack.c.b16 %v3028, %v3026
        %v3075 = vpack.c.b16 %v3029, %v3027
        %v3076 = vpack.c.b16 %v3032, %v3030
        %v3077 = vpack.c.b16 %v3033, %v3031
        %v3078 = vpack.c.b16 %v3036, %v3034
        %v3079 = vpack.c.b16 %v3037, %v3035
        %v3080 = vpack.c.b16 %v3040, %v3038
        %v3081 = vpack.c.b16 %v3041, %v3039
        %v3082 = vpack.c.b16 %v3044, %v3042
        %v3083 = vpack.c.b16 %v3045, %v3043
        %v3084 = vpack.c.b16 %v3048, %v3046
        %v3085 = vpack.c.b16 %v3049, %v3047
        %v3086 = vpack.c.b16 %v3052, %v3050
        %v3087 = vpack.c.b16 %v3053, %v3051
        %v3088 = vpack.c.b16 %v3056, %v3054
        %v3089 = vpack.c.b16 %v3057, %v3055
        %3122 = vmatprep.subr.bf16.mxu0 %v3073
        %3123 = vmatpush1.bf16.msra.mxu0 %v3072
        %3124 = vmatprep.subr.bf16.mxu0 %v3071
        %3125 = vmatpush1.bf16.msra.mxu0 %v3070
        %3126 = vmatprep.subr.bf16.mxu0 %v3069
        %3127 = vmatpush1.bf16.msra.mxu0 %v3068
        %3128 = vmatprep.subr.bf16.mxu0 %v3067
        %3129 = vmatpush1.bf16.msra.mxu0 %v3066
        %3130 = vmatprep.subr.bf16.mxu0 %v3065
        %3131 = vmatpush1.bf16.msra.mxu0 %v3064
        %3132 = vmatprep.subr.bf16.mxu0 %v3063
        %3133 = vmatpush1.bf16.msra.mxu0 %v3062
        %3134 = vmatprep.subr.bf16.mxu0 %v3061
        %3135 = vmatpush1.bf16.msra.mxu0 %v3060
        %3136 = vmatprep.subr.bf16.mxu0 %v3059
        %3137 = vmatpush1.bf16.msra.mxu0 %v3058
        %3138 = vmatprep.subr.bf16.mxu0 %v3089
        %3139 = vmatpush2.bf16.msra.mxu0 %v3088
        %3140 = vmatprep.subr.bf16.mxu0 %v3087
        %3141 = vmatpush2.bf16.msra.mxu0 %v3086
        %3142 = vmatprep.subr.bf16.mxu0 %v3085
        %3143 = vmatpush2.bf16.msra.mxu0 %v3084
        %3144 = vmatprep.subr.bf16.mxu0 %v3083
        %3145 = vmatpush2.bf16.msra.mxu0 %v3082
        %3146 = vmatprep.subr.bf16.mxu0 %v3081
        %3147 = vmatpush2.bf16.msra.mxu0 %v3080
        %3148 = vmatprep.subr.bf16.mxu0 %v3079
        %3149 = vmatpush2.bf16.msra.mxu0 %v3078
        %3150 = vmatprep.subr.bf16.mxu0 %v3077
        %3151 = vmatpush2.bf16.msra.mxu0 %v3076
        %3152 = vmatprep.subr.bf16.mxu0 %v3075
        %3153 = vmatpush2.bf16.msra.mxu0 %v3074
        %3154 = vmatprep.mubr.bf16.mxu0 %v2916
        %3155 = vmatmul.mubr.bf16.gmra.mxu0 %v2910
        %v3156 = vpop.f32.mrf.mxu0
        %v3157 = vadd.f32 %v2955, %v3156
        %v3158 = vpop.f32.mrf.mxu0
        %v3159 = vadd.f32 %v2959, %v3158
        %v3160 = vpop.f32.mrf.mxu0
        %v3161 = vadd.f32 %v2955, %v3160
        %v3162 = vpop.f32.mrf.mxu0
        %v3163 = vadd.f32 %v2959, %v3162
        %3164 = vdwg.mxu0
        %v3165 = vadd.f32 %v1652, %v3157
        %v3166 = vadd.f32 %v1653, %v3159
        %v3167 = vadd.f32 %v1654, %v3161
        %v3168 = vadd.f32 %v1655, %v3163
        %v3169 = vld [vmem:[%s1184] sm:$0x3]
        %v3170 = vld [vmem:[%s1193] sm:$0x3]
        %v3171 = vadd.f32 %v3165, %v3166
        %3172 = vadd.xlane.f32.xlu0 %v3171
        %v3173 = vpop.xlane.xlu0 %3172
        %v3174 = vadd.f32 %v3167, %v3168
        %3175 = vadd.xlane.f32.xlu0 %v3174
        %v3176 = vpop.xlane.xlu0 %3175
        %v3177 = vmul.f32 %v3173, %v1664
        %v3178 = vmul.f32 %v3176, %v1664
        %v3179 = vsub.f32 %v3165, %v3177
        %v3180 = vsub.f32 %v3166, %v3177
        %v3181 = vsub.f32 %v3167, %v3178
        %v3182 = vsub.f32 %v3168, %v3178
        %v3183 = vmul.f32 %v3179, %v3179
        %v3184 = vmul.f32 %v3180, %v3180
        %v3185 = vmul.f32 %v3181, %v3181
        %v3186 = vmul.f32 %v3182, %v3182
        %v3187 = vadd.f32 %v3183, %v3184
        %3188 = vadd.xlane.f32.xlu0 %v3187
        %v3189 = vpop.xlane.xlu0 %3188
        %v3190 = vadd.f32 %v3185, %v3186
        %3191 = vadd.xlane.f32.xlu0 %v3190
        %v3192 = vpop.xlane.xlu0 %3191
        %v3193 = vmul.f32 %v3189, %v1664
        %v3194 = vmul.f32 %v3192, %v1664
        %v3195 = vadd.f32 %v3193, 1e-06
        %v3196 = vadd.f32 %v3194, 1e-06
        %v3197 = vrsqrt.pop %v3195
        %v3198 = vrsqrt.pop %v3196
        %v3199 = vmul.f32 %v3179, %v3197
        %v3200 = vmul.f32 %v3180, %v3197
        %v3201 = vmul.f32 %v3181, %v3198
        %v3202 = vmul.f32 %v3182, %v3198
        %v3204 = vlaneseq
        %v3205 = vshrl.u32 %v3204, 7
        %v3206 = vsub.s32 0, %v3205
        %v3207 = vrot.slane %v3169, %v3206
        %v3208 = vlaneseq
        %v3209 = vshrl.u32 %v3208, 7
        %v3210 = vsub.s32 1, %v3209
        %v3211 = vrot.slane %v3169, %v3210
        %v3214 = vmul.f32 %v3199, %v3207
        %v3215 = vmul.f32 %v3200, %v3211
        %v3216 = vmul.f32 %v3201, %v3207
        %v3217 = vmul.f32 %v3202, %v3211
        %v3219 = vlaneseq
        %v3220 = vshrl.u32 %v3219, 7
        %v3221 = vsub.s32 0, %v3220
        %v3222 = vrot.slane %v3170, %v3221
        %v3223 = vlaneseq
        %v3224 = vshrl.u32 %v3223, 7
        %v3225 = vsub.s32 1, %v3224
        %v3226 = vrot.slane %v3170, %v3225
        %v3229 = vadd.f32 %v3214, %v3222
        %v3230 = vadd.f32 %v3215, %v3226
        %v3231 = vadd.f32 %v3216, %v3222
        %v3232 = vadd.f32 %v3217, %v3226
        %v3233 = vpack.c.bf16 %v3231, %v3229
        %v3234 = vpack.c.bf16 %v3232, %v3230
        %v3235 = vld [vmem:[%s1202] sm:$0xff]
        %v3236 = vld [vmem:[%s1202 + $0x8] sm:$0xff]
        %v3237 = vld [vmem:[%s1202 + $0x10] sm:$0xff]
        %v3238 = vld [vmem:[%s1202 + $0x18] sm:$0xff]
        %v3239 = vld [vmem:[%s1202 + $0x20] sm:$0xff]
        %v3240 = vld [vmem:[%s1202 + $0x28] sm:$0xff]
        %v3241 = vld [vmem:[%s1202 + $0x30] sm:$0xff]
        %v3242 = vld [vmem:[%s1202 + $0x38] sm:$0xff]
        %v3243 = vld [vmem:[%s1202 + $0x40] sm:$0xff]
        %v3244 = vld [vmem:[%s1202 + $0x48] sm:$0xff]
        %v3245 = vld [vmem:[%s1202 + $0x50] sm:$0xff]
        %v3246 = vld [vmem:[%s1202 + $0x58] sm:$0xff]
        %v3247 = vld [vmem:[%s1202 + $0x60] sm:$0xff]
        %v3248 = vld [vmem:[%s1202 + $0x68] sm:$0xff]
        %v3249 = vld [vmem:[%s1202 + $0x70] sm:$0xff]
        %v3250 = vld [vmem:[%s1202 + $0x78] sm:$0xff]
        %v3251 = vld [vmem:[%s1202 + $0x80] sm:$0xff]
        %v3252 = vld [vmem:[%s1202 + $0x88] sm:$0xff]
        %v3253 = vld [vmem:[%s1202 + $0x90] sm:$0xff]
        %v3254 = vld [vmem:[%s1202 + $0x98] sm:$0xff]
        %v3255 = vld [vmem:[%s1202 + $0xa0] sm:$0xff]
        %v3256 = vld [vmem:[%s1202 + $0xa8] sm:$0xff]
        %v3257 = vld [vmem:[%s1202 + $0xb0] sm:$0xff]
        %v3258 = vld [vmem:[%s1202 + $0xb8] sm:$0xff]
        %v3259 = vld [vmem:[%s1202 + $0xc0] sm:$0xff]
        %v3260 = vld [vmem:[%s1202 + $0xc8] sm:$0xff]
        %v3261 = vld [vmem:[%s1202 + $0xd0] sm:$0xff]
        %v3262 = vld [vmem:[%s1202 + $0xd8] sm:$0xff]
        %v3263 = vld [vmem:[%s1202 + $0xe0] sm:$0xff]
        %v3264 = vld [vmem:[%s1202 + $0xe8] sm:$0xff]
        %v3265 = vld [vmem:[%s1202 + $0xf0] sm:$0xff]
        %v3266 = vld [vmem:[%s1202 + $0xf8] sm:$0xff]
        %v3267 = vld [vmem:[%s1202 + $0x100] sm:$0xff]
        %v3268 = vld [vmem:[%s1202 + $0x108] sm:$0xff]
        %v3269 = vld [vmem:[%s1202 + $0x110] sm:$0xff]
        %v3270 = vld [vmem:[%s1202 + $0x118] sm:$0xff]
        %v3271 = vld [vmem:[%s1202 + $0x120] sm:$0xff]
        %v3272 = vld [vmem:[%s1202 + $0x128] sm:$0xff]
        %v3273 = vld [vmem:[%s1202 + $0x130] sm:$0xff]
        %v3274 = vld [vmem:[%s1202 + $0x138] sm:$0xff]
        %v3275 = vld [vmem:[%s1202 + $0x140] sm:$0xff]
        %v3276 = vld [vmem:[%s1202 + $0x148] sm:$0xff]
        %v3277 = vld [vmem:[%s1202 + $0x150] sm:$0xff]
        %v3278 = vld [vmem:[%s1202 + $0x158] sm:$0xff]
        %v3279 = vld [vmem:[%s1202 + $0x160] sm:$0xff]
        %v3280 = vld [vmem:[%s1202 + $0x168] sm:$0xff]
        %v3281 = vld [vmem:[%s1202 + $0x170] sm:$0xff]
        %v3282 = vld [vmem:[%s1202 + $0x178] sm:$0xff]
        %v3283 = vld [vmem:[%s1202 + $0x180] sm:$0xff]
        %v3284 = vld [vmem:[%s1202 + $0x188] sm:$0xff]
        %v3285 = vld [vmem:[%s1202 + $0x190] sm:$0xff]
        %v3286 = vld [vmem:[%s1202 + $0x198] sm:$0xff]
        %v3287 = vld [vmem:[%s1202 + $0x1a0] sm:$0xff]
        %v3288 = vld [vmem:[%s1202 + $0x1a8] sm:$0xff]
        %v3289 = vld [vmem:[%s1202 + $0x1b0] sm:$0xff]
        %v3290 = vld [vmem:[%s1202 + $0x1b8] sm:$0xff]
        %v3291 = vld [vmem:[%s1202 + $0x1c0] sm:$0xff]
        %v3292 = vld [vmem:[%s1202 + $0x1c8] sm:$0xff]
        %v3293 = vld [vmem:[%s1202 + $0x1d0] sm:$0xff]
        %v3294 = vld [vmem:[%s1202 + $0x1d8] sm:$0xff]
        %v3295 = vld [vmem:[%s1202 + $0x1e0] sm:$0xff]
        %v3296 = vld [vmem:[%s1202 + $0x1e8] sm:$0xff]
        %v3297 = vld [vmem:[%s1202 + $0x1f0] sm:$0xff]
        %v3298 = vld [vmem:[%s1202 + $0x1f8] sm:$0xff]
        %v3299 = vld [vmem:[%s1211] sm:$0xf]
        %v3301 = vlaneseq
        %v3302 = vshrl.u32 %v3301, 7
        %v3303 = vsub.s32 0, %v3302
        %v3304 = vrot.slane %v3299, %v3303
        %v3305 = vlaneseq
        %v3306 = vshrl.u32 %v3305, 7
        %v3307 = vsub.s32 1, %v3306
        %v3308 = vrot.slane %v3299, %v3307
        %v3309 = vlaneseq
        %v3310 = vshrl.u32 %v3309, 7
        %v3311 = vsub.s32 2, %v3310
        %v3312 = vrot.slane %v3299, %v3311
        %v3313 = vlaneseq
        %v3314 = vshrl.u32 %v3313, 7
        %v3315 = vsub.s32 3, %v3314
        %v3316 = vrot.slane %v3299, %v3315
        %v3385 = vunpack.c.l.b16 %v3235
        %v3386 = vunpack.c.h.b16 %v3235
        %v3387 = vunpack.c.l.b16 %v3236
        %v3388 = vunpack.c.h.b16 %v3236
        %v3389 = vunpack.c.l.b16 %v3237
        %v3390 = vunpack.c.h.b16 %v3237
        %v3391 = vunpack.c.l.b16 %v3238
        %v3392 = vunpack.c.h.b16 %v3238
        %v3393 = vunpack.c.l.b16 %v3239
        %v3394 = vunpack.c.h.b16 %v3239
        %v3395 = vunpack.c.l.b16 %v3240
        %v3396 = vunpack.c.h.b16 %v3240
        %v3397 = vunpack.c.l.b16 %v3241
        %v3398 = vunpack.c.h.b16 %v3241
        %v3399 = vunpack.c.l.b16 %v3242
        %v3400 = vunpack.c.h.b16 %v3242
        %v3401 = vunpack.c.l.b16 %v3243
        %v3402 = vunpack.c.h.b16 %v3243
        %v3403 = vunpack.c.l.b16 %v3244
        %v3404 = vunpack.c.h.b16 %v3244
        %v3405 = vunpack.c.l.b16 %v3245
        %v3406 = vunpack.c.h.b16 %v3245
        %v3407 = vunpack.c.l.b16 %v3246
        %v3408 = vunpack.c.h.b16 %v3246
        %v3409 = vunpack.c.l.b16 %v3247
        %v3410 = vunpack.c.h.b16 %v3247
        %v3411 = vunpack.c.l.b16 %v3248
        %v3412 = vunpack.c.h.b16 %v3248
        %v3413 = vunpack.c.l.b16 %v3249
        %v3414 = vunpack.c.h.b16 %v3249
        %v3415 = vunpack.c.l.b16 %v3250
        %v3416 = vunpack.c.h.b16 %v3250
        %v3417 = vunpack.c.l.b16 %v3251
        %v3418 = vunpack.c.h.b16 %v3251
        %v3419 = vunpack.c.l.b16 %v3252
        %v3420 = vunpack.c.h.b16 %v3252
        %v3421 = vunpack.c.l.b16 %v3253
        %v3422 = vunpack.c.h.b16 %v3253
        %v3423 = vunpack.c.l.b16 %v3254
        %v3424 = vunpack.c.h.b16 %v3254
        %v3425 = vunpack.c.l.b16 %v3255
        %v3426 = vunpack.c.h.b16 %v3255
        %v3427 = vunpack.c.l.b16 %v3256
        %v3428 = vunpack.c.h.b16 %v3256
        %v3429 = vunpack.c.l.b16 %v3257
        %v3430 = vunpack.c.h.b16 %v3257
        %v3431 = vunpack.c.l.b16 %v3258
        %v3432 = vunpack.c.h.b16 %v3258
        %v3433 = vunpack.c.l.b16 %v3259
        %v3434 = vunpack.c.h.b16 %v3259
        %v3435 = vunpack.c.l.b16 %v3260
        %v3436 = vunpack.c.h.b16 %v3260
        %v3437 = vunpack.c.l.b16 %v3261
        %v3438 = vunpack.c.h.b16 %v3261
        %v3439 = vunpack.c.l.b16 %v3262
        %v3440 = vunpack.c.h.b16 %v3262
        %v3441 = vunpack.c.l.b16 %v3263
        %v3442 = vunpack.c.h.b16 %v3263
        %v3443 = vunpack.c.l.b16 %v3264
        %v3444 = vunpack.c.h.b16 %v3264
        %v3445 = vunpack.c.l.b16 %v3265
        %v3446 = vunpack.c.h.b16 %v3265
        %v3447 = vunpack.c.l.b16 %v3266
        %v3448 = vunpack.c.h.b16 %v3266
        %v3449 = vunpack.c.l.b16 %v3267
        %v3450 = vunpack.c.h.b16 %v3267
        %v3451 = vunpack.c.l.b16 %v3268
        %v3452 = vunpack.c.h.b16 %v3268
        %v3453 = vunpack.c.l.b16 %v3269
        %v3454 = vunpack.c.h.b16 %v3269
        %v3455 = vunpack.c.l.b16 %v3270
        %v3456 = vunpack.c.h.b16 %v3270
        %v3457 = vunpack.c.l.b16 %v3271
        %v3458 = vunpack.c.h.b16 %v3271
        %v3459 = vunpack.c.l.b16 %v3272
        %v3460 = vunpack.c.h.b16 %v3272
        %v3461 = vunpack.c.l.b16 %v3273
        %v3462 = vunpack.c.h.b16 %v3273
        %v3463 = vunpack.c.l.b16 %v3274
        %v3464 = vunpack.c.h.b16 %v3274
        %v3465 = vunpack.c.l.b16 %v3275
        %v3466 = vunpack.c.h.b16 %v3275
        %v3467 = vunpack.c.l.b16 %v3276
        %v3468 = vunpack.c.h.b16 %v3276
        %v3469 = vunpack.c.l.b16 %v3277
        %v3470 = vunpack.c.h.b16 %v3277
        %v3471 = vunpack.c.l.b16 %v3278
        %v3472 = vunpack.c.h.b16 %v3278
        %v3473 = vunpack.c.l.b16 %v3279
        %v3474 = vunpack.c.h.b16 %v3279
        %v3475 = vunpack.c.l.b16 %v3280
        %v3476 = vunpack.c.h.b16 %v3280
        %v3477 = vunpack.c.l.b16 %v3281
        %v3478 = vunpack.c.h.b16 %v3281
        %v3479 = vunpack.c.l.b16 %v3282
        %v3480 = vunpack.c.h.b16 %v3282
        %v3481 = vunpack.c.l.b16 %v3283
        %v3482 = vunpack.c.h.b16 %v3283
        %v3483 = vunpack.c.l.b16 %v3284
        %v3484 = vunpack.c.h.b16 %v3284
        %v3485 = vunpack.c.l.b16 %v3285
        %v3486 = vunpack.c.h.b16 %v3285
        %v3487 = vunpack.c.l.b16 %v3286
        %v3488 = vunpack.c.h.b16 %v3286
        %v3489 = vunpack.c.l.b16 %v3287
        %v3490 = vunpack.c.h.b16 %v3287
        %v3491 = vunpack.c.l.b16 %v3288
        %v3492 = vunpack.c.h.b16 %v3288
        %v3493 = vunpack.c.l.b16 %v3289
        %v3494 = vunpack.c.h.b16 %v3289
        %v3495 = vunpack.c.l.b16 %v3290
        %v3496 = vunpack.c.h.b16 %v3290
        %v3497 = vunpack.c.l.b16 %v3291
        %v3498 = vunpack.c.h.b16 %v3291
        %v3499 = vunpack.c.l.b16 %v3292
        %v3500 = vunpack.c.h.b16 %v3292
        %v3501 = vunpack.c.l.b16 %v3293
        %v3502 = vunpack.c.h.b16 %v3293
        %v3503 = vunpack.c.l.b16 %v3294
        %v3504 = vunpack.c.h.b16 %v3294
        %v3505 = vunpack.c.l.b16 %v3295
        %v3506 = vunpack.c.h.b16 %v3295
        %v3507 = vunpack.c.l.b16 %v3296
        %v3508 = vunpack.c.h.b16 %v3296
        %v3509 = vunpack.c.l.b16 %v3297
        %v3510 = vunpack.c.h.b16 %v3297
        %v3511 = vunpack.c.l.b16 %v3298
        %v3512 = vunpack.c.h.b16 %v3298
        %v3513 = vpack.c.b16 %v3389, %v3385
        %v3514 = vpack.c.b16 %v3390, %v3386
        %v3515 = vpack.c.b16 %v3391, %v3387
        %v3516 = vpack.c.b16 %v3392, %v3388
        %v3517 = vpack.c.b16 %v3397, %v3393
        %v3518 = vpack.c.b16 %v3398, %v3394
        %v3519 = vpack.c.b16 %v3399, %v3395
        %v3520 = vpack.c.b16 %v3400, %v3396
        %v3521 = vpack.c.b16 %v3405, %v3401
        %v3522 = vpack.c.b16 %v3406, %v3402
        %v3523 = vpack.c.b16 %v3407, %v3403
        %v3524 = vpack.c.b16 %v3408, %v3404
        %v3525 = vpack.c.b16 %v3413, %v3409
        %v3526 = vpack.c.b16 %v3414, %v3410
        %v3527 = vpack.c.b16 %v3415, %v3411
        %v3528 = vpack.c.b16 %v3416, %v3412
        %v3529 = vpack.c.b16 %v3421, %v3417
        %v3530 = vpack.c.b16 %v3422, %v3418
        %v3531 = vpack.c.b16 %v3423, %v3419
        %v3532 = vpack.c.b16 %v3424, %v3420
        %v3533 = vpack.c.b16 %v3429, %v3425
        %v3534 = vpack.c.b16 %v3430, %v3426
        %v3535 = vpack.c.b16 %v3431, %v3427
        %v3536 = vpack.c.b16 %v3432, %v3428
        %v3537 = vpack.c.b16 %v3437, %v3433
        %v3538 = vpack.c.b16 %v3438, %v3434
        %v3539 = vpack.c.b16 %v3439, %v3435
        %v3540 = vpack.c.b16 %v3440, %v3436
        %v3541 = vpack.c.b16 %v3445, %v3441
        %v3542 = vpack.c.b16 %v3446, %v3442
        %v3543 = vpack.c.b16 %v3447, %v3443
        %v3544 = vpack.c.b16 %v3448, %v3444
        %v3545 = vpack.c.b16 %v3453, %v3449
        %v3546 = vpack.c.b16 %v3454, %v3450
        %v3547 = vpack.c.b16 %v3455, %v3451
        %v3548 = vpack.c.b16 %v3456, %v3452
        %v3549 = vpack.c.b16 %v3461, %v3457
        %v3550 = vpack.c.b16 %v3462, %v3458
        %v3551 = vpack.c.b16 %v3463, %v3459
        %v3552 = vpack.c.b16 %v3464, %v3460
        %v3553 = vpack.c.b16 %v3469, %v3465
        %v3554 = vpack.c.b16 %v3470, %v3466
        %v3555 = vpack.c.b16 %v3471, %v3467
        %v3556 = vpack.c.b16 %v3472, %v3468
        %v3557 = vpack.c.b16 %v3477, %v3473
        %v3558 = vpack.c.b16 %v3478, %v3474
        %v3559 = vpack.c.b16 %v3479, %v3475
        %v3560 = vpack.c.b16 %v3480, %v3476
        %v3561 = vpack.c.b16 %v3485, %v3481
        %v3562 = vpack.c.b16 %v3486, %v3482
        %v3563 = vpack.c.b16 %v3487, %v3483
        %v3564 = vpack.c.b16 %v3488, %v3484
        %v3565 = vpack.c.b16 %v3493, %v3489
        %v3566 = vpack.c.b16 %v3494, %v3490
        %v3567 = vpack.c.b16 %v3495, %v3491
        %v3568 = vpack.c.b16 %v3496, %v3492
        %v3569 = vpack.c.b16 %v3501, %v3497
        %v3570 = vpack.c.b16 %v3502, %v3498
        %v3571 = vpack.c.b16 %v3503, %v3499
        %v3572 = vpack.c.b16 %v3504, %v3500
        %v3573 = vpack.c.b16 %v3509, %v3505
        %v3574 = vpack.c.b16 %v3510, %v3506
        %v3575 = vpack.c.b16 %v3511, %v3507
        %v3576 = vpack.c.b16 %v3512, %v3508
        %3641 = vmatprep.subr.bf16.mxu0 %v3542
        %3642 = vmatpush1.bf16.msra.mxu0 %v3541
        %3643 = vmatprep.subr.bf16.mxu0 %v3538
        %3644 = vmatpush1.bf16.msra.mxu0 %v3537
        %3645 = vmatprep.subr.bf16.mxu0 %v3534
        %3646 = vmatpush1.bf16.msra.mxu0 %v3533
        %3647 = vmatprep.subr.bf16.mxu0 %v3530
        %3648 = vmatpush1.bf16.msra.mxu0 %v3529
        %3649 = vmatprep.subr.bf16.mxu0 %v3526
        %3650 = vmatpush1.bf16.msra.mxu0 %v3525
        %3651 = vmatprep.subr.bf16.mxu0 %v3522
        %3652 = vmatpush1.bf16.msra.mxu0 %v3521
        %3653 = vmatprep.subr.bf16.mxu0 %v3518
        %3654 = vmatpush1.bf16.msra.mxu0 %v3517
        %3655 = vmatprep.subr.bf16.mxu0 %v3514
        %3656 = vmatpush1.bf16.msra.mxu0 %v3513
        %3657 = vmatprep.subr.bf16.mxu0 %v3574
        %3658 = vmatpush2.bf16.msra.mxu0 %v3573
        %3659 = vmatprep.subr.bf16.mxu0 %v3570
        %3660 = vmatpush2.bf16.msra.mxu0 %v3569
        %3661 = vmatprep.subr.bf16.mxu0 %v3566
        %3662 = vmatpush2.bf16.msra.mxu0 %v3565
        %3663 = vmatprep.subr.bf16.mxu0 %v3562
        %3664 = vmatpush2.bf16.msra.mxu0 %v3561
        %3665 = vmatprep.subr.bf16.mxu0 %v3558
        %3666 = vmatpush2.bf16.msra.mxu0 %v3557
        %3667 = vmatprep.subr.bf16.mxu0 %v3554
        %3668 = vmatpush2.bf16.msra.mxu0 %v3553
        %3669 = vmatprep.subr.bf16.mxu0 %v3550
        %3670 = vmatpush2.bf16.msra.mxu0 %v3549
        %3671 = vmatprep.subr.bf16.mxu0 %v3546
        %3672 = vmatpush2.bf16.msra.mxu0 %v3545
        %3673 = vmatprep.mubr.bf16.mxu0 %v3234
        %3674 = vmatmul.mubr.bf16.gmra.mxu0 %v3233
        %v3675 = vpop.f32.mrf.mxu0
        %v3676 = vadd.f32 %v3304, %v3675
        %v3677 = vpop.f32.mrf.mxu0
        %v3678 = vadd.f32 %v3308, %v3677
        %v3679 = vpop.f32.mrf.mxu0
        %v3680 = vadd.f32 %v3304, %v3679
        %v3681 = vpop.f32.mrf.mxu0
        %v3682 = vadd.f32 %v3308, %v3681
        %3683 = vdwg.mxu0
        %3684 = vmatprep.subr.bf16.mxu0 %v3544
        %3685 = vmatpush1.bf16.msra.mxu0 %v3543
        %3686 = vmatprep.subr.bf16.mxu0 %v3540
        %3687 = vmatpush1.bf16.msra.mxu0 %v3539
        %3688 = vmatprep.subr.bf16.mxu0 %v3536
        %3689 = vmatpush1.bf16.msra.mxu0 %v3535
        %3690 = vmatprep.subr.bf16.mxu0 %v3532
        %3691 = vmatpush1.bf16.msra.mxu0 %v3531
        %3692 = vmatprep.subr.bf16.mxu0 %v3528
        %3693 = vmatpush1.bf16.msra.mxu0 %v3527
        %3694 = vmatprep.subr.bf16.mxu0 %v3524
        %3695 = vmatpush1.bf16.msra.mxu0 %v3523
        %3696 = vmatprep.subr.bf16.mxu0 %v3520
        %3697 = vmatpush1.bf16.msra.mxu0 %v3519
        %3698 = vmatprep.subr.bf16.mxu0 %v3516
        %3699 = vmatpush1.bf16.msra.mxu0 %v3515
        %3700 = vmatprep.subr.bf16.mxu0 %v3576
        %3701 = vmatpush2.bf16.msra.mxu0 %v3575
        %3702 = vmatprep.subr.bf16.mxu0 %v3572
        %3703 = vmatpush2.bf16.msra.mxu0 %v3571
        %3704 = vmatprep.subr.bf16.mxu0 %v3568
        %3705 = vmatpush2.bf16.msra.mxu0 %v3567
        %3706 = vmatprep.subr.bf16.mxu0 %v3564
        %3707 = vmatpush2.bf16.msra.mxu0 %v3563
        %3708 = vmatprep.subr.bf16.mxu0 %v3560
        %3709 = vmatpush2.bf16.msra.mxu0 %v3559
        %3710 = vmatprep.subr.bf16.mxu0 %v3556
        %3711 = vmatpush2.bf16.msra.mxu0 %v3555
        %3712 = vmatprep.subr.bf16.mxu0 %v3552
        %3713 = vmatpush2.bf16.msra.mxu0 %v3551
        %3714 = vmatprep.subr.bf16.mxu0 %v3548
        %3715 = vmatpush2.bf16.msra.mxu0 %v3547
        %3716 = vmatprep.mubr.bf16.mxu0 %v3234
        %3717 = vmatmul.mubr.bf16.gmra.mxu0 %v3233
        %v3718 = vpop.f32.mrf.mxu0
        %v3719 = vadd.f32 %v3312, %v3718
        %v3720 = vpop.f32.mrf.mxu0
        %v3721 = vadd.f32 %v3316, %v3720
        %v3722 = vpop.f32.mrf.mxu0
        %v3723 = vadd.f32 %v3312, %v3722
        %v3724 = vpop.f32.mrf.mxu0
        %v3725 = vadd.f32 %v3316, %v3724
        %3726 = vdwg.mxu0
        %v3727 = vmul.f32 %v3676, %v3676
        %v3728 = vmul.f32 %v3678, %v3678
        %v3729 = vmul.f32 %v3719, %v3719
        %v3730 = vmul.f32 %v3721, %v3721
        %v3731 = vmul.f32 %v3680, %v3680
        %v3732 = vmul.f32 %v3682, %v3682
        %v3733 = vmul.f32 %v3723, %v3723
        %v3734 = vmul.f32 %v3725, %v3725
        %v3735 = vmul.f32 %v3676, %v3727
        %v3736 = vmul.f32 %v3678, %v3728
        %v3737 = vmul.f32 %v3719, %v3729
        %v3738 = vmul.f32 %v3721, %v3730
        %v3739 = vmul.f32 %v3680, %v3731
        %v3740 = vmul.f32 %v3682, %v3732
        %v3741 = vmul.f32 %v3723, %v3733
        %v3742 = vmul.f32 %v3725, %v3734
        %v3743 = vmul.f32 %v3735, 0.044715
        %v3744 = vmul.f32 %v3736, 0.044715
        %v3745 = vmul.f32 %v3737, 0.044715
        %v3746 = vmul.f32 %v3738, 0.044715
        %v3747 = vmul.f32 %v3739, 0.044715
        %v3748 = vmul.f32 %v3740, 0.044715
        %v3749 = vmul.f32 %v3741, 0.044715
        %v3750 = vmul.f32 %v3742, 0.044715
        %v3751 = vadd.f32 %v3676, %v3743
        %v3752 = vadd.f32 %v3678, %v3744
        %v3753 = vadd.f32 %v3719, %v3745
        %v3754 = vadd.f32 %v3721, %v3746
        %v3755 = vadd.f32 %v3680, %v3747
        %v3756 = vadd.f32 %v3682, %v3748
        %v3757 = vadd.f32 %v3723, %v3749
        %v3758 = vadd.f32 %v3725, %v3750
        %v3759 = vmul.f32 %v3751, 0.7978846
        %v3760 = vmul.f32 %v3752, 0.7978846
        %v3761 = vmul.f32 %v3753, 0.7978846
        %v3762 = vmul.f32 %v3754, 0.7978846
        %v3763 = vmul.f32 %v3755, 0.7978846
        %v3764 = vmul.f32 %v3756, 0.7978846
        %v3765 = vmul.f32 %v3757, 0.7978846
        %v3766 = vmul.f32 %v3758, 0.7978846
        %v3767 = vtanh.pop %v3759
        %v3768 = vtanh.pop %v3760
        %v3769 = vtanh.pop %v3761
        %v3770 = vtanh.pop %v3762
        %v3771 = vtanh.pop %v3763
        %v3772 = vtanh.pop %v3764
        %v3773 = vtanh.pop %v3765
        %v3774 = vtanh.pop %v3766
        %v3775 = vadd.f32 %v3767, 1.0
        %v3776 = vadd.f32 %v3768, 1.0
        %v3777 = vadd.f32 %v3769, 1.0
        %v3778 = vadd.f32 %v3770, 1.0
        %v3779 = vadd.f32 %v3771, 1.0
        %v3780 = vadd.f32 %v3772, 1.0
        %v3781 = vadd.f32 %v3773, 1.0
        %v3782 = vadd.f32 %v3774, 1.0
        %v3783 = vmul.f32 %v3775, 0.5
        %v3784 = vmul.f32 %v3776, 0.5
        %v3785 = vmul.f32 %v3777, 0.5
        %v3786 = vmul.f32 %v3778, 0.5
        %v3787 = vmul.f32 %v3779, 0.5
        %v3788 = vmul.f32 %v3780, 0.5
        %v3789 = vmul.f32 %v3781, 0.5
        %v3790 = vmul.f32 %v3782, 0.5
        %v3791 = vmul.f32 %v3676, %v3783
        %v3792 = vmul.f32 %v3678, %v3784
        %v3793 = vmul.f32 %v3719, %v3785
        %v3794 = vmul.f32 %v3721, %v3786
        %v3795 = vmul.f32 %v3680, %v3787
        %v3796 = vmul.f32 %v3682, %v3788
        %v3797 = vmul.f32 %v3723, %v3789
        %v3798 = vmul.f32 %v3725, %v3790
        %v3799 = vpack.c.bf16 %v3795, %v3791
        %v3800 = vpack.c.bf16 %v3796, %v3792
        %v3801 = vpack.c.bf16 %v3797, %v3793
        %v3802 = vpack.c.bf16 %v3798, %v3794
        %v3803 = vld [vmem:[%s1220] sm:$0xff]
        %v3804 = vld [vmem:[%s1220 + $0x8] sm:$0xff]
        %v3805 = vld [vmem:[%s1220 + $0x10] sm:$0xff]
        %v3806 = vld [vmem:[%s1220 + $0x18] sm:$0xff]
        %v3807 = vld [vmem:[%s1220 + $0x20] sm:$0xff]
        %v3808 = vld [vmem:[%s1220 + $0x28] sm:$0xff]
        %v3809 = vld [vmem:[%s1220 + $0x30] sm:$0xff]
        %v3810 = vld [vmem:[%s1220 + $0x38] sm:$0xff]
        %v3811 = vld [vmem:[%s1220 + $0x40] sm:$0xff]
        %v3812 = vld [vmem:[%s1220 + $0x48] sm:$0xff]
        %v3813 = vld [vmem:[%s1220 + $0x50] sm:$0xff]
        %v3814 = vld [vmem:[%s1220 + $0x58] sm:$0xff]
        %v3815 = vld [vmem:[%s1220 + $0x60] sm:$0xff]
        %v3816 = vld [vmem:[%s1220 + $0x68] sm:$0xff]
        %v3817 = vld [vmem:[%s1220 + $0x70] sm:$0xff]
        %v3818 = vld [vmem:[%s1220 + $0x78] sm:$0xff]
        %v3819 = vld [vmem:[%s1220 + $0x80] sm:$0xff]
        %v3820 = vld [vmem:[%s1220 + $0x88] sm:$0xff]
        %v3821 = vld [vmem:[%s1220 + $0x90] sm:$0xff]
        %v3822 = vld [vmem:[%s1220 + $0x98] sm:$0xff]
        %v3823 = vld [vmem:[%s1220 + $0xa0] sm:$0xff]
        %v3824 = vld [vmem:[%s1220 + $0xa8] sm:$0xff]
        %v3825 = vld [vmem:[%s1220 + $0xb0] sm:$0xff]
        %v3826 = vld [vmem:[%s1220 + $0xb8] sm:$0xff]
        %v3827 = vld [vmem:[%s1220 + $0xc0] sm:$0xff]
        %v3828 = vld [vmem:[%s1220 + $0xc8] sm:$0xff]
        %v3829 = vld [vmem:[%s1220 + $0xd0] sm:$0xff]
        %v3830 = vld [vmem:[%s1220 + $0xd8] sm:$0xff]
        %v3831 = vld [vmem:[%s1220 + $0xe0] sm:$0xff]
        %v3832 = vld [vmem:[%s1220 + $0xe8] sm:$0xff]
        %v3833 = vld [vmem:[%s1220 + $0xf0] sm:$0xff]
        %v3834 = vld [vmem:[%s1220 + $0xf8] sm:$0xff]
        %v3835 = vld [vmem:[%s1220 + $0x100] sm:$0xff]
        %v3836 = vld [vmem:[%s1220 + $0x108] sm:$0xff]
        %v3837 = vld [vmem:[%s1220 + $0x110] sm:$0xff]
        %v3838 = vld [vmem:[%s1220 + $0x118] sm:$0xff]
        %v3839 = vld [vmem:[%s1220 + $0x120] sm:$0xff]
        %v3840 = vld [vmem:[%s1220 + $0x128] sm:$0xff]
        %v3841 = vld [vmem:[%s1220 + $0x130] sm:$0xff]
        %v3842 = vld [vmem:[%s1220 + $0x138] sm:$0xff]
        %v3843 = vld [vmem:[%s1220 + $0x140] sm:$0xff]
        %v3844 = vld [vmem:[%s1220 + $0x148] sm:$0xff]
        %v3845 = vld [vmem:[%s1220 + $0x150] sm:$0xff]
        %v3846 = vld [vmem:[%s1220 + $0x158] sm:$0xff]
        %v3847 = vld [vmem:[%s1220 + $0x160] sm:$0xff]
        %v3848 = vld [vmem:[%s1220 + $0x168] sm:$0xff]
        %v3849 = vld [vmem:[%s1220 + $0x170] sm:$0xff]
        %v3850 = vld [vmem:[%s1220 + $0x178] sm:$0xff]
        %v3851 = vld [vmem:[%s1220 + $0x180] sm:$0xff]
        %v3852 = vld [vmem:[%s1220 + $0x188] sm:$0xff]
        %v3853 = vld [vmem:[%s1220 + $0x190] sm:$0xff]
        %v3854 = vld [vmem:[%s1220 + $0x198] sm:$0xff]
        %v3855 = vld [vmem:[%s1220 + $0x1a0] sm:$0xff]
        %v3856 = vld [vmem:[%s1220 + $0x1a8] sm:$0xff]
        %v3857 = vld [vmem:[%s1220 + $0x1b0] sm:$0xff]
        %v3858 = vld [vmem:[%s1220 + $0x1b8] sm:$0xff]
        %v3859 = vld [vmem:[%s1220 + $0x1c0] sm:$0xff]
        %v3860 = vld [vmem:[%s1220 + $0x1c8] sm:$0xff]
        %v3861 = vld [vmem:[%s1220 + $0x1d0] sm:$0xff]
        %v3862 = vld [vmem:[%s1220 + $0x1d8] sm:$0xff]
        %v3863 = vld [vmem:[%s1220 + $0x1e0] sm:$0xff]
        %v3864 = vld [vmem:[%s1220 + $0x1e8] sm:$0xff]
        %v3865 = vld [vmem:[%s1220 + $0x1f0] sm:$0xff]
        %v3866 = vld [vmem:[%s1220 + $0x1f8] sm:$0xff]
        %v3867 = vld [vmem:[%s1229] sm:$0x3]
        %v3869 = vlaneseq
        %v3870 = vshrl.u32 %v3869, 7
        %v3871 = vsub.s32 0, %v3870
        %v3872 = vrot.slane %v3867, %v3871
        %v3873 = vlaneseq
        %v3874 = vshrl.u32 %v3873, 7
        %v3875 = vsub.s32 1, %v3874
        %v3876 = vrot.slane %v3867, %v3875
        %v3943 = vunpack.c.l.b16 %v3803
        %v3944 = vunpack.c.h.b16 %v3803
        %v3945 = vunpack.c.l.b16 %v3804
        %v3946 = vunpack.c.h.b16 %v3804
        %v3947 = vunpack.c.l.b16 %v3805
        %v3948 = vunpack.c.h.b16 %v3805
        %v3949 = vunpack.c.l.b16 %v3806
        %v3950 = vunpack.c.h.b16 %v3806
        %v3951 = vunpack.c.l.b16 %v3807
        %v3952 = vunpack.c.h.b16 %v3807
        %v3953 = vunpack.c.l.b16 %v3808
        %v3954 = vunpack.c.h.b16 %v3808
        %v3955 = vunpack.c.l.b16 %v3809
        %v3956 = vunpack.c.h.b16 %v3809
        %v3957 = vunpack.c.l.b16 %v3810
        %v3958 = vunpack.c.h.b16 %v3810
        %v3959 = vunpack.c.l.b16 %v3811
        %v3960 = vunpack.c.h.b16 %v3811
        %v3961 = vunpack.c.l.b16 %v3812
        %v3962 = vunpack.c.h.b16 %v3812
        %v3963 = vunpack.c.l.b16 %v3813
        %v3964 = vunpack.c.h.b16 %v3813
        %v3965 = vunpack.c.l.b16 %v3814
        %v3966 = vunpack.c.h.b16 %v3814
        %v3967 = vunpack.c.l.b16 %v3815
        %v3968 = vunpack.c.h.b16 %v3815
        %v3969 = vunpack.c.l.b16 %v3816
        %v3970 = vunpack.c.h.b16 %v3816
        %v3971 = vunpack.c.l.b16 %v3817
        %v3972 = vunpack.c.h.b16 %v3817
        %v3973 = vunpack.c.l.b16 %v3818
        %v3974 = vunpack.c.h.b16 %v3818
        %v3975 = vunpack.c.l.b16 %v3819
        %v3976 = vunpack.c.h.b16 %v3819
        %v3977 = vunpack.c.l.b16 %v3820
        %v3978 = vunpack.c.h.b16 %v3820
        %v3979 = vunpack.c.l.b16 %v3821
        %v3980 = vunpack.c.h.b16 %v3821
        %v3981 = vunpack.c.l.b16 %v3822
        %v3982 = vunpack.c.h.b16 %v3822
        %v3983 = vunpack.c.l.b16 %v3823
        %v3984 = vunpack.c.h.b16 %v3823
        %v3985 = vunpack.c.l.b16 %v3824
        %v3986 = vunpack.c.h.b16 %v3824
        %v3987 = vunpack.c.l.b16 %v3825
        %v3988 = vunpack.c.h.b16 %v3825
        %v3989 = vunpack.c.l.b16 %v3826
        %v3990 = vunpack.c.h.b16 %v3826
        %v3991 = vunpack.c.l.b16 %v3827
        %v3992 = vunpack.c.h.b16 %v3827
        %v3993 = vunpack.c.l.b16 %v3828
        %v3994 = vunpack.c.h.b16 %v3828
        %v3995 = vunpack.c.l.b16 %v3829
        %v3996 = vunpack.c.h.b16 %v3829
        %v3997 = vunpack.c.l.b16 %v3830
        %v3998 = vunpack.c.h.b16 %v3830
        %v3999 = vunpack.c.l.b16 %v3831
        %v4000 = vunpack.c.h.b16 %v3831
        %v4001 = vunpack.c.l.b16 %v3832
        %v4002 = vunpack.c.h.b16 %v3832
        %v4003 = vunpack.c.l.b16 %v3833
        %v4004 = vunpack.c.h.b16 %v3833
        %v4005 = vunpack.c.l.b16 %v3834
        %v4006 = vunpack.c.h.b16 %v3834
        %v4007 = vunpack.c.l.b16 %v3835
        %v4008 = vunpack.c.h.b16 %v3835
        %v4009 = vunpack.c.l.b16 %v3836
        %v4010 = vunpack.c.h.b16 %v3836
        %v4011 = vunpack.c.l.b16 %v3837
        %v4012 = vunpack.c.h.b16 %v3837
        %v4013 = vunpack.c.l.b16 %v3838
        %v4014 = vunpack.c.h.b16 %v3838
        %v4015 = vunpack.c.l.b16 %v3839
        %v4016 = vunpack.c.h.b16 %v3839
        %v4017 = vunpack.c.l.b16 %v3840
        %v4018 = vunpack.c.h.b16 %v3840
        %v4019 = vunpack.c.l.b16 %v3841
        %v4020 = vunpack.c.h.b16 %v3841
        %v4021 = vunpack.c.l.b16 %v3842
        %v4022 = vunpack.c.h.b16 %v3842
        %v4023 = vunpack.c.l.b16 %v3843
        %v4024 = vunpack.c.h.b16 %v3843
        %v4025 = vunpack.c.l.b16 %v3844
        %v4026 = vunpack.c.h.b16 %v3844
        %v4027 = vunpack.c.l.b16 %v3845
        %v4028 = vunpack.c.h.b16 %v3845
        %v4029 = vunpack.c.l.b16 %v3846
        %v4030 = vunpack.c.h.b16 %v3846
        %v4031 = vunpack.c.l.b16 %v3847
        %v4032 = vunpack.c.h.b16 %v3847
        %v4033 = vunpack.c.l.b16 %v3848
        %v4034 = vunpack.c.h.b16 %v3848
        %v4035 = vunpack.c.l.b16 %v3849
        %v4036 = vunpack.c.h.b16 %v3849
        %v4037 = vunpack.c.l.b16 %v3850
        %v4038 = vunpack.c.h.b16 %v3850
        %v4039 = vunpack.c.l.b16 %v3851
        %v4040 = vunpack.c.h.b16 %v3851
        %v4041 = vunpack.c.l.b16 %v3852
        %v4042 = vunpack.c.h.b16 %v3852
        %v4043 = vunpack.c.l.b16 %v3853
        %v4044 = vunpack.c.h.b16 %v3853
        %v4045 = vunpack.c.l.b16 %v3854
        %v4046 = vunpack.c.h.b16 %v3854
        %v4047 = vunpack.c.l.b16 %v3855
        %v4048 = vunpack.c.h.b16 %v3855
        %v4049 = vunpack.c.l.b16 %v3856
        %v4050 = vunpack.c.h.b16 %v3856
        %v4051 = vunpack.c.l.b16 %v3857
        %v4052 = vunpack.c.h.b16 %v3857
        %v4053 = vunpack.c.l.b16 %v3858
        %v4054 = vunpack.c.h.b16 %v3858
        %v4055 = vunpack.c.l.b16 %v3859
        %v4056 = vunpack.c.h.b16 %v3859
        %v4057 = vunpack.c.l.b16 %v3860
        %v4058 = vunpack.c.h.b16 %v3860
        %v4059 = vunpack.c.l.b16 %v3861
        %v4060 = vunpack.c.h.b16 %v3861
        %v4061 = vunpack.c.l.b16 %v3862
        %v4062 = vunpack.c.h.b16 %v3862
        %v4063 = vunpack.c.l.b16 %v3863
        %v4064 = vunpack.c.h.b16 %v3863
        %v4065 = vunpack.c.l.b16 %v3864
        %v4066 = vunpack.c.h.b16 %v3864
        %v4067 = vunpack.c.l.b16 %v3865
        %v4068 = vunpack.c.h.b16 %v3865
        %v4069 = vunpack.c.l.b16 %v3866
        %v4070 = vunpack.c.h.b16 %v3866
        %v4071 = vpack.c.b16 %v3945, %v3943
        %v4072 = vpack.c.b16 %v3946, %v3944
        %v4073 = vpack.c.b16 %v3949, %v3947
        %v4074 = vpack.c.b16 %v3950, %v3948
        %v4075 = vpack.c.b16 %v3953, %v3951
        %v4076 = vpack.c.b16 %v3954, %v3952
        %v4077 = vpack.c.b16 %v3957, %v3955
        %v4078 = vpack.c.b16 %v3958, %v3956
        %v4079 = vpack.c.b16 %v3961, %v3959
        %v4080 = vpack.c.b16 %v3962, %v3960
        %v4081 = vpack.c.b16 %v3965, %v3963
        %v4082 = vpack.c.b16 %v3966, %v3964
        %v4083 = vpack.c.b16 %v3969, %v3967
        %v4084 = vpack.c.b16 %v3970, %v3968
        %v4085 = vpack.c.b16 %v3973, %v3971
        %v4086 = vpack.c.b16 %v3974, %v3972
        %v4087 = vpack.c.b16 %v3977, %v3975
        %v4088 = vpack.c.b16 %v3978, %v3976
        %v4089 = vpack.c.b16 %v3981, %v3979
        %v4090 = vpack.c.b16 %v3982, %v3980
        %v4091 = vpack.c.b16 %v3985, %v3983
        %v4092 = vpack.c.b16 %v3986, %v3984
        %v4093 = vpack.c.b16 %v3989, %v3987
        %v4094 = vpack.c.b16 %v3990, %v3988
        %v4095 = vpack.c.b16 %v3993, %v3991
        %v4096 = vpack.c.b16 %v3994, %v3992
        %v4097 = vpack.c.b16 %v3997, %v3995
        %v4098 = vpack.c.b16 %v3998, %v3996
        %v4099 = vpack.c.b16 %v4001, %v3999
        %v4100 = vpack.c.b16 %v4002, %v4000
        %v4101 = vpack.c.b16 %v4005, %v4003
        %v4102 = vpack.c.b16 %v4006, %v4004
        %v4103 = vpack.c.b16 %v4009, %v4007
        %v4104 = vpack.c.b16 %v4010, %v4008
        %v4105 = vpack.c.b16 %v4013, %v4011
        %v4106 = vpack.c.b16 %v4014, %v4012
        %v4107 = vpack.c.b16 %v4017, %v4015
        %v4108 = vpack.c.b16 %v4018, %v4016
        %v4109 = vpack.c.b16 %v4021, %v4019
        %v4110 = vpack.c.b16 %v4022, %v4020
        %v4111 = vpack.c.b16 %v4025, %v4023
        %v4112 = vpack.c.b16 %v4026, %v4024
        %v4113 = vpack.c.b16 %v4029, %v4027
        %v4114 = vpack.c.b16 %v4030, %v4028
        %v4115 = vpack.c.b16 %v4033, %v4031
        %v4116 = vpack.c.b16 %v4034, %v4032
        %v4117 = vpack.c.b16 %v4037, %v4035
        %v4118 = vpack.c.b16 %v4038, %v4036
        %v4119 = vpack.c.b16 %v4041, %v4039
        %v4120 = vpack.c.b16 %v4042, %v4040
        %v4121 = vpack.c.b16 %v4045, %v4043
        %v4122 = vpack.c.b16 %v4046, %v4044
        %v4123 = vpack.c.b16 %v4049, %v4047
        %v4124 = vpack.c.b16 %v4050, %v4048
        %v4125 = vpack.c.b16 %v4053, %v4051
        %v4126 = vpack.c.b16 %v4054, %v4052
        %v4127 = vpack.c.b16 %v4057, %v4055
        %v4128 = vpack.c.b16 %v4058, %v4056
        %v4129 = vpack.c.b16 %v4061, %v4059
        %v4130 = vpack.c.b16 %v4062, %v4060
        %v4131 = vpack.c.b16 %v4065, %v4063
        %v4132 = vpack.c.b16 %v4066, %v4064
        %v4133 = vpack.c.b16 %v4069, %v4067
        %v4134 = vpack.c.b16 %v4070, %v4068
        %4199 = vmatprep.subr.bf16.mxu0 %v4086
        %4200 = vmatpush1.bf16.msra.mxu0 %v4085
        %4201 = vmatprep.subr.bf16.mxu0 %v4084
        %4202 = vmatpush1.bf16.msra.mxu0 %v4083
        %4203 = vmatprep.subr.bf16.mxu0 %v4082
        %4204 = vmatpush1.bf16.msra.mxu0 %v4081
        %4205 = vmatprep.subr.bf16.mxu0 %v4080
        %4206 = vmatpush1.bf16.msra.mxu0 %v4079
        %4207 = vmatprep.subr.bf16.mxu0 %v4078
        %4208 = vmatpush1.bf16.msra.mxu0 %v4077
        %4209 = vmatprep.subr.bf16.mxu0 %v4076
        %4210 = vmatpush1.bf16.msra.mxu0 %v4075
        %4211 = vmatprep.subr.bf16.mxu0 %v4074
        %4212 = vmatpush1.bf16.msra.mxu0 %v4073
        %4213 = vmatprep.subr.bf16.mxu0 %v4072
        %4214 = vmatpush1.bf16.msra.mxu0 %v4071
        %4215 = vmatprep.subr.bf16.mxu0 %v4102
        %4216 = vmatpush2.bf16.msra.mxu0 %v4101
        %4217 = vmatprep.subr.bf16.mxu0 %v4100
        %4218 = vmatpush2.bf16.msra.mxu0 %v4099
        %4219 = vmatprep.subr.bf16.mxu0 %v4098
        %4220 = vmatpush2.bf16.msra.mxu0 %v4097
        %4221 = vmatprep.subr.bf16.mxu0 %v4096
        %4222 = vmatpush2.bf16.msra.mxu0 %v4095
        %4223 = vmatprep.subr.bf16.mxu0 %v4094
        %4224 = vmatpush2.bf16.msra.mxu0 %v4093
        %4225 = vmatprep.subr.bf16.mxu0 %v4092
        %4226 = vmatpush2.bf16.msra.mxu0 %v4091
        %4227 = vmatprep.subr.bf16.mxu0 %v4090
        %4228 = vmatpush2.bf16.msra.mxu0 %v4089
        %4229 = vmatprep.subr.bf16.mxu0 %v4088
        %4230 = vmatpush2.bf16.msra.mxu0 %v4087
        %4231 = vmatprep.mubr.bf16.mxu0 %v3800
        %4232 = vmatmul.mubr.bf16.gmra.mxu0 %v3799
        %v4233 = vpop.f32.mrf.mxu0
        %v4234 = vadd.f32 %v3872, %v4233
        %v4235 = vpop.f32.mrf.mxu0
        %v4236 = vadd.f32 %v3876, %v4235
        %v4237 = vpop.f32.mrf.mxu0
        %v4238 = vadd.f32 %v3872, %v4237
        %v4239 = vpop.f32.mrf.mxu0
        %v4240 = vadd.f32 %v3876, %v4239
        %4241 = vdwg.mxu0
        %4242 = vmatprep.subr.bf16.mxu0 %v4118
        %4243 = vmatpush1.bf16.msra.mxu0 %v4117
        %4244 = vmatprep.subr.bf16.mxu0 %v4116
        %4245 = vmatpush1.bf16.msra.mxu0 %v4115
        %4246 = vmatprep.subr.bf16.mxu0 %v4114
        %4247 = vmatpush1.bf16.msra.mxu0 %v4113
        %4248 = vmatprep.subr.bf16.mxu0 %v4112
        %4249 = vmatpush1.bf16.msra.mxu0 %v4111
        %4250 = vmatprep.subr.bf16.mxu0 %v4110
        %4251 = vmatpush1.bf16.msra.mxu0 %v4109
        %4252 = vmatprep.subr.bf16.mxu0 %v4108
        %4253 = vmatpush1.bf16.msra.mxu0 %v4107
        %4254 = vmatprep.subr.bf16.mxu0 %v4106
        %4255 = vmatpush1.bf16.msra.mxu0 %v4105
        %4256 = vmatprep.subr.bf16.mxu0 %v4104
        %4257 = vmatpush1.bf16.msra.mxu0 %v4103
        %4258 = vmatprep.subr.bf16.mxu0 %v4134
        %4259 = vmatpush2.bf16.msra.mxu0 %v4133
        %4260 = vmatprep.subr.bf16.mxu0 %v4132
        %4261 = vmatpush2.bf16.msra.mxu0 %v4131
        %4262 = vmatprep.subr.bf16.mxu0 %v4130
        %4263 = vmatpush2.bf16.msra.mxu0 %v4129
        %4264 = vmatprep.subr.bf16.mxu0 %v4128
        %4265 = vmatpush2.bf16.msra.mxu0 %v4127
        %4266 = vmatprep.subr.bf16.mxu0 %v4126
        %4267 = vmatpush2.bf16.msra.mxu0 %v4125
        %4268 = vmatprep.subr.bf16.mxu0 %v4124
        %4269 = vmatpush2.bf16.msra.mxu0 %v4123
        %4270 = vmatprep.subr.bf16.mxu0 %v4122
        %4271 = vmatpush2.bf16.msra.mxu0 %v4121
        %4272 = vmatprep.subr.bf16.mxu0 %v4120
        %4273 = vmatpush2.bf16.msra.mxu0 %v4119
        %4274 = vmatprep.mubr.bf16.mxu0 %v3802
        %4275 = vmatmul.mubr.bf16.gmra.mxu0 %v3801
        %v4276 = vpop.f32.mrf.mxu0
        %v4277 = vadd.f32 %v4234, %v4276
        %v4278 = vpop.f32.mrf.mxu0
        %v4279 = vadd.f32 %v4236, %v4278
        %v4280 = vpop.f32.mrf.mxu0
        %v4281 = vadd.f32 %v4238, %v4280
        %v4282 = vpop.f32.mrf.mxu0
        %v4283 = vadd.f32 %v4240, %v4282
        %4284 = vdwg.mxu0
        %v4285 = vadd.f32 %v3165, %v4277
        %v4286 = vadd.f32 %v3166, %v4279
        %v4287 = vadd.f32 %v3167, %v4281
        %v4288 = vadd.f32 %v3168, %v4283
        %4289 = vst [vmem:[#allocation2] sm:$0xff] %v4285
        %4290 = vst [vmem:[#allocation2 + $0x8] sm:$0xff] %v4286
        %4291 = vst [vmem:[#allocation2 + $0x10] sm:$0xff] %v4287
        %4292 = vst [vmem:[#allocation2 + $0x18] sm:$0xff] %v4288
        %p4293 = scmp.eq.s32.totalorder %s69, 1
        // Predicated region
        $region193: #{tpu_custom_call.1} parent=103 // pred_check
          %p4294 = pneg %p4293
        $region194: #{tpu_custom_call.1} parent=103 // pred_check_branch
          %4296 = sbr.rel (%p4294) target = $region196
        $region195: #{tpu_custom_call.1} parent=103 // pred_region
          %v4297 = vld [vmem:[#allocation2] sm:$0xff]
          %v4298 = vld [vmem:[#allocation2 + $0x8] sm:$0xff]
          %v4299 = vld [vmem:[#allocation2 + $0x10] sm:$0xff]
          %v4300 = vld [vmem:[#allocation2 + $0x18] sm:$0xff]
          %v4301 = vld [vmem:[%s1238] sm:$0x3]
          %v4302 = vld [vmem:[%s1247] sm:$0x3]
          %v4307 = vrot.slane %v4299, 7
          %vm4308 = vcmask 1041409
          %v4309 = vsel %vm4308, %v4307, %v4297
          %v4310 = vrot.slane %v4300, 7
          %v4311 = vsel %vm4308, %v4310, %v4298
          %vm4314 = vcmask 1041408
          %v4315 = vsel %vm4314, %v4309, 0.0
          %v4316 = vsel %vm4314, %v4311, 0.0
          %v4317 = vadd.f32 %v4315, %v4316
          %4318 = vadd.xlane.f32.xlu0 %v4317
          %v4319 = vpop.xlane.xlu0 %4318
          %v4320 = vmul.f32 %v4319, %v1664
          %v4322 = vrot.slane %v4320, 1
          %v4325 = vsub.f32 %v4297, %v4320
          %v4326 = vsub.f32 %v4298, %v4320
          %v4327 = vsub.f32 %v4299, %v4322
          %v4328 = vsub.f32 %v4300, %v4322
          %v4329 = vmul.f32 %v4325, %v4325
          %v4330 = vmul.f32 %v4326, %v4326
          %v4331 = vmul.f32 %v4327, %v4327
          %v4332 = vmul.f32 %v4328, %v4328
          %v4337 = vrot.slane %v4331, 7
          %v4338 = vsel %vm4308, %v4337, %v4329
          %v4339 = vrot.slane %v4332, 7
          %v4340 = vsel %vm4308, %v4339, %v4330
          %v4343 = vsel %vm4314, %v4338, 0.0
          %v4344 = vsel %vm4314, %v4340, 0.0
          %v4345 = vadd.f32 %v4343, %v4344
          %4346 = vadd.xlane.f32.xlu0 %v4345
          %v4347 = vpop.xlane.xlu0 %4346
          %v4348 = vmul.f32 %v4347, %v1664
          %v4349 = vadd.f32 %v4348, 1e-06
          %v4350 = vrsqrt.pop %v4349
          %v4352 = vrot.slane %v4350, 1
          %v4355 = vmul.f32 %v4325, %v4350
          %v4356 = vmul.f32 %v4326, %v4350
          %v4357 = vmul.f32 %v4327, %v4352
          %v4358 = vmul.f32 %v4328, %v4352
          %v4360 = vlaneseq
          %v4361 = vshrl.u32 %v4360, 7
          %v4362 = vsub.s32 0, %v4361
          %v4363 = vrot.slane %v4301, %v4362
          %v4364 = vlaneseq
          %v4365 = vshrl.u32 %v4364, 7
          %v4366 = vsub.s32 1, %v4365
          %v4367 = vrot.slane %v4301, %v4366
          %v4370 = vmul.f32 %v4355, %v4363
          %v4371 = vmul.f32 %v4356, %v4367
          %v4372 = vmul.f32 %v4357, %v4363
          %v4373 = vmul.f32 %v4358, %v4367
          %v4375 = vlaneseq
          %v4376 = vshrl.u32 %v4375, 7
          %v4377 = vsub.s32 0, %v4376
          %v4378 = vrot.slane %v4302, %v4377
          %v4379 = vlaneseq
          %v4380 = vshrl.u32 %v4379, 7
          %v4381 = vsub.s32 1, %v4380
          %v4382 = vrot.slane %v4302, %v4381
          %v4385 = vadd.f32 %v4370, %v4378
          %v4386 = vadd.f32 %v4371, %v4382
          %v4387 = vadd.f32 %v4372, %v4378
          %v4388 = vadd.f32 %v4373, %v4382
          %p4389 = scmp.eq.s32.totalorder %s68, 0
          // Predicated region
          $region197: #{tpu_custom_call.1} parent=195 // pred_check
            %p4390 = pneg %p4389
          $region198: #{tpu_custom_call.1} parent=195 // pred_check_branch
            %4392 = sbr.rel (%p4390) target = $region200
          $region199: #{tpu_custom_call.1} parent=195 // pred_region
            %v4397 = vcombine.low %v4385, %v4386
            %v4399 = vunpack.c.l.s4 1983009808
            %v4400 = vunpack.c.0.s8 %v4399
            %v4401 = vlaneseq
            %v4402 = vshrl.u32 %v4401, 7
            %v4403 = vsub.s32 %v4400, %v4402
            %v4404 = vrot.slane %v4397, %v4403
            %v4405 = vcombine.low %v4387, %v4388
            %v4407 = vunpack.c.l.s4 1983009808
            %v4408 = vunpack.c.0.s8 %v4407
            %v4409 = vlaneseq
            %v4410 = vshrl.u32 %v4409, 7
            %v4411 = vsub.s32 %v4408, %v4410
            %v4412 = vrot.slane %v4405, %v4411
            %vm4413 = vcmask 1044484
            %v4414 = vsel %vm4413, %v4404, %v4404
            %vm4415 = vcmask 1046534
            %v4416 = vsel %vm4415, %v4404, %v4414
            %v4417 = vrot.slane %v4412, 7
            %v4418 = vsel %vm4308, %v4417, %v4416
            %vm4419 = vcmask 1043459
            %v4420 = vsel %vm4419, %v4417, %v4418
            %vm4421 = vcmask 1045509
            %v4422 = vsel %vm4421, %v4417, %v4420
            %vm4423 = vcmask 1047559
            %v4424 = vsel %vm4423, %v4417, %v4422
            %4426 = vst [vmem:[#allocation36] sm:$0xf] %v4424
          $region200: #{tpu_custom_call.1} parent=195 // pred_fallthru
            _
          %p4427 = scmp.eq.s32.totalorder %s68, 1
          // Predicated region
          $region201: #{tpu_custom_call.1} parent=195 // pred_check
            %p4428 = pneg %p4427
          $region202: #{tpu_custom_call.1} parent=195 // pred_check_branch
            %4430 = sbr.rel (%p4428) target = $region204
          $region203: #{tpu_custom_call.1} parent=195 // pred_region
            %v4435 = vcombine.low %v4385, %v4386
            %v4437 = vunpack.c.l.s4 1983009808
            %v4438 = vunpack.c.0.s8 %v4437
            %v4439 = vlaneseq
            %v4440 = vshrl.u32 %v4439, 7
            %v4441 = vsub.s32 %v4438, %v4440
            %v4442 = vrot.slane %v4435, %v4441
            %v4443 = vcombine.low %v4387, %v4388
            %v4445 = vunpack.c.l.s4 1983009808
            %v4446 = vunpack.c.0.s8 %v4445
            %v4447 = vlaneseq
            %v4448 = vshrl.u32 %v4447, 7
            %v4449 = vsub.s32 %v4446, %v4448
            %v4450 = vrot.slane %v4443, %v4449
            %vm4451 = vcmask 1044484
            %v4452 = vsel %vm4451, %v4442, %v4442
            %vm4453 = vcmask 1046534
            %v4454 = vsel %vm4453, %v4442, %v4452
            %v4455 = vrot.slane %v4450, 7
            %v4456 = vsel %vm4308, %v4455, %v4454
            %vm4457 = vcmask 1043459
            %v4458 = vsel %vm4457, %v4455, %v4456
            %vm4459 = vcmask 1045509
            %v4460 = vsel %vm4459, %v4455, %v4458
            %vm4461 = vcmask 1047559
            %v4462 = vsel %vm4461, %v4455, %v4460
            %4464 = vst [vmem:[#allocation36 + $0x4] sm:$0xf] %v4462
          $region204: #{tpu_custom_call.1} parent=195 // pred_fallthru
            _
        $region196: #{tpu_custom_call.1} parent=103 // pred_fallthru
          _
        %p4465 = scmp.eq.s32.totalorder %s68, 1
        %p4466 = pnand %p4465, %p4293
        %p4467 = pneg %p4466
        // Predicated region
        $region205: #{tpu_custom_call.1} parent=103 // pred_check
          _
        $region206: #{tpu_custom_call.1} parent=103 // pred_check_branch
          %4469 = sbr.rel (%p4466) target = $region208
        $region207: #{tpu_custom_call.1} parent=103 // pred_region
          %v4470 = vld [vmem:[#allocation36] sm:$0xff]
          %v4472 = vcombine.high %v4470, %v4470
          %v4474 = vunpack.c.l.s4 1983009808
          %v4475 = vunpack.c.0.s8 %v4474
          %v4476 = vlaneseq
          %v4477 = vshrl.u32 %v4476, 7
          %v4478 = vsub.s32 %v4475, %v4477
          %v4479 = vrot.slane %v4470, %v4478
          %v4481 = vunpack.c.l.s4 1983009808
          %v4482 = vunpack.c.0.s8 %v4481
          %v4483 = vlaneseq
          %v4484 = vshrl.u32 %v4483, 7
          %v4485 = vsub.s32 %v4482, %v4484
          %v4486 = vrot.slane %v4472, %v4485
          %v4487 = vcombine.high %v4479, %v4479
          %v4488 = vcombine.high %v4486, %v4486
          %v4493 = vpack.c.bf16 %v4479, %v4479
          %v4494 = vpack.c.bf16 %v4487, %v4487
          %v4495 = vpack.c.bf16 %v4486, %v4486
          %v4496 = vpack.c.bf16 %v4488, %v4488
          %v4497 = vld [vmem:[#allocation30] sm:$0xf]
          %v4498 = vld [vmem:[#allocation30 + $0x4] sm:$0xf]
          %v4499 = vld [vmem:[#allocation30 + $0x8] sm:$0xf]
          %v4500 = vld [vmem:[#allocation30 + $0xc] sm:$0xf]
          %v4501 = vld [vmem:[#allocation30 + $0x10] sm:$0xf]
          %v4502 = vld [vmem:[#allocation30 + $0x14] sm:$0xf]
          %v4503 = vld [vmem:[#allocation30 + $0x18] sm:$0xf]
          %v4504 = vld [vmem:[#allocation30 + $0x1c] sm:$0xf]
          %v4505 = vld [vmem:[#allocation30 + $0x20] sm:$0xf]
          %v4506 = vld [vmem:[#allocation30 + $0x24] sm:$0xf]
          %v4507 = vld [vmem:[#allocation30 + $0x28] sm:$0xf]
          %v4508 = vld [vmem:[#allocation30 + $0x2c] sm:$0xf]
          %v4509 = vld [vmem:[#allocation30 + $0x30] sm:$0xf]
          %v4510 = vld [vmem:[#allocation30 + $0x34] sm:$0xf]
          %v4511 = vld [vmem:[#allocation30 + $0x38] sm:$0xf]
          %v4512 = vld [vmem:[#allocation30 + $0x3c] sm:$0xf]
          %v4513 = vld [vmem:[#allocation30 + $0x40] sm:$0xf]
          %v4514 = vld [vmem:[#allocation30 + $0x44] sm:$0xf]
          %v4515 = vld [vmem:[#allocation30 + $0x48] sm:$0xf]
          %v4516 = vld [vmem:[#allocation30 + $0x4c] sm:$0xf]
          %v4517 = vld [vmem:[#allocation30 + $0x50] sm:$0xf]
          %v4518 = vld [vmem:[#allocation30 + $0x54] sm:$0xf]
          %v4519 = vld [vmem:[#allocation30 + $0x58] sm:$0xf]
          %v4520 = vld [vmem:[#allocation30 + $0x5c] sm:$0xf]
          %v4521 = vld [vmem:[#allocation30 + $0x60] sm:$0xf]
          %v4522 = vld [vmem:[#allocation30 + $0x64] sm:$0xf]
          %v4523 = vld [vmem:[#allocation30 + $0x68] sm:$0xf]
          %v4524 = vld [vmem:[#allocation30 + $0x6c] sm:$0xf]
          %v4525 = vld [vmem:[#allocation30 + $0x70] sm:$0xf]
          %v4526 = vld [vmem:[#allocation30 + $0x74] sm:$0xf]
          %v4527 = vld [vmem:[#allocation30 + $0x78] sm:$0xf]
          %v4528 = vld [vmem:[#allocation30 + $0x7c] sm:$0xf]
          %v4529 = vld [vmem:[#allocation30 + $0x80] sm:$0xf]
          %v4530 = vld [vmem:[#allocation30 + $0x84] sm:$0xf]
          %v4531 = vld [vmem:[#allocation30 + $0x88] sm:$0xf]
          %v4532 = vld [vmem:[#allocation30 + $0x8c] sm:$0xf]
          %v4533 = vld [vmem:[#allocation30 + $0x90] sm:$0xf]
          %v4534 = vld [vmem:[#allocation30 + $0x94] sm:$0xf]
          %v4535 = vld [vmem:[#allocation30 + $0x98] sm:$0xf]
          %v4536 = vld [vmem:[#allocation30 + $0x9c] sm:$0xf]
          %v4537 = vld [vmem:[#allocation30 + $0xa0] sm:$0xf]
          %v4538 = vld [vmem:[#allocation30 + $0xa4] sm:$0xf]
          %v4539 = vld [vmem:[#allocation30 + $0xa8] sm:$0xf]
          %v4540 = vld [vmem:[#allocation30 + $0xac] sm:$0xf]
          %v4541 = vld [vmem:[#allocation30 + $0xb0] sm:$0xf]
          %v4542 = vld [vmem:[#allocation30 + $0xb4] sm:$0xf]
          %v4543 = vld [vmem:[#allocation30 + $0xb8] sm:$0xf]
          %v4544 = vld [vmem:[#allocation30 + $0xbc] sm:$0xf]
          %v4545 = vld [vmem:[#allocation30 + $0xc0] sm:$0xf]
          %v4546 = vld [vmem:[#allocation30 + $0xc4] sm:$0xf]
          %v4547 = vld [vmem:[#allocation30 + $0xc8] sm:$0xf]
          %v4548 = vld [vmem:[#allocation30 + $0xcc] sm:$0xf]
          %v4549 = vld [vmem:[#allocation30 + $0xd0] sm:$0xf]
          %v4550 = vld [vmem:[#allocation30 + $0xd4] sm:$0xf]
          %v4551 = vld [vmem:[#allocation30 + $0xd8] sm:$0xf]
          %v4552 = vld [vmem:[#allocation30 + $0xdc] sm:$0xf]
          %v4553 = vld [vmem:[#allocation30 + $0xe0] sm:$0xf]
          %v4554 = vld [vmem:[#allocation30 + $0xe4] sm:$0xf]
          %v4555 = vld [vmem:[#allocation30 + $0xe8] sm:$0xf]
          %v4556 = vld [vmem:[#allocation30 + $0xec] sm:$0xf]
          %v4557 = vld [vmem:[#allocation30 + $0xf0] sm:$0xf]
          %v4558 = vld [vmem:[#allocation30 + $0xf4] sm:$0xf]
          %v4559 = vld [vmem:[#allocation30 + $0xf8] sm:$0xf]
          %v4560 = vld [vmem:[#allocation30 + $0xfc] sm:$0xf]
          %v4561 = vld [vmem:[#allocation32] sm:$0x1]
          %v4563 = vlaneseq
          %v4564 = vshrl.u32 %v4563, 7
          %v4565 = vsub.s32 0, %v4564
          %v4566 = vrot.slane %v4561, %v4565
          %v4632 = vunpack.c.l.b16 %v4497
          %v4633 = vunpack.c.l.b16 %v4498
          %v4634 = vunpack.c.l.b16 %v4499
          %v4635 = vunpack.c.l.b16 %v4500
          %v4636 = vunpack.c.l.b16 %v4501
          %v4637 = vunpack.c.l.b16 %v4502
          %v4638 = vunpack.c.l.b16 %v4503
          %v4639 = vunpack.c.l.b16 %v4504
          %v4640 = vunpack.c.l.b16 %v4505
          %v4641 = vunpack.c.l.b16 %v4506
          %v4642 = vunpack.c.l.b16 %v4507
          %v4643 = vunpack.c.l.b16 %v4508
          %v4644 = vunpack.c.l.b16 %v4509
          %v4645 = vunpack.c.l.b16 %v4510
          %v4646 = vunpack.c.l.b16 %v4511
          %v4647 = vunpack.c.l.b16 %v4512
          %v4648 = vunpack.c.l.b16 %v4513
          %v4649 = vunpack.c.l.b16 %v4514
          %v4650 = vunpack.c.l.b16 %v4515
          %v4651 = vunpack.c.l.b16 %v4516
          %v4652 = vunpack.c.l.b16 %v4517
          %v4653 = vunpack.c.l.b16 %v4518
          %v4654 = vunpack.c.l.b16 %v4519
          %v4655 = vunpack.c.l.b16 %v4520
          %v4656 = vunpack.c.l.b16 %v4521
          %v4657 = vunpack.c.l.b16 %v4522
          %v4658 = vunpack.c.l.b16 %v4523
          %v4659 = vunpack.c.l.b16 %v4524
          %v4660 = vunpack.c.l.b16 %v4525
          %v4661 = vunpack.c.l.b16 %v4526
          %v4662 = vunpack.c.l.b16 %v4527
          %v4663 = vunpack.c.l.b16 %v4528
          %v4664 = vunpack.c.l.b16 %v4529
          %v4665 = vunpack.c.l.b16 %v4530
          %v4666 = vunpack.c.l.b16 %v4531
          %v4667 = vunpack.c.l.b16 %v4532
          %v4668 = vunpack.c.l.b16 %v4533
          %v4669 = vunpack.c.l.b16 %v4534
          %v4670 = vunpack.c.l.b16 %v4535
          %v4671 = vunpack.c.l.b16 %v4536
          %v4672 = vunpack.c.l.b16 %v4537
          %v4673 = vunpack.c.l.b16 %v4538
          %v4674 = vunpack.c.l.b16 %v4539
          %v4675 = vunpack.c.l.b16 %v4540
          %v4676 = vunpack.c.l.b16 %v4541
          %v4677 = vunpack.c.l.b16 %v4542
          %v4678 = vunpack.c.l.b16 %v4543
          %v4679 = vunpack.c.l.b16 %v4544
          %v4680 = vunpack.c.l.b16 %v4545
          %v4681 = vunpack.c.l.b16 %v4546
          %v4682 = vunpack.c.l.b16 %v4547
          %v4683 = vunpack.c.l.b16 %v4548
          %v4684 = vunpack.c.l.b16 %v4549
          %v4685 = vunpack.c.l.b16 %v4550
          %v4686 = vunpack.c.l.b16 %v4551
          %v4687 = vunpack.c.l.b16 %v4552
          %v4688 = vunpack.c.l.b16 %v4553
          %v4689 = vunpack.c.l.b16 %v4554
          %v4690 = vunpack.c.l.b16 %v4555
          %v4691 = vunpack.c.l.b16 %v4556
          %v4692 = vunpack.c.l.b16 %v4557
          %v4693 = vunpack.c.l.b16 %v4558
          %v4694 = vunpack.c.l.b16 %v4559
          %v4695 = vunpack.c.l.b16 %v4560
          %v4696 = vpack.c.b16 %v4633, %v4632
          %v4697 = vpack.c.b16 %v4635, %v4634
          %v4698 = vpack.c.b16 %v4637, %v4636
          %v4699 = vpack.c.b16 %v4639, %v4638
          %v4700 = vpack.c.b16 %v4641, %v4640
          %v4701 = vpack.c.b16 %v4643, %v4642
          %v4702 = vpack.c.b16 %v4645, %v4644
          %v4703 = vpack.c.b16 %v4647, %v4646
          %v4704 = vpack.c.b16 %v4649, %v4648
          %v4705 = vpack.c.b16 %v4651, %v4650
          %v4706 = vpack.c.b16 %v4653, %v4652
          %v4707 = vpack.c.b16 %v4655, %v4654
          %v4708 = vpack.c.b16 %v4657, %v4656
          %v4709 = vpack.c.b16 %v4659, %v4658
          %v4710 = vpack.c.b16 %v4661, %v4660
          %v4711 = vpack.c.b16 %v4663, %v4662
          %v4712 = vpack.c.b16 %v4665, %v4664
          %v4713 = vpack.c.b16 %v4667, %v4666
          %v4714 = vpack.c.b16 %v4669, %v4668
          %v4715 = vpack.c.b16 %v4671, %v4670
          %v4716 = vpack.c.b16 %v4673, %v4672
          %v4717 = vpack.c.b16 %v4675, %v4674
          %v4718 = vpack.c.b16 %v4677, %v4676
          %v4719 = vpack.c.b16 %v4679, %v4678
          %v4720 = vpack.c.b16 %v4681, %v4680
          %v4721 = vpack.c.b16 %v4683, %v4682
          %v4722 = vpack.c.b16 %v4685, %v4684
          %v4723 = vpack.c.b16 %v4687, %v4686
          %v4724 = vpack.c.b16 %v4689, %v4688
          %v4725 = vpack.c.b16 %v4691, %v4690
          %v4726 = vpack.c.b16 %v4693, %v4692
          %v4727 = vpack.c.b16 %v4695, %v4694
          %4760 = vmatprep.subr.bf16.mxu0 0
          %4761 = vmatpush1.bf16.msra.mxu0 %v4703
          %4762 = vmatprep.subr.bf16.mxu0 0
          %4763 = vmatpush1.bf16.msra.mxu0 %v4702
          %4764 = vmatprep.subr.bf16.mxu0 0
          %4765 = vmatpush1.bf16.msra.mxu0 %v4701
          %4766 = vmatprep.subr.bf16.mxu0 0
          %4767 = vmatpush1.bf16.msra.mxu0 %v4700
          %4768 = vmatprep.subr.bf16.mxu0 0
          %4769 = vmatpush1.bf16.msra.mxu0 %v4699
          %4770 = vmatprep.subr.bf16.mxu0 0
          %4771 = vmatpush1.bf16.msra.mxu0 %v4698
          %4772 = vmatprep.subr.bf16.mxu0 0
          %4773 = vmatpush1.bf16.msra.mxu0 %v4697
          %4774 = vmatprep.subr.bf16.mxu0 0
          %4775 = vmatpush1.bf16.msra.mxu0 %v4696
          %4776 = vmatprep.subr.bf16.mxu0 0
          %4777 = vmatpush2.bf16.msra.mxu0 %v4711
          %4778 = vmatprep.subr.bf16.mxu0 0
          %4779 = vmatpush2.bf16.msra.mxu0 %v4710
          %4780 = vmatprep.subr.bf16.mxu0 0
          %4781 = vmatpush2.bf16.msra.mxu0 %v4709
          %4782 = vmatprep.subr.bf16.mxu0 0
          %4783 = vmatpush2.bf16.msra.mxu0 %v4708
          %4784 = vmatprep.subr.bf16.mxu0 0
          %4785 = vmatpush2.bf16.msra.mxu0 %v4707
          %4786 = vmatprep.subr.bf16.mxu0 0
          %4787 = vmatpush2.bf16.msra.mxu0 %v4706
          %4788 = vmatprep.subr.bf16.mxu0 0
          %4789 = vmatpush2.bf16.msra.mxu0 %v4705
          %4790 = vmatprep.subr.bf16.mxu0 0
          %4791 = vmatpush2.bf16.msra.mxu0 %v4704
          %4792 = vmatprep.mubr.bf16.mxu0 %v4494
          %4793 = vmatmul.mubr.bf16.gmra.mxu0 %v4493
          %v4794 = vpop.f32.mrf.mxu0
          %v4795 = vadd.f32 %v4566, %v4794
          %v4796 = vpop.f32.mrf.mxu0
          %v4797 = vpop.f32.mrf.mxu0
          %v4798 = vpop.f32.mrf.mxu0
          %4799 = vdwg.mxu0
          %4800 = vmatprep.subr.bf16.mxu0 0
          %4801 = vmatpush1.bf16.msra.mxu0 %v4719
          %4802 = vmatprep.subr.bf16.mxu0 0
          %4803 = vmatpush1.bf16.msra.mxu0 %v4718
          %4804 = vmatprep.subr.bf16.mxu0 0
          %4805 = vmatpush1.bf16.msra.mxu0 %v4717
          %4806 = vmatprep.subr.bf16.mxu0 0
          %4807 = vmatpush1.bf16.msra.mxu0 %v4716
          %4808 = vmatprep.subr.bf16.mxu0 0
          %4809 = vmatpush1.bf16.msra.mxu0 %v4715
          %4810 = vmatprep.subr.bf16.mxu0 0
          %4811 = vmatpush1.bf16.msra.mxu0 %v4714
          %4812 = vmatprep.subr.bf16.mxu0 0
          %4813 = vmatpush1.bf16.msra.mxu0 %v4713
          %4814 = vmatprep.subr.bf16.mxu0 0
          %4815 = vmatpush1.bf16.msra.mxu0 %v4712
          %4816 = vmatprep.subr.bf16.mxu0 0
          %4817 = vmatpush2.bf16.msra.mxu0 %v4727
          %4818 = vmatprep.subr.bf16.mxu0 0
          %4819 = vmatpush2.bf16.msra.mxu0 %v4726
          %4820 = vmatprep.subr.bf16.mxu0 0
          %4821 = vmatpush2.bf16.msra.mxu0 %v4725
          %4822 = vmatprep.subr.bf16.mxu0 0
          %4823 = vmatpush2.bf16.msra.mxu0 %v4724
          %4824 = vmatprep.subr.bf16.mxu0 0
          %4825 = vmatpush2.bf16.msra.mxu0 %v4723
          %4826 = vmatprep.subr.bf16.mxu0 0
          %4827 = vmatpush2.bf16.msra.mxu0 %v4722
          %4828 = vmatprep.subr.bf16.mxu0 0
          %4829 = vmatpush2.bf16.msra.mxu0 %v4721
          %4830 = vmatprep.subr.bf16.mxu0 0
          %4831 = vmatpush2.bf16.msra.mxu0 %v4720
          %4832 = vmatprep.mubr.bf16.mxu0 %v4496
          %4833 = vmatmul.mubr.bf16.gmra.mxu0 %v4495
          %v4834 = vpop.f32.mrf.mxu0
          %v4835 = vadd.f32 %v4795, %v4834
          %v4836 = vpop.f32.mrf.mxu0
          %v4837 = vpop.f32.mrf.mxu0
          %v4838 = vpop.f32.mrf.mxu0
          %4839 = vdwg.mxu0
          %4840 = vst [vmem:[#allocation37] sm:$0x3] %v4835
          %v4841 = vld [vmem:[#allocation33] sm:$0xf]
          %v4842 = vld [vmem:[#allocation33 + $0x4] sm:$0xf]
          %v4843 = vld [vmem:[#allocation33 + $0x8] sm:$0xf]
          %v4844 = vld [vmem:[#allocation33 + $0xc] sm:$0xf]
          %v4845 = vld [vmem:[#allocation33 + $0x10] sm:$0xf]
          %v4846 = vld [vmem:[#allocation33 + $0x14] sm:$0xf]
          %v4847 = vld [vmem:[#allocation33 + $0x18] sm:$0xf]
          %v4848 = vld [vmem:[#allocation33 + $0x1c] sm:$0xf]
          %v4849 = vld [vmem:[#allocation33 + $0x20] sm:$0xf]
          %v4850 = vld [vmem:[#allocation33 + $0x24] sm:$0xf]
          %v4851 = vld [vmem:[#allocation33 + $0x28] sm:$0xf]
          %v4852 = vld [vmem:[#allocation33 + $0x2c] sm:$0xf]
          %v4853 = vld [vmem:[#allocation33 + $0x30] sm:$0xf]
          %v4854 = vld [vmem:[#allocation33 + $0x34] sm:$0xf]
          %v4855 = vld [vmem:[#allocation33 + $0x38] sm:$0xf]
          %v4856 = vld [vmem:[#allocation33 + $0x3c] sm:$0xf]
          %v4857 = vld [vmem:[#allocation33 + $0x40] sm:$0xf]
          %v4858 = vld [vmem:[#allocation33 + $0x44] sm:$0xf]
          %v4859 = vld [vmem:[#allocation33 + $0x48] sm:$0xf]
          %v4860 = vld [vmem:[#allocation33 + $0x4c] sm:$0xf]
          %v4861 = vld [vmem:[#allocation33 + $0x50] sm:$0xf]
          %v4862 = vld [vmem:[#allocation33 + $0x54] sm:$0xf]
          %v4863 = vld [vmem:[#allocation33 + $0x58] sm:$0xf]
          %v4864 = vld [vmem:[#allocation33 + $0x5c] sm:$0xf]
          %v4865 = vld [vmem:[#allocation33 + $0x60] sm:$0xf]
          %v4866 = vld [vmem:[#allocation33 + $0x64] sm:$0xf]
          %v4867 = vld [vmem:[#allocation33 + $0x68] sm:$0xf]
          %v4868 = vld [vmem:[#allocation33 + $0x6c] sm:$0xf]
          %v4869 = vld [vmem:[#allocation33 + $0x70] sm:$0xf]
          %v4870 = vld [vmem:[#allocation33 + $0x74] sm:$0xf]
          %v4871 = vld [vmem:[#allocation33 + $0x78] sm:$0xf]
          %v4872 = vld [vmem:[#allocation33 + $0x7c] sm:$0xf]
          %v4873 = vld [vmem:[#allocation35] sm:$0x1]
          %v4875 = vlaneseq
          %v4876 = vshrl.u32 %v4875, 7
          %v4877 = vsub.s32 0, %v4876
          %v4878 = vrot.slane %v4873, %v4877
          %v4912 = vunpack.c.l.b16 %v4841
          %v4913 = vunpack.c.l.b16 %v4842
          %v4914 = vunpack.c.l.b16 %v4843
          %v4915 = vunpack.c.l.b16 %v4844
          %v4916 = vunpack.c.l.b16 %v4845
          %v4917 = vunpack.c.l.b16 %v4846
          %v4918 = vunpack.c.l.b16 %v4847
          %v4919 = vunpack.c.l.b16 %v4848
          %v4920 = vunpack.c.l.b16 %v4849
          %v4921 = vunpack.c.l.b16 %v4850
          %v4922 = vunpack.c.l.b16 %v4851
          %v4923 = vunpack.c.l.b16 %v4852
          %v4924 = vunpack.c.l.b16 %v4853
          %v4925 = vunpack.c.l.b16 %v4854
          %v4926 = vunpack.c.l.b16 %v4855
          %v4927 = vunpack.c.l.b16 %v4856
          %v4928 = vunpack.c.l.b16 %v4857
          %v4929 = vunpack.c.l.b16 %v4858
          %v4930 = vunpack.c.l.b16 %v4859
          %v4931 = vunpack.c.l.b16 %v4860
          %v4932 = vunpack.c.l.b16 %v4861
          %v4933 = vunpack.c.l.b16 %v4862
          %v4934 = vunpack.c.l.b16 %v4863
          %v4935 = vunpack.c.l.b16 %v4864
          %v4936 = vunpack.c.l.b16 %v4865
          %v4937 = vunpack.c.l.b16 %v4866
          %v4938 = vunpack.c.l.b16 %v4867
          %v4939 = vunpack.c.l.b16 %v4868
          %v4940 = vunpack.c.l.b16 %v4869
          %v4941 = vunpack.c.l.b16 %v4870
          %v4942 = vunpack.c.l.b16 %v4871
          %v4943 = vunpack.c.l.b16 %v4872
          %v4944 = vpack.c.b16 %v4913, %v4912
          %v4945 = vpack.c.b16 %v4915, %v4914
          %v4946 = vpack.c.b16 %v4917, %v4916
          %v4947 = vpack.c.b16 %v4919, %v4918
          %v4948 = vpack.c.b16 %v4921, %v4920
          %v4949 = vpack.c.b16 %v4923, %v4922
          %v4950 = vpack.c.b16 %v4925, %v4924
          %v4951 = vpack.c.b16 %v4927, %v4926
          %v4952 = vpack.c.b16 %v4929, %v4928
          %v4953 = vpack.c.b16 %v4931, %v4930
          %v4954 = vpack.c.b16 %v4933, %v4932
          %v4955 = vpack.c.b16 %v4935, %v4934
          %v4956 = vpack.c.b16 %v4937, %v4936
          %v4957 = vpack.c.b16 %v4939, %v4938
          %v4958 = vpack.c.b16 %v4941, %v4940
          %v4959 = vpack.c.b16 %v4943, %v4942
          %4976 = vmatprep.subr.bf16.mxu0 0
          %4977 = vmatpush1.bf16.msra.mxu0 %v4951
          %4978 = vmatprep.subr.bf16.mxu0 0
          %4979 = vmatpush1.bf16.msra.mxu0 %v4950
          %4980 = vmatprep.subr.bf16.mxu0 0
          %4981 = vmatpush1.bf16.msra.mxu0 %v4949
          %4982 = vmatprep.subr.bf16.mxu0 0
          %4983 = vmatpush1.bf16.msra.mxu0 %v4948
          %4984 = vmatprep.subr.bf16.mxu0 0
          %4985 = vmatpush1.bf16.msra.mxu0 %v4947
          %4986 = vmatprep.subr.bf16.mxu0 0
          %4987 = vmatpush1.bf16.msra.mxu0 %v4946
          %4988 = vmatprep.subr.bf16.mxu0 0
          %4989 = vmatpush1.bf16.msra.mxu0 %v4945
          %4990 = vmatprep.subr.bf16.mxu0 0
          %4991 = vmatpush1.bf16.msra.mxu0 %v4944
          %4992 = vmatprep.subr.bf16.mxu0 0
          %4993 = vmatpush2.bf16.msra.mxu0 %v4959
          %4994 = vmatprep.subr.bf16.mxu0 0
          %4995 = vmatpush2.bf16.msra.mxu0 %v4958
          %4996 = vmatprep.subr.bf16.mxu0 0
          %4997 = vmatpush2.bf16.msra.mxu0 %v4957
          %4998 = vmatprep.subr.bf16.mxu0 0
          %4999 = vmatpush2.bf16.msra.mxu0 %v4956
          %5000 = vmatprep.subr.bf16.mxu0 0
          %5001 = vmatpush2.bf16.msra.mxu0 %v4955
          %5002 = vmatprep.subr.bf16.mxu0 0
          %5003 = vmatpush2.bf16.msra.mxu0 %v4954
          %5004 = vmatprep.subr.bf16.mxu0 0
          %5005 = vmatpush2.bf16.msra.mxu0 %v4953
          %5006 = vmatprep.subr.bf16.mxu0 0
          %5007 = vmatpush2.bf16.msra.mxu0 %v4952
          %5008 = vmatprep.mubr.bf16.mxu0 %v4496
          %5009 = vmatmul.mubr.bf16.gmra.mxu0 %v4495
          %v5010 = vpop.f32.mrf.mxu0
          %v5011 = vadd.f32 %v4878, %v5010
          %v5012 = vpop.f32.mrf.mxu0
          %v5013 = vpop.f32.mrf.mxu0
          %v5014 = vpop.f32.mrf.mxu0
          %5015 = vdwg.mxu0
          %5016 = vst [vmem:[#allocation39] sm:$0x3] %v5011
        $region208: #{tpu_custom_call.1} parent=103 // pred_fallthru
          _
        // Predicated region
        $region209: #{tpu_custom_call.1} parent=103 // pred_check
          %p5017 = pneg %p634
        $region210: #{tpu_custom_call.1} parent=103 // pred_check_branch
          %5019 = sbr.rel (%p5017) target = $region212
        $region211: #{tpu_custom_call.1} parent=103 // pred_region
          %s5021 = ssub.s32 128, 128
          %5022 = vsyncadd [#allocation5], %s5021
          %s5024 = sshll.u32 [#allocation36], 4
          %s5025 = int_to_ptr.vmem [resolvable:$true] %s5024
          %5027 = dma.vmem_to_hbm [thread:$0]  %s5025, 128, %s21, [#allocation5]
        $region212: #{tpu_custom_call.1} parent=103 // pred_fallthru
          _
        // Predicated region
        $region213: #{tpu_custom_call.1} parent=103 // pred_check
          %p5028 = pneg %p655
        $region214: #{tpu_custom_call.1} parent=103 // pred_check_branch
          %5030 = sbr.rel (%p5028) target = $region216
        $region215: #{tpu_custom_call.1} parent=103 // pred_region
          %s5032 = ssub.s32 32, 32
          %5033 = vsyncadd [#allocation38], %s5032
          %s5035 = sshll.u32 [#allocation37], 4
          %s5036 = int_to_ptr.vmem [resolvable:$true] %s5035
          %5038 = dma.vmem_to_hbm [thread:$0]  %s5036, 32, %s22, [#allocation38]
        $region216: #{tpu_custom_call.1} parent=103 // pred_fallthru
          _
        // Predicated region
        $region217: #{tpu_custom_call.1} parent=103 // pred_check
          %p5039 = pneg %p676
        $region218: #{tpu_custom_call.1} parent=103 // pred_check_branch
          %5041 = sbr.rel (%p5039) target = $region220
        $region219: #{tpu_custom_call.1} parent=103 // pred_region
          %s5043 = ssub.s32 32, 32
          %5044 = vsyncadd [#allocation38], %s5043
          %s5046 = sshll.u32 [#allocation39], 4
          %s5047 = int_to_ptr.vmem [resolvable:$true] %s5046
          %5049 = dma.vmem_to_hbm [thread:$0]  %s5047, 32, %s23, [#allocation38]
        $region220: #{tpu_custom_call.1} parent=103 // pred_fallthru
          _
        // Predicated region
        $region221: #{tpu_custom_call.1} parent=103 // pred_check
          %p5050 = pneg %p634
        $region222: #{tpu_custom_call.1} parent=103 // pred_check_branch
          %5052 = sbr.rel (%p5050) target = $region224
        $region223: #{tpu_custom_call.1} parent=103 // pred_region
          %5053 = dma.done [#allocation5], 128
        $region224: #{tpu_custom_call.1} parent=103 // pred_fallthru
          _
        // Predicated region
        $region225: #{tpu_custom_call.1} parent=103 // pred_check
          %p5054 = pneg %p655
        $region226: #{tpu_custom_call.1} parent=103 // pred_check_branch
          %5056 = sbr.rel (%p5054) target = $region228
        $region227: #{tpu_custom_call.1} parent=103 // pred_region
          %5057 = dma.done [#allocation38], 32
        $region228: #{tpu_custom_call.1} parent=103 // pred_fallthru
          _
        // Predicated region
        $region229: #{tpu_custom_call.1} parent=103 // pred_check
          %p5058 = pneg %p676
        $region230: #{tpu_custom_call.1} parent=103 // pred_check_branch
          %5060 = sbr.rel (%p5058) target = $region232
        $region231: #{tpu_custom_call.1} parent=103 // pred_region
          %5061 = dma.done [#allocation38], 32
        $region232: #{tpu_custom_call.1} parent=103 // pred_fallthru
          _
      $region104: #{tpu_custom_call.1} parent=5 // pred_fallthru
        _
      %p5062 = scmp.le.s32.totalorder 2, %s59
      // Predicated region
      $region233: #{tpu_custom_call.1} parent=5 // pred_check
        %p5063 = pneg %p5062
      $region234: #{tpu_custom_call.1} parent=5 // pred_check_branch
        %5065 = sbr.rel (%p5063) target = $region236
      $region235: #{tpu_custom_call.1} parent=5 // pred_region
        %s5066 = ssub.s32 %s59, 2
      $region236: #{tpu_custom_call.1} parent=5 // pred_fallthru
        _
    $region6: #{tpu_custom_call.1} parent=1 // loop_footer
      %s63 = sadd.s32 1, %s59
    $region7: #{tpu_custom_call.1} parent=1 // loop_footer_branch
      %58 = sbr.rel target = $region3
    $region8: #{tpu_custom_call.1} parent=1 // loop_exit
      _
    %5067 = vsyncpa [#allocation4], 1
    %s5068 = scalar_lea.sflag [#allocation4], 1
    %5069 = vsyncpa %s5068, 1
    %5070 = vsyncpa [#allocation7], 1
    %s5071 = scalar_lea.sflag [#allocation7], 1
    %5072 = vsyncpa %s5071, 1
    %5073 = vsyncpa [#allocation10], 1
    %s5074 = scalar_lea.sflag [#allocation10], 1
    %5075 = vsyncpa %s5074, 1
    %5076 = vsyncpa [#allocation13], 1
    %s5077 = scalar_lea.sflag [#allocation13], 1
    %5078 = vsyncpa %s5077, 1
    %5079 = vsyncpa [#allocation16], 1
    %s5080 = scalar_lea.sflag [#allocation16], 1
    %5081 = vsyncpa %s5080, 1
    %5082 = vsyncpa [#allocation19], 1
    %s5083 = scalar_lea.sflag [#allocation19], 1
    %5084 = vsyncpa %s5083, 1
    %5085 = vsyncpa [#allocation22], 1
    %s5086 = scalar_lea.sflag [#allocation22], 1
    %5087 = vsyncpa %s5086, 1
    %5088 = vsyncpa [#allocation25], 1
    %s5089 = scalar_lea.sflag [#allocation25], 1
    %5090 = vsyncpa %s5089, 1
    %5091 = vsyncpa [#allocation28], 1
    %s5092 = scalar_lea.sflag [#allocation28], 1
    %5093 = vsyncpa %s5092, 1
    %5094 = vsyncpa [#allocation31], 1
    %5095 = vsyncpa [#allocation34], 1
    %5096 = vsyncpa [#allocation5], 1
    %s5097 = scalar_lea.sflag [#allocation5], 1
    %5098 = vsyncpa %s5097, 1
    %5099 = vsyncpa [#allocation38], 1

</llo_original>
